<compile_context>
chip_gen: v5e
topology: v5e:2x2
jax: 0.10.0
libtpu: 0.0.40
codegen_flags: <defaults>
</compile_context>

<pallas_src>
import numpy as np
import jax
import jax.numpy as jnp
from jax.experimental import pallas as pl
from jax.experimental.pallas import tpu as pltpu


# --------------------------------- kernel ----------------------------------

def sarsa_kernel(x_ref,
                 t1_ref, b1_ref, g1_ref, be1_ref, m1_ref, m1t_ref,
                 t2_ref, b2_ref, g2_ref, be2_ref, m2_ref, m2t_ref,
                 wf_ref, bf_ref, wl2_ref, bl2_ref,
                 o_ref):
    N = x_ref.shape[0]

    def bn(y, gamma_f, beta_f, m, mt, count, eps=1e-5):
        # y: (N, F) f32; per-channel stats via one-hot matmuls m:(F,C), mt:(C,F)
        inv = 1.0 / count
        colsum = jnp.sum(y, axis=0, keepdims=True)                        # (1,F)
        mean_c = jnp.dot(colsum.astype(jnp.bfloat16), m,
                         preferred_element_type=jnp.float32) * inv        # (1,C)
        mean_f = jnp.dot(mean_c.astype(jnp.bfloat16), mt,
                         preferred_element_type=jnp.float32)              # (1,F)
        d = y - mean_f                                                    # (N,F)
        sq = jnp.sum(d * d, axis=0, keepdims=True)                        # (1,F)
        var_c = jnp.dot(sq.astype(jnp.bfloat16), m,
                        preferred_element_type=jnp.float32) * inv         # (1,C)
        var_f = jnp.dot(var_c.astype(jnp.bfloat16), mt,
                        preferred_element_type=jnp.float32)               # (1,F)
        return d * (gamma_f * jax.lax.rsqrt(var_f + eps)) + beta_f

    x = x_ref[...]                                                        # (N,243) bf16

    # conv1 (Toeplitz) + BN1
    y1 = jnp.dot(x, t1_ref[...],
                 preferred_element_type=jnp.float32) + b1_ref[...]        # (N,784)
    y1 = bn(y1, g1_ref[...], be1_ref[...], m1_ref[...], m1t_ref[...],
            float(N * 49))

    # conv2 (Toeplitz) + BN2
    y2 = jnp.dot(y1.astype(jnp.bfloat16), t2_ref[...],
                 preferred_element_type=jnp.float32) + b2_ref[...]        # (N,800)
    y2 = bn(y2, g2_ref[...], be2_ref[...], m2_ref[...], m2t_ref[...],
            float(N * 25))

    # conv3 + Flatten + Linear(288,128) folded into one (800,128) matmul
    z = jnp.dot(y2.astype(jnp.bfloat16), wf_ref[...],
                preferred_element_type=jnp.float32) + bf_ref[...]         # (N,128)
    z = jnp.maximum(z, 0.01 * z)                                          # LeakyReLU
    z = jnp.dot(z.astype(jnp.bfloat16), wl2_ref[...],
                preferred_element_type=jnp.float32) + bl2_ref[...]        # (N,128)
    o_ref[...] = pl.reciprocal(1.0 + jnp.exp(-z), approx=True)            # Sigmoid


# -------------------------------- wrapper -----------------------------------

def sarsa_forward(x_nchw, kp):
    N = x_nchw.shape[0]
    # NCHW -> NHWC -> HWC-flatten in the wrapper (plain XLA, free of kernel cost)
    x = jnp.transpose(x_nchw, (0, 2, 3, 1)).astype(jnp.float32)
    x_flat = x.reshape(N, -1).astype(jnp.bfloat16)                        # (N,243)

    args = (x_flat,
            kp["t1"], kp["b1f"], kp["g1f"], kp["be1f"], kp["m1"], kp["m1t"],
            kp["t2"], kp["b2f"], kp["g2f"], kp["be2f"], kp["m2"], kp["m2t"],
            kp["wf"], kp["bf"], kp["wl2"], kp["bl2"])
    vmem = pl.BlockSpec(memory_space=pltpu.MemorySpace.VMEM)

    out = pl.pallas_call(
        sarsa_kernel,
        out_shape=jax.ShapeDtypeStruct((N, 128), jnp.float32),            # lane-dense
        in_specs=[vmem] * len(args),
        out_specs=vmem,
        compiler_params=pltpu.CompilerParams(vmem_limit_bytes=32 * 1024 * 1024),
    )(*args)
    return out[:, :kp["outputs"]]


# -------------------------- parameter construction --------------------------

def init_params(key, outputs):
    ks = jax.random.split(key, 10)

    def conv_w(k, cout, cin):
        # torch layout (Cout, Cin, 3, 3) -> (ky, kx, Cin, Cout)
        w = jax.random.normal(k, (cout, cin, 3, 3), jnp.float32)
        w = w * (1.0 / jnp.sqrt(cin * 9.0))
        return jnp.transpose(w, (2, 3, 1, 0))

    def lin_w(k, dout, din):
        # torch layout (Dout, Din) -> (Din, Dout)
        w = jax.random.normal(k, (dout, din), jnp.float32) * (1.0 / jnp.sqrt(din))
        return jnp.transpose(w, (1, 0))

    wl1 = lin_w(ks[6], 128, 288)                    # rows in CHW-flatten order
    # permute rows CHW -> HWC so nn.Flatten on NCHW is reproduced in HWC layout
    wl1 = wl1.reshape(32, 3, 3, 128).transpose(1, 2, 0, 3).reshape(288, 128)

    return dict(
        wc1=conv_w(ks[0], 16, 3),
        bc1=(jax.random.normal(ks[1], (1, 16), jnp.float32) * 0.1),
        g1=jnp.ones((1, 16), jnp.float32),
        be1=jnp.zeros((1, 16), jnp.float32),
        wc2=conv_w(ks[2], 32, 16),
        bc2=(jax.random.normal(ks[3], (1, 32), jnp.float32) * 0.1),
        g2=jnp.ones((1, 32), jnp.float32),
        be2=jnp.zeros((1, 32), jnp.float32),
        wc3=conv_w(ks[4], 32, 32),
        bc3=(jax.random.normal(ks[5], (1, 32), jnp.float32) * 0.1),
        wl1=wl1,
        bl1=(jax.random.normal(ks[7], (1, 128), jnp.float32) * 0.1),
        wl2=lin_w(ks[8], outputs, 128),
        bl2=(jax.random.normal(ks[9], (1, outputs), jnp.float32) * 0.1),
    )


def _conv_toeplitz(w_hwio, h_in, w_in):
    # Dense Toeplitz for a valid 3x3 conv on HWC-flattened vectors.
    kh, kw, cin, cout = w_hwio.shape
    h_out, w_out = h_in - kh + 1, w_in - kw + 1
    T = np.zeros((h_in, w_in, cin, h_out, w_out, cout), np.float32)
    for oy in range(h_out):
        for ox in range(w_out):
            T[oy:oy + kh, ox:ox + kw, :, oy, ox, :] += w_hwio
    return T.reshape(h_in * w_in * cin, h_out * w_out * cout)


def _channel_onehot(hw, c):
    # (hw*c, c) one-hot: HWC-flat feature f belongs to channel f % c.
    M = np.zeros((hw * c, c), np.float32)
    M[np.arange(hw * c), np.arange(hw * c) % c] = 1.0
    return M


def prepare_params(p, outputs):
    """Host-side precompute: Toeplitz convs, conv3+FC1 fold, bf16 weights."""
    w1 = np.asarray(p["wc1"]); w2 = np.asarray(p["wc2"]); w3 = np.asarray(p["wc3"])
    t1 = _conv_toeplitz(w1, 9, 9)                    # (243, 784)
    t2 = _conv_toeplitz(w2, 7, 7)                    # (784, 800)
    t3 = _conv_toeplitz(w3, 5, 5)                    # (800, 288)

    wl1 = np.asarray(p["wl1"])                       # (288, 128), rows HWC order
    wf = t3 @ wl1                                    # (800, 128)
    b3f = np.tile(np.asarray(p["bc3"]).reshape(-1), 9)[None, :]     # (1,288)
    bf = np.asarray(p["bl1"]) + b3f @ wl1                            # (1,128)

    b1f = np.tile(np.asarray(p["bc1"]).reshape(-1), 49)[None, :]    # (1,784)
    g1f = np.tile(np.asarray(p["g1"]).reshape(-1), 49)[None, :]
    be1f = np.tile(np.asarray(p["be1"]).reshape(-1), 49)[None, :]
    b2f = np.tile(np.asarray(p["bc2"]).reshape(-1), 25)[None, :]    # (1,800)
    g2f = np.tile(np.asarray(p["g2"]).reshape(-1), 25)[None, :]
    be2f = np.tile(np.asarray(p["be2"]).reshape(-1), 25)[None, :]

    m1 = _channel_onehot(49, 16)                     # (784, 16)
    m2 = _channel_onehot(25, 32)                     # (800, 32)

    wl2 = np.asarray(p["wl2"])                       # (128, outputs)
    wl2p = np.zeros((128, 128), np.float32); wl2p[:, :outputs] = wl2
    bl2p = np.zeros((1, 128), np.float32)
    bl2p[0, :outputs] = np.asarray(p["bl2"]).reshape(-1)

    bf16, f32 = jnp.bfloat16, jnp.float32
    return dict(
        t1=jnp.asarray(t1, bf16), t2=jnp.asarray(t2, bf16),
        wf=jnp.asarray(wf, bf16), wl2=jnp.asarray(wl2p, bf16),
        m1=jnp.asarray(m1, bf16), m1t=jnp.asarray(m1.T, bf16),
        m2=jnp.asarray(m2, bf16), m2t=jnp.asarray(m2.T, bf16),
        b1f=jnp.asarray(b1f, f32), g1f=jnp.asarray(g1f, f32), be1f=jnp.asarray(be1f, f32),
        b2f=jnp.asarray(b2f, f32), g2f=jnp.asarray(g2f, f32), be2f=jnp.asarray(be2f, f32),
        bf=jnp.asarray(bf, f32), bl2=jnp.asarray(bl2p, f32),
        outputs=outputs,
    )


# ------------------------- pure-JAX reference (check) ------------------------

def _ref_forward(x_nchw, p):
    x = jnp.transpose(x_nchw, (0, 2, 3, 1)).astype(jnp.float32)

    def conv(x, w, b):
        N, H, W, Cin = x.shape
        Ho, Wo = H - 2, W - 2
        acc = 0.0
        for dy in range(3):
            for dx in range(3):
                acc = acc + jnp.einsum('nhwc,cd->nhwd',
                                       x[:, dy:dy + Ho, dx:dx + Wo, :], w[dy, dx])
        return acc + b.reshape(1, 1, 1, -1)

    def bn(x, g, b, eps=1e-5):
        mean = jnp.mean(x, axis=(0, 1, 2), keepdims=True)
        var = jnp.mean((x - mean) ** 2, axis=(0, 1, 2), keepdims=True)
        return ((x - mean) * jax.lax.rsqrt(var + eps)
                * g.reshape(1, 1, 1, -1) + b.reshape(1, 1, 1, -1))

    h = bn(conv(x, p["wc1"], p["bc1"]), p["g1"], p["be1"])
    h = bn(conv(h, p["wc2"], p["bc2"]), p["g2"], p["be2"])
    h = conv(h, p["wc3"], p["bc3"])
    flat = h.reshape(h.shape[0], -1)                 # HWC flatten (wl1 matches)
    z = flat @ p["wl1"] + p["bl1"]
    z = jnp.maximum(z, 0.01 * z)
    z = z @ p["wl2"] + p["bl2"]
    return jax.nn.sigmoid(z)


# ----------------------------------- main ------------------------------------

if __name__ == "__main__":
    key = jax.random.PRNGKey(0)
    k_x, k_p = jax.random.split(key)

    outputs = 4
    # Input spatial must be 9x9 so that Flatten sees 32*3*3 = 288 features.
    x = jax.random.normal(k_x, (2, 3, 9, 9), jnp.float32)   # NCHW, like PyTorch
    params = init_params(k_p, outputs)
    kparams = prepare_params(params, outputs)

    y = sarsa_forward(x, kparams)
    y = jax.block_until_ready(y)

    y_ref = _ref_forward(x, params)

    assert y.shape == (2, outputs)
    assert bool(jnp.all(jnp.isfinite(y)))
    assert bool(jnp.all((y >= -1e-3) & (y <= 1.0 + 1e-3)))   # sigmoid range
    assert bool(jnp.allclose(y, y_ref, atol=2e-2, rtol=2e-2))
    print("KERNEL_OK")
</pallas_src>

<mosaic_0001>
module attributes {stable_mosaic.version = 11 : i64} {
  func.func @sarsa_kernel(%arg0: memref<2x243xbf16, #tpu.memory_space<vmem>>, %arg1: memref<243x784xbf16, #tpu.memory_space<vmem>>, %arg2: memref<1x784xf32, #tpu.memory_space<vmem>>, %arg3: memref<1x784xf32, #tpu.memory_space<vmem>>, %arg4: memref<1x784xf32, #tpu.memory_space<vmem>>, %arg5: memref<784x16xbf16, #tpu.memory_space<vmem>>, %arg6: memref<16x784xbf16, #tpu.memory_space<vmem>>, %arg7: memref<784x800xbf16, #tpu.memory_space<vmem>>, %arg8: memref<1x800xf32, #tpu.memory_space<vmem>>, %arg9: memref<1x800xf32, #tpu.memory_space<vmem>>, %arg10: memref<1x800xf32, #tpu.memory_space<vmem>>, %arg11: memref<800x32xbf16, #tpu.memory_space<vmem>>, %arg12: memref<32x800xbf16, #tpu.memory_space<vmem>>, %arg13: memref<800x128xbf16, #tpu.memory_space<vmem>>, %arg14: memref<1x128xf32, #tpu.memory_space<vmem>>, %arg15: memref<128x128xbf16, #tpu.memory_space<vmem>>, %arg16: memref<1x128xf32, #tpu.memory_space<vmem>>, %arg17: memref<2x128xf32, #tpu.memory_space<vmem>>) attributes {dimension_semantics = [], scalar_prefetch = 0 : i64, scratch_operands = 0 : i64, tpu.core_type = #tpu.core_type<tc>} {
    %c0 = arith.constant 0 : index
    %c0_0 = arith.constant 0 : index
    %0 = vector.load %arg0[%c0, %c0_0] : memref<2x243xbf16, #tpu.memory_space<vmem>>, vector<2x243xbf16>
    %c0_1 = arith.constant 0 : index
    %c0_2 = arith.constant 0 : index
    %1 = vector.load %arg1[%c0_1, %c0_2] : memref<243x784xbf16, #tpu.memory_space<vmem>>, vector<243x784xbf16>
    %cst = arith.constant dense<0.000000e+00> : vector<2x784xf32>
    %2 = tpu.matmul %0, %1, %cst {dimension_numbers = #tpu.dot_dimension_numbers<[1], [0], [0], [1], [0, 0, 1, 1], [], []>} : vector<2x243xbf16>, vector<243x784xbf16>, vector<2x784xf32> -> vector<2x784xf32>
    %c0_3 = arith.constant 0 : index
    %c0_4 = arith.constant 0 : index
    %3 = vector.load %arg2[%c0_3, %c0_4] : memref<1x784xf32, #tpu.memory_space<vmem>>, vector<1x784xf32>
    %4 = vector.broadcast %3 : vector<1x784xf32> to vector<2x784xf32>
    %5 = arith.addf %2, %4 : vector<2x784xf32>
    %c0_5 = arith.constant 0 : index
    %c0_6 = arith.constant 0 : index
    %6 = vector.load %arg3[%c0_5, %c0_6] : memref<1x784xf32, #tpu.memory_space<vmem>>, vector<1x784xf32>
    %c0_7 = arith.constant 0 : index
    %c0_8 = arith.constant 0 : index
    %7 = vector.load %arg4[%c0_7, %c0_8] : memref<1x784xf32, #tpu.memory_space<vmem>>, vector<1x784xf32>
    %c0_9 = arith.constant 0 : index
    %c0_10 = arith.constant 0 : index
    %8 = vector.load %arg5[%c0_9, %c0_10] : memref<784x16xbf16, #tpu.memory_space<vmem>>, vector<784x16xbf16>
    %c0_11 = arith.constant 0 : index
    %c0_12 = arith.constant 0 : index
    %9 = vector.load %arg6[%c0_11, %c0_12] : memref<16x784xbf16, #tpu.memory_space<vmem>>, vector<16x784xbf16>
    %cst_13 = arith.constant dense<0.000000e+00> : vector<784xf32>
    %10 = vector.multi_reduction <add>, %5, %cst_13 [0] : vector<2x784xf32> to vector<784xf32>
    %11 = vector.shape_cast %10 : vector<784xf32> to vector<1x784xf32>
    %12 = arith.truncf %11 : vector<1x784xf32> to vector<1x784xbf16>
    %cst_14 = arith.constant dense<0.000000e+00> : vector<1x16xf32>
    %13 = tpu.matmul %12, %8, %cst_14 {dimension_numbers = #tpu.dot_dimension_numbers<[1], [0], [0], [1], [0, 0, 1, 1], [], []>} : vector<1x784xbf16>, vector<784x16xbf16>, vector<1x16xf32> -> vector<1x16xf32>
    %cst_15 = arith.constant 0.0102040814 : f32
    %14 = vector.broadcast %cst_15 : f32 to vector<1x16xf32>
    %15 = arith.mulf %13, %14 : vector<1x16xf32>
    %16 = arith.truncf %15 : vector<1x16xf32> to vector<1x16xbf16>
    %cst_16 = arith.constant dense<0.000000e+00> : vector<1x784xf32>
    %17 = tpu.matmul %16, %9, %cst_16 {dimension_numbers = #tpu.dot_dimension_numbers<[1], [0], [0], [1], [0, 0, 1, 1], [], []>} : vector<1x16xbf16>, vector<16x784xbf16>, vector<1x784xf32> -> vector<1x784xf32>
    %18 = vector.broadcast %17 : vector<1x784xf32> to vector<2x784xf32>
    %19 = arith.subf %5, %18 : vector<2x784xf32>
    %20 = arith.mulf %19, %19 : vector<2x784xf32>
    %cst_17 = arith.constant dense<0.000000e+00> : vector<784xf32>
    %21 = vector.multi_reduction <add>, %20, %cst_17 [0] : vector<2x784xf32> to vector<784xf32>
    %22 = vector.shape_cast %21 : vector<784xf32> to vector<1x784xf32>
    %23 = arith.truncf %22 : vector<1x784xf32> to vector<1x784xbf16>
    %cst_18 = arith.constant dense<0.000000e+00> : vector<1x16xf32>
    %24 = tpu.matmul %23, %8, %cst_18 {dimension_numbers = #tpu.dot_dimension_numbers<[1], [0], [0], [1], [0, 0, 1, 1], [], []>} : vector<1x784xbf16>, vector<784x16xbf16>, vector<1x16xf32> -> vector<1x16xf32>
    %cst_19 = arith.constant 0.0102040814 : f32
    %25 = vector.broadcast %cst_19 : f32 to vector<1x16xf32>
    %26 = arith.mulf %24, %25 : vector<1x16xf32>
    %27 = arith.truncf %26 : vector<1x16xf32> to vector<1x16xbf16>
    %cst_20 = arith.constant dense<0.000000e+00> : vector<1x784xf32>
    %28 = tpu.matmul %27, %9, %cst_20 {dimension_numbers = #tpu.dot_dimension_numbers<[1], [0], [0], [1], [0, 0, 1, 1], [], []>} : vector<1x16xbf16>, vector<16x784xbf16>, vector<1x784xf32> -> vector<1x784xf32>
    %cst_21 = arith.constant 9.99999974E-6 : f32
    %29 = vector.broadcast %cst_21 : f32 to vector<1x784xf32>
    %30 = arith.addf %28, %29 : vector<1x784xf32>
    %31 = math.rsqrt %30 : vector<1x784xf32>
    %32 = arith.mulf %6, %31 : vector<1x784xf32>
    %33 = vector.broadcast %32 : vector<1x784xf32> to vector<2x784xf32>
    %34 = arith.mulf %19, %33 : vector<2x784xf32>
    %35 = vector.broadcast %7 : vector<1x784xf32> to vector<2x784xf32>
    %36 = arith.addf %34, %35 : vector<2x784xf32>
    %37 = arith.truncf %36 : vector<2x784xf32> to vector<2x784xbf16>
    %c0_22 = arith.constant 0 : index
    %c0_23 = arith.constant 0 : index
    %38 = vector.load %arg7[%c0_22, %c0_23] : memref<784x800xbf16, #tpu.memory_space<vmem>>, vector<784x800xbf16>
    %cst_24 = arith.constant dense<0.000000e+00> : vector<2x800xf32>
    %39 = tpu.matmul %37, %38, %cst_24 {dimension_numbers = #tpu.dot_dimension_numbers<[1], [0], [0], [1], [0, 0, 1, 1], [], []>} : vector<2x784xbf16>, vector<784x800xbf16>, vector<2x800xf32> -> vector<2x800xf32>
    %c0_25 = arith.constant 0 : index
    %c0_26 = arith.constant 0 : index
    %40 = vector.load %arg8[%c0_25, %c0_26] : memref<1x800xf32, #tpu.memory_space<vmem>>, vector<1x800xf32>
    %41 = vector.broadcast %40 : vector<1x800xf32> to vector<2x800xf32>
    %42 = arith.addf %39, %41 : vector<2x800xf32>
    %c0_27 = arith.constant 0 : index
    %c0_28 = arith.constant 0 : index
    %43 = vector.load %arg9[%c0_27, %c0_28] : memref<1x800xf32, #tpu.memory_space<vmem>>, vector<1x800xf32>
    %c0_29 = arith.constant 0 : index
    %c0_30 = arith.constant 0 : index
    %44 = vector.load %arg10[%c0_29, %c0_30] : memref<1x800xf32, #tpu.memory_space<vmem>>, vector<1x800xf32>
    %c0_31 = arith.constant 0 : index
    %c0_32 = arith.constant 0 : index
    %45 = vector.load %arg11[%c0_31, %c0_32] : memref<800x32xbf16, #tpu.memory_space<vmem>>, vector<800x32xbf16>
    %c0_33 = arith.constant 0 : index
    %c0_34 = arith.constant 0 : index
    %46 = vector.load %arg12[%c0_33, %c0_34] : memref<32x800xbf16, #tpu.memory_space<vmem>>, vector<32x800xbf16>
    %cst_35 = arith.constant dense<0.000000e+00> : vector<800xf32>
    %47 = vector.multi_reduction <add>, %42, %cst_35 [0] : vector<2x800xf32> to vector<800xf32>
    %48 = vector.shape_cast %47 : vector<800xf32> to vector<1x800xf32>
    %49 = arith.truncf %48 : vector<1x800xf32> to vector<1x800xbf16>
    %cst_36 = arith.constant dense<0.000000e+00> : vector<1x32xf32>
    %50 = tpu.matmul %49, %45, %cst_36 {dimension_numbers = #tpu.dot_dimension_numbers<[1], [0], [0], [1], [0, 0, 1, 1], [], []>} : vector<1x800xbf16>, vector<800x32xbf16>, vector<1x32xf32> -> vector<1x32xf32>
    %cst_37 = arith.constant 2.000000e-02 : f32
    %51 = vector.broadcast %cst_37 : f32 to vector<1x32xf32>
    %52 = arith.mulf %50, %51 : vector<1x32xf32>
    %53 = arith.truncf %52 : vector<1x32xf32> to vector<1x32xbf16>
    %cst_38 = arith.constant dense<0.000000e+00> : vector<1x800xf32>
    %54 = tpu.matmul %53, %46, %cst_38 {dimension_numbers = #tpu.dot_dimension_numbers<[1], [0], [0], [1], [0, 0, 1, 1], [], []>} : vector<1x32xbf16>, vector<32x800xbf16>, vector<1x800xf32> -> vector<1x800xf32>
    %55 = vector.broadcast %54 : vector<1x800xf32> to vector<2x800xf32>
    %56 = arith.subf %42, %55 : vector<2x800xf32>
    %57 = arith.mulf %56, %56 : vector<2x800xf32>
    %cst_39 = arith.constant dense<0.000000e+00> : vector<800xf32>
    %58 = vector.multi_reduction <add>, %57, %cst_39 [0] : vector<2x800xf32> to vector<800xf32>
    %59 = vector.shape_cast %58 : vector<800xf32> to vector<1x800xf32>
    %60 = arith.truncf %59 : vector<1x800xf32> to vector<1x800xbf16>
    %cst_40 = arith.constant dense<0.000000e+00> : vector<1x32xf32>
    %61 = tpu.matmul %60, %45, %cst_40 {dimension_numbers = #tpu.dot_dimension_numbers<[1], [0], [0], [1], [0, 0, 1, 1], [], []>} : vector<1x800xbf16>, vector<800x32xbf16>, vector<1x32xf32> -> vector<1x32xf32>
    %cst_41 = arith.constant 2.000000e-02 : f32
    %62 = vector.broadcast %cst_41 : f32 to vector<1x32xf32>
    %63 = arith.mulf %61, %62 : vector<1x32xf32>
    %64 = arith.truncf %63 : vector<1x32xf32> to vector<1x32xbf16>
    %cst_42 = arith.constant dense<0.000000e+00> : vector<1x800xf32>
    %65 = tpu.matmul %64, %46, %cst_42 {dimension_numbers = #tpu.dot_dimension_numbers<[1], [0], [0], [1], [0, 0, 1, 1], [], []>} : vector<1x32xbf16>, vector<32x800xbf16>, vector<1x800xf32> -> vector<1x800xf32>
    %cst_43 = arith.constant 9.99999974E-6 : f32
    %66 = vector.broadcast %cst_43 : f32 to vector<1x800xf32>
    %67 = arith.addf %65, %66 : vector<1x800xf32>
    %68 = math.rsqrt %67 : vector<1x800xf32>
    %69 = arith.mulf %43, %68 : vector<1x800xf32>
    %70 = vector.broadcast %69 : vector<1x800xf32> to vector<2x800xf32>
    %71 = arith.mulf %56, %70 : vector<2x800xf32>
    %72 = vector.broadcast %44 : vector<1x800xf32> to vector<2x800xf32>
    %73 = arith.addf %71, %72 : vector<2x800xf32>
    %74 = arith.truncf %73 : vector<2x800xf32> to vector<2x800xbf16>
    %c0_44 = arith.constant 0 : index
    %c0_45 = arith.constant 0 : index
    %75 = vector.load %arg13[%c0_44, %c0_45] : memref<800x128xbf16, #tpu.memory_space<vmem>>, vector<800x128xbf16>
    %cst_46 = arith.constant dense<0.000000e+00> : vector<2x128xf32>
    %76 = tpu.matmul %74, %75, %cst_46 {dimension_numbers = #tpu.dot_dimension_numbers<[1], [0], [0], [1], [0, 0, 1, 1], [], []>} : vector<2x800xbf16>, vector<800x128xbf16>, vector<2x128xf32> -> vector<2x128xf32>
    %c0_47 = arith.constant 0 : index
    %c0_48 = arith.constant 0 : index
    %77 = vector.load %arg14[%c0_47, %c0_48] : memref<1x128xf32, #tpu.memory_space<vmem>>, vector<1x128xf32>
    %78 = vector.broadcast %77 : vector<1x128xf32> to vector<2x128xf32>
    %79 = arith.addf %76, %78 : vector<2x128xf32>
    %cst_49 = arith.constant 0.00999999977 : f32
    %80 = vector.broadcast %cst_49 : f32 to vector<2x128xf32>
    %81 = arith.mulf %80, %79 : vector<2x128xf32>
    %82 = arith.maximumf %79, %81 : vector<2x128xf32>
    %83 = arith.truncf %82 : vector<2x128xf32> to vector<2x128xbf16>
    %c0_50 = arith.constant 0 : index
    %c0_51 = arith.constant 0 : index
    %84 = vector.load %arg15[%c0_50, %c0_51] : memref<128x128xbf16, #tpu.memory_space<vmem>>, vector<128x128xbf16>
    %cst_52 = arith.constant dense<0.000000e+00> : vector<2x128xf32>
    %85 = tpu.matmul %83, %84, %cst_52 {dimension_numbers = #tpu.dot_dimension_numbers<[1], [0], [0], [1], [0, 0, 1, 1], [], []>} : vector<2x128xbf16>, vector<128x128xbf16>, vector<2x128xf32> -> vector<2x128xf32>
    %c0_53 = arith.constant 0 : index
    %c0_54 = arith.constant 0 : index
    %86 = vector.load %arg16[%c0_53, %c0_54] : memref<1x128xf32, #tpu.memory_space<vmem>>, vector<1x128xf32>
    %87 = vector.broadcast %86 : vector<1x128xf32> to vector<2x128xf32>
    %88 = arith.addf %85, %87 : vector<2x128xf32>
    %cst_55 = arith.constant 0.000000e+00 : f32
    %89 = vector.broadcast %cst_55 : f32 to vector<2x128xf32>
    %90 = arith.subf %89, %88 : vector<2x128xf32>
    %91 = math.exp %90 : vector<2x128xf32>
    %cst_56 = arith.constant 1.000000e+00 : f32
    %92 = vector.broadcast %cst_56 : f32 to vector<2x128xf32>
    %93 = arith.addf %92, %91 : vector<2x128xf32>
    %94 = tpu.reciprocal %93 {approx = true} : vector<2x128xf32> -> vector<2x128xf32>
    %c0_57 = arith.constant 0 : index
    %c0_58 = arith.constant 0 : index
    %95 = vector.load %arg17[%c0_57, %c0_58] : memref<2x128xf32, #tpu.memory_space<vmem>>, vector<2x128xf32>
    tpu.vector_store %arg17[%c0_57, %c0_58], %94 {strides = array<i32>} : memref<2x128xf32, #tpu.memory_space<vmem>>, vector<2x128xf32>,
    return
  }
}

</mosaic_0001>

<llo_original>
// kernel: tpu_custom_call.1
$region0: #{tpu_custom_call.1}
  #allocation0 [shape = 'u32[]', space=smem, size = 0x4, offset = 0x4, fixed_abs, tag = 'smem constant byte address 0x4 - core index']
  #allocation1 [shape = 'u32[72,128]{1,0:T(1,128)}', space=vmem, size = 0x9000, scoped, tag = 'internal scratch']
  %s0 = inlined_call_operand.hbm [shape: bf16[2,243], index: 0, kind: input, shape index: {}]
  %s1 = inlined_call_operand.vmem [shape: bf16[243,784], index: 1, kind: input, shape index: {}]
  %s2 = inlined_call_operand.hbm [shape: f32[1,784], index: 2, kind: input, shape index: {}]
  %s3 = inlined_call_operand.hbm [shape: f32[1,784], index: 3, kind: input, shape index: {}]
  %s4 = inlined_call_operand.hbm [shape: f32[1,784], index: 4, kind: input, shape index: {}]
  %s5 = inlined_call_operand.vmem [shape: bf16[784,16], index: 5, kind: input, shape index: {}]
  %s6 = inlined_call_operand.hbm [shape: bf16[16,784], index: 6, kind: input, shape index: {}]
  %s7 = inlined_call_operand.hbm [shape: bf16[784,800], index: 7, kind: input, shape index: {}]
  %s8 = inlined_call_operand.hbm [shape: f32[1,800], index: 8, kind: input, shape index: {}]
  %s9 = inlined_call_operand.hbm [shape: f32[1,800], index: 9, kind: input, shape index: {}]
  %s10 = inlined_call_operand.hbm [shape: f32[1,800], index: 10, kind: input, shape index: {}]
  %s11 = inlined_call_operand.vmem [shape: bf16[800,32], index: 11, kind: input, shape index: {}]
  %s12 = inlined_call_operand.hbm [shape: bf16[32,800], index: 12, kind: input, shape index: {}]
  %s13 = inlined_call_operand.hbm [shape: bf16[800,128], index: 13, kind: input, shape index: {}]
  %s14 = inlined_call_operand.hbm [shape: f32[1,128], index: 14, kind: input, shape index: {}]
  %s15 = inlined_call_operand.hbm [shape: bf16[128,128], index: 15, kind: input, shape index: {}]
  %s16 = inlined_call_operand.hbm [shape: f32[1,128], index: 16, kind: input, shape index: {}]
  %s17 = inlined_call_operand.hbm [shape: f32[2,128], index: 17, kind: output, shape index: {}]
  %s18 = sld [smem:[#allocation0]]
  $region134: #{tpu_custom_call.1} parent=0
    _
  %s20 = ssub.s32 1, %s18
  %s21 = scalar_select 0, %s20, %s18
  $region1: #{tpu_custom_call.1} parent=0
    #allocation2 [shape = 'u8[1024]{0}', space=vmem, size = 0x400, scoped, tag = 'input window, operand 0, single buffered']
    #allocation3 [shape = 's32[1]{0}', space=sflag, size = 0x4, scoped, tag = 'scoped memory for tpu_custom_call.1']
    #allocation4 [shape = 's32[1]{0}', space=sflag, size = 0x4, scoped, tag = 'scoped memory for tpu_custom_call.1']
    #allocation5 [shape = 'u8[3584]{0}', space=vmem, size = 0x1000, scoped, tag = 'input window, operand 2, single buffered']
    #allocation6 [shape = 's32[1]{0}', space=sflag, size = 0x4, scoped, tag = 'scoped memory for tpu_custom_call.1']
    #allocation7 [shape = 'u8[3584]{0}', space=vmem, size = 0x1000, scoped, tag = 'input window, operand 3, single buffered']
    #allocation8 [shape = 'u8[3584]{0}', space=vmem, size = 0x1000, scoped, tag = 'input window, operand 4, single buffered']
    #allocation9 [shape = 's32[1]{0}', space=sflag, size = 0x4, scoped, tag = 'scoped memory for tpu_custom_call.1']
    #allocation10 [shape = 'u8[28672]{0}', space=vmem, size = 0x7000, scoped, tag = 'input window, operand 6, single buffered']
    #allocation11 [shape = 'u8[1404928]{0}', space=vmem, size = 0x157000, scoped, tag = 'input window, operand 7, single buffered']
    #allocation12 [shape = 's32[1]{0}', space=sflag, size = 0x4, scoped, tag = 'scoped memory for tpu_custom_call.1']
    #allocation13 [shape = 'u8[3584]{0}', space=vmem, size = 0x1000, scoped, tag = 'input window, operand 8, single buffered']
    #allocation14 [shape = 'u8[3584]{0}', space=vmem, size = 0x1000, scoped, tag = 'input window, operand 9, single buffered']
    #allocation15 [shape = 's32[1]{0}', space=sflag, size = 0x4, scoped, tag = 'scoped memory for tpu_custom_call.1']
    #allocation16 [shape = 'u8[3584]{0}', space=vmem, size = 0x1000, scoped, tag = 'input window, operand 10, single buffered']
    #allocation17 [shape = 'u8[57344]{0}', space=vmem, size = 0xe000, scoped, tag = 'input window, operand 12, single buffered']
    #allocation18 [shape = 's32[1]{0}', space=sflag, size = 0x4, scoped, tag = 'scoped memory for tpu_custom_call.1']
    #allocation19 [shape = 'u8[204800]{0}', space=vmem, size = 0x32000, scoped, tag = 'input window, operand 13, single buffered']
    #allocation20 [shape = 'u8[512]{0}', space=vmem, size = 0x400, scoped, tag = 'input window, operand 14, single buffered']
    #allocation21 [shape = 's32[1]{0}', space=sflag, size = 0x4, scoped, tag = 'scoped memory for tpu_custom_call.1']
    #allocation22 [shape = 'u8[32768]{0}', space=vmem, size = 0x8000, scoped, tag = 'input window, operand 15, single buffered']
    #allocation23 [shape = 'u8[512]{0}', space=vmem, size = 0x400, scoped, tag = 'input window, operand 16, single buffered']
    #allocation24 [shape = 's32[1]{0}', space=sflag, size = 0x4, scoped, tag = 'scoped memory for tpu_custom_call.1']
    #allocation25 [shape = 'u8[1024]{0}', space=vmem, size = 0x400, scoped, tag = 'output window, operand 0, single buffered']
    %22 = vsyncpa [#allocation3], 0
    %23 = vsyncpa [#allocation6], 0
    %24 = vsyncpa [#allocation9], 0
    %25 = vsyncpa [#allocation12], 0
    %26 = vsyncpa [#allocation15], 0
    %27 = vsyncpa [#allocation18], 0
    %28 = vsyncpa [#allocation21], 0
    %29 = vsyncpa [#allocation24], 0
    %30 = vsyncpa [#allocation4], 0
    // Predicated region
    $region2: #{tpu_custom_call.1} parent=1 // pred_check
      _
    $region3: #{tpu_custom_call.1} parent=1 // pred_check_branch
      %32 = sbr.rel (0) target = $region5
    $region4: #{tpu_custom_call.1} parent=1 // pred_region
      %34 = vsyncadd [#allocation3], 0
      %s36 = sshll.u32 %s0, 4
      %s37 = int_to_ptr.hbm [resolvable:$true] %s36
      %s38 = sshll.u32 [#allocation2], 4
      %s39 = int_to_ptr.vmem [resolvable:$true] %s38
      %41 = dma.hbm_to_vmem [thread:$0]  %s37, 32, %s39, [#allocation3]
    $region5: #{tpu_custom_call.1} parent=1 // pred_fallthru
      _
    // Predicated region
    $region6: #{tpu_custom_call.1} parent=1 // pred_check
      _
    $region7: #{tpu_custom_call.1} parent=1 // pred_check_branch
      %43 = sbr.rel (0) target = $region9
    $region8: #{tpu_custom_call.1} parent=1 // pred_region
      _
    $region9: #{tpu_custom_call.1} parent=1 // pred_fallthru
      _
    // Predicated region
    $region10: #{tpu_custom_call.1} parent=1 // pred_check
      _
    $region11: #{tpu_custom_call.1} parent=1 // pred_check_branch
      %45 = sbr.rel (0) target = $region13
    $region12: #{tpu_custom_call.1} parent=1 // pred_region
      %47 = vsyncadd [#allocation6], 0
      %s49 = sshll.u32 %s2, 4
      %s50 = int_to_ptr.hbm [resolvable:$true] %s49
      %s51 = sshll.u32 [#allocation5], 4
      %s52 = int_to_ptr.vmem [resolvable:$true] %s51
      %54 = dma.hbm_to_vmem [thread:$0]  %s50, 112, %s52, [#allocation6]
    $region13: #{tpu_custom_call.1} parent=1 // pred_fallthru
      _
    // Predicated region
    $region14: #{tpu_custom_call.1} parent=1 // pred_check
      _
    $region15: #{tpu_custom_call.1} parent=1 // pred_check_branch
      %56 = sbr.rel (0) target = $region17
    $region16: #{tpu_custom_call.1} parent=1 // pred_region
      %58 = vsyncadd [#allocation6], 0
      %s60 = sshll.u32 %s3, 4
      %s61 = int_to_ptr.hbm [resolvable:$true] %s60
      %s62 = sshll.u32 [#allocation7], 4
      %s63 = int_to_ptr.vmem [resolvable:$true] %s62
      %65 = dma.hbm_to_vmem [thread:$0]  %s61, 112, %s63, [#allocation6]
    $region17: #{tpu_custom_call.1} parent=1 // pred_fallthru
      _
    // Predicated region
    $region18: #{tpu_custom_call.1} parent=1 // pred_check
      _
    $region19: #{tpu_custom_call.1} parent=1 // pred_check_branch
      %67 = sbr.rel (0) target = $region21
    $region20: #{tpu_custom_call.1} parent=1 // pred_region
      %69 = vsyncadd [#allocation9], 0
      %s71 = sshll.u32 %s4, 4
      %s72 = int_to_ptr.hbm [resolvable:$true] %s71
      %s73 = sshll.u32 [#allocation8], 4
      %s74 = int_to_ptr.vmem [resolvable:$true] %s73
      %76 = dma.hbm_to_vmem [thread:$0]  %s72, 112, %s74, [#allocation9]
    $region21: #{tpu_custom_call.1} parent=1 // pred_fallthru
      _
    // Predicated region
    $region22: #{tpu_custom_call.1} parent=1 // pred_check
      _
    $region23: #{tpu_custom_call.1} parent=1 // pred_check_branch
      %78 = sbr.rel (0) target = $region25
    $region24: #{tpu_custom_call.1} parent=1 // pred_region
      _
    $region25: #{tpu_custom_call.1} parent=1 // pred_fallthru
      _
    // Predicated region
    $region26: #{tpu_custom_call.1} parent=1 // pred_check
      _
    $region27: #{tpu_custom_call.1} parent=1 // pred_check_branch
      %80 = sbr.rel (0) target = $region29
    $region28: #{tpu_custom_call.1} parent=1 // pred_region
      %82 = vsyncadd [#allocation9], 0
      %s83 = sshll.u32 %s6, 4
      %s84 = int_to_ptr.hbm [resolvable:$true] %s83
      %s85 = sshll.u32 [#allocation10], 4
      %s86 = int_to_ptr.vmem [resolvable:$true] %s85
      %91 = dma.hbm_to_vmem [thread:$0]  %s84, 896, %s86, [#allocation9], 448, 448, 28
    $region29: #{tpu_custom_call.1} parent=1 // pred_fallthru
      _
    // Predicated region
    $region30: #{tpu_custom_call.1} parent=1 // pred_check
      _
    $region31: #{tpu_custom_call.1} parent=1 // pred_check_branch
      %93 = sbr.rel (0) target = $region33
    $region32: #{tpu_custom_call.1} parent=1 // pred_region
      %95 = vsyncadd [#allocation12], 0
      %s96 = sshll.u32 %s7, 4
      %s97 = int_to_ptr.hbm [resolvable:$true] %s96
      %s98 = sshll.u32 [#allocation11], 4
      %s99 = int_to_ptr.vmem [resolvable:$true] %s98
      %104 = dma.hbm_to_vmem [thread:$0]  %s97, 43904, %s99, [#allocation12], 448, 448, 28
    $region33: #{tpu_custom_call.1} parent=1 // pred_fallthru
      _
    // Predicated region
    $region34: #{tpu_custom_call.1} parent=1 // pred_check
      _
    $region35: #{tpu_custom_call.1} parent=1 // pred_check_branch
      %106 = sbr.rel (0) target = $region37
    $region36: #{tpu_custom_call.1} parent=1 // pred_region
      %108 = vsyncadd [#allocation12], 0
      %s110 = sshll.u32 %s8, 4
      %s111 = int_to_ptr.hbm [resolvable:$true] %s110
      %s112 = sshll.u32 [#allocation13], 4
      %s113 = int_to_ptr.vmem [resolvable:$true] %s112
      %115 = dma.hbm_to_vmem [thread:$0]  %s111, 112, %s113, [#allocation12]
    $region37: #{tpu_custom_call.1} parent=1 // pred_fallthru
      _
    // Predicated region
    $region38: #{tpu_custom_call.1} parent=1 // pred_check
      _
    $region39: #{tpu_custom_call.1} parent=1 // pred_check_branch
      %117 = sbr.rel (0) target = $region41
    $region40: #{tpu_custom_call.1} parent=1 // pred_region
      %119 = vsyncadd [#allocation15], 0
      %s121 = sshll.u32 %s9, 4
      %s122 = int_to_ptr.hbm [resolvable:$true] %s121
      %s123 = sshll.u32 [#allocation14], 4
      %s124 = int_to_ptr.vmem [resolvable:$true] %s123
      %126 = dma.hbm_to_vmem [thread:$0]  %s122, 112, %s124, [#allocation15]
    $region41: #{tpu_custom_call.1} parent=1 // pred_fallthru
      _
    // Predicated region
    $region42: #{tpu_custom_call.1} parent=1 // pred_check
      _
    $region43: #{tpu_custom_call.1} parent=1 // pred_check_branch
      %128 = sbr.rel (0) target = $region45
    $region44: #{tpu_custom_call.1} parent=1 // pred_region
      %130 = vsyncadd [#allocation15], 0
      %s132 = sshll.u32 %s10, 4
      %s133 = int_to_ptr.hbm [resolvable:$true] %s132
      %s134 = sshll.u32 [#allocation16], 4
      %s135 = int_to_ptr.vmem [resolvable:$true] %s134
      %137 = dma.hbm_to_vmem [thread:$0]  %s133, 112, %s135, [#allocation15]
    $region45: #{tpu_custom_call.1} parent=1 // pred_fallthru
      _
    // Predicated region
    $region46: #{tpu_custom_call.1} parent=1 // pred_check
      _
    $region47: #{tpu_custom_call.1} parent=1 // pred_check_branch
      %139 = sbr.rel (0) target = $region49
    $region48: #{tpu_custom_call.1} parent=1 // pred_region
      _
    $region49: #{tpu_custom_call.1} parent=1 // pred_fallthru
      _
    // Predicated region
    $region50: #{tpu_custom_call.1} parent=1 // pred_check
      _
    $region51: #{tpu_custom_call.1} parent=1 // pred_check_branch
      %141 = sbr.rel (0) target = $region53
    $region52: #{tpu_custom_call.1} parent=1 // pred_region
      %143 = vsyncadd [#allocation18], 0
      %s144 = sshll.u32 %s12, 4
      %s145 = int_to_ptr.hbm [resolvable:$true] %s144
      %s146 = sshll.u32 [#allocation17], 4
      %s147 = int_to_ptr.vmem [resolvable:$true] %s146
      %152 = dma.hbm_to_vmem [thread:$0]  %s145, 1792, %s147, [#allocation18], 448, 448, 28
    $region53: #{tpu_custom_call.1} parent=1 // pred_fallthru
      _
    // Predicated region
    $region54: #{tpu_custom_call.1} parent=1 // pred_check
      _
    $region55: #{tpu_custom_call.1} parent=1 // pred_check_branch
      %154 = sbr.rel (0) target = $region57
    $region56: #{tpu_custom_call.1} parent=1 // pred_region
      %156 = vsyncadd [#allocation18], 0
      %s157 = sshll.u32 %s13, 4
      %s158 = int_to_ptr.hbm [resolvable:$true] %s157
      %s159 = sshll.u32 [#allocation19], 4
      %s160 = int_to_ptr.vmem [resolvable:$true] %s159
      %165 = dma.hbm_to_vmem [thread:$0]  %s158, 6400, %s160, [#allocation18], 64, 64, 4
    $region57: #{tpu_custom_call.1} parent=1 // pred_fallthru
      _
    // Predicated region
    $region58: #{tpu_custom_call.1} parent=1 // pred_check
      _
    $region59: #{tpu_custom_call.1} parent=1 // pred_check_branch
      %167 = sbr.rel (0) target = $region61
    $region60: #{tpu_custom_call.1} parent=1 // pred_region
      %169 = vsyncadd [#allocation21], 0
      %s171 = sshll.u32 %s14, 4
      %s172 = int_to_ptr.hbm [resolvable:$true] %s171
      %s173 = sshll.u32 [#allocation20], 4
      %s174 = int_to_ptr.vmem [resolvable:$true] %s173
      %176 = dma.hbm_to_vmem [thread:$0]  %s172, 16, %s174, [#allocation21]
    $region61: #{tpu_custom_call.1} parent=1 // pred_fallthru
      _
    // Predicated region
    $region62: #{tpu_custom_call.1} parent=1 // pred_check
      _
    $region63: #{tpu_custom_call.1} parent=1 // pred_check_branch
      %178 = sbr.rel (0) target = $region65
    $region64: #{tpu_custom_call.1} parent=1 // pred_region
      %180 = vsyncadd [#allocation21], 0
      %s181 = sshll.u32 %s15, 4
      %s182 = int_to_ptr.hbm [resolvable:$true] %s181
      %s183 = sshll.u32 [#allocation22], 4
      %s184 = int_to_ptr.vmem [resolvable:$true] %s183
      %189 = dma.hbm_to_vmem [thread:$0]  %s182, 1024, %s184, [#allocation21], 64, 64, 4
    $region65: #{tpu_custom_call.1} parent=1 // pred_fallthru
      _
    // Predicated region
    $region66: #{tpu_custom_call.1} parent=1 // pred_check
      _
    $region67: #{tpu_custom_call.1} parent=1 // pred_check_branch
      %191 = sbr.rel (0) target = $region69
    $region68: #{tpu_custom_call.1} parent=1 // pred_region
      %193 = vsyncadd [#allocation24], 0
      %s195 = sshll.u32 %s16, 4
      %s196 = int_to_ptr.hbm [resolvable:$true] %s195
      %s197 = sshll.u32 [#allocation23], 4
      %s198 = int_to_ptr.vmem [resolvable:$true] %s197
      %200 = dma.hbm_to_vmem [thread:$0]  %s196, 16, %s198, [#allocation24]
    $region69: #{tpu_custom_call.1} parent=1 // pred_fallthru
      _
    // Predicated region
    $region70: #{tpu_custom_call.1} parent=1 // pred_check
      _
    $region71: #{tpu_custom_call.1} parent=1 // pred_check_branch
      %202 = sbr.rel (0) target = $region73
    $region72: #{tpu_custom_call.1} parent=1 // pred_region
      %204 = dma.done [#allocation3], 32
    $region73: #{tpu_custom_call.1} parent=1 // pred_fallthru
      _
    // Predicated region
    $region74: #{tpu_custom_call.1} parent=1 // pred_check
      _
    $region75: #{tpu_custom_call.1} parent=1 // pred_check_branch
      %206 = sbr.rel (0) target = $region77
    $region76: #{tpu_custom_call.1} parent=1 // pred_region
      %208 = dma.done [#allocation6], 112
    $region77: #{tpu_custom_call.1} parent=1 // pred_fallthru
      _
    // Predicated region
    $region78: #{tpu_custom_call.1} parent=1 // pred_check
      _
    $region79: #{tpu_custom_call.1} parent=1 // pred_check_branch
      %210 = sbr.rel (0) target = $region81
    $region80: #{tpu_custom_call.1} parent=1 // pred_region
      %212 = dma.done [#allocation6], 112
    $region81: #{tpu_custom_call.1} parent=1 // pred_fallthru
      _
    // Predicated region
    $region82: #{tpu_custom_call.1} parent=1 // pred_check
      _
    $region83: #{tpu_custom_call.1} parent=1 // pred_check_branch
      %214 = sbr.rel (0) target = $region85
    $region84: #{tpu_custom_call.1} parent=1 // pred_region
      %216 = dma.done [#allocation9], 112
    $region85: #{tpu_custom_call.1} parent=1 // pred_fallthru
      _
    // Predicated region
    $region86: #{tpu_custom_call.1} parent=1 // pred_check
      _
    $region87: #{tpu_custom_call.1} parent=1 // pred_check_branch
      %218 = sbr.rel (0) target = $region89
    $region88: #{tpu_custom_call.1} parent=1 // pred_region
      %220 = dma.done [#allocation9], 896
    $region89: #{tpu_custom_call.1} parent=1 // pred_fallthru
      _
    // Predicated region
    $region90: #{tpu_custom_call.1} parent=1 // pred_check
      _
    $region91: #{tpu_custom_call.1} parent=1 // pred_check_branch
      %222 = sbr.rel (0) target = $region93
    $region92: #{tpu_custom_call.1} parent=1 // pred_region
      %224 = dma.done [#allocation12], 43904
    $region93: #{tpu_custom_call.1} parent=1 // pred_fallthru
      _
    // Predicated region
    $region94: #{tpu_custom_call.1} parent=1 // pred_check
      _
    $region95: #{tpu_custom_call.1} parent=1 // pred_check_branch
      %226 = sbr.rel (0) target = $region97
    $region96: #{tpu_custom_call.1} parent=1 // pred_region
      %228 = dma.done [#allocation12], 112
    $region97: #{tpu_custom_call.1} parent=1 // pred_fallthru
      _
    // Predicated region
    $region98: #{tpu_custom_call.1} parent=1 // pred_check
      _
    $region99: #{tpu_custom_call.1} parent=1 // pred_check_branch
      %230 = sbr.rel (0) target = $region101
    $region100: #{tpu_custom_call.1} parent=1 // pred_region
      %232 = dma.done [#allocation15], 112
    $region101: #{tpu_custom_call.1} parent=1 // pred_fallthru
      _
    // Predicated region
    $region102: #{tpu_custom_call.1} parent=1 // pred_check
      _
    $region103: #{tpu_custom_call.1} parent=1 // pred_check_branch
      %234 = sbr.rel (0) target = $region105
    $region104: #{tpu_custom_call.1} parent=1 // pred_region
      %236 = dma.done [#allocation15], 112
    $region105: #{tpu_custom_call.1} parent=1 // pred_fallthru
      _
    // Predicated region
    $region106: #{tpu_custom_call.1} parent=1 // pred_check
      _
    $region107: #{tpu_custom_call.1} parent=1 // pred_check_branch
      %238 = sbr.rel (0) target = $region109
    $region108: #{tpu_custom_call.1} parent=1 // pred_region
      %240 = dma.done [#allocation18], 1792
    $region109: #{tpu_custom_call.1} parent=1 // pred_fallthru
      _
    // Predicated region
    $region110: #{tpu_custom_call.1} parent=1 // pred_check
      _
    $region111: #{tpu_custom_call.1} parent=1 // pred_check_branch
      %242 = sbr.rel (0) target = $region113
    $region112: #{tpu_custom_call.1} parent=1 // pred_region
      %244 = dma.done [#allocation18], 6400
    $region113: #{tpu_custom_call.1} parent=1 // pred_fallthru
      _
    // Predicated region
    $region114: #{tpu_custom_call.1} parent=1 // pred_check
      _
    $region115: #{tpu_custom_call.1} parent=1 // pred_check_branch
      %246 = sbr.rel (0) target = $region117
    $region116: #{tpu_custom_call.1} parent=1 // pred_region
      %248 = dma.done [#allocation21], 16
    $region117: #{tpu_custom_call.1} parent=1 // pred_fallthru
      _
    // Predicated region
    $region118: #{tpu_custom_call.1} parent=1 // pred_check
      _
    $region119: #{tpu_custom_call.1} parent=1 // pred_check_branch
      %250 = sbr.rel (0) target = $region121
    $region120: #{tpu_custom_call.1} parent=1 // pred_region
      %252 = dma.done [#allocation21], 1024
    $region121: #{tpu_custom_call.1} parent=1 // pred_fallthru
      _
    // Predicated region
    $region122: #{tpu_custom_call.1} parent=1 // pred_check
      _
    $region123: #{tpu_custom_call.1} parent=1 // pred_check_branch
      %254 = sbr.rel (0) target = $region125
    $region124: #{tpu_custom_call.1} parent=1 // pred_region
      %256 = dma.done [#allocation24], 16
    $region125: #{tpu_custom_call.1} parent=1 // pred_fallthru
      _
    %v258 = vld [vmem:[#allocation2] sm:$0x3]
    %v259 = vld [vmem:[%s1] sm:$0xff]
    %v260 = vld [vmem:[%s1 + $0x8] sm:$0xff]
    %v261 = vld [vmem:[%s1 + $0x10] sm:$0xff]
    %v262 = vld [vmem:[%s1 + $0x18] sm:$0xf]
    %v263 = vld [vmem:[%s1 + $0x1c] sm:$0xff]
    %v264 = vld [vmem:[%s1 + $0x24] sm:$0xff]
    %v265 = vld [vmem:[%s1 + $0x2c] sm:$0xff]
    %v266 = vld [vmem:[%s1 + $0x34] sm:$0xf]
    %v267 = vld [vmem:[%s1 + $0x38] sm:$0xff]
    %v268 = vld [vmem:[%s1 + $0x40] sm:$0xff]
    %v269 = vld [vmem:[%s1 + $0x48] sm:$0xff]
    %v270 = vld [vmem:[%s1 + $0x50] sm:$0xf]
    %v271 = vld [vmem:[%s1 + $0x54] sm:$0xff]
    %v272 = vld [vmem:[%s1 + $0x5c] sm:$0xff]
    %v273 = vld [vmem:[%s1 + $0x64] sm:$0xff]
    %v274 = vld [vmem:[%s1 + $0x6c] sm:$0xf]
    %v275 = vld [vmem:[%s1 + $0x70] sm:$0xff]
    %v276 = vld [vmem:[%s1 + $0x78] sm:$0xff]
    %v277 = vld [vmem:[%s1 + $0x80] sm:$0xff]
    %v278 = vld [vmem:[%s1 + $0x88] sm:$0xf]
    %v279 = vld [vmem:[%s1 + $0x8c] sm:$0xff]
    %v280 = vld [vmem:[%s1 + $0x94] sm:$0xff]
    %v281 = vld [vmem:[%s1 + $0x9c] sm:$0xff]
    %v282 = vld [vmem:[%s1 + $0xa4] sm:$0xf]
    %v283 = vld [vmem:[%s1 + $0xa8] sm:$0xff]
    %v284 = vld [vmem:[%s1 + $0xb0] sm:$0xff]
    %v285 = vld [vmem:[%s1 + $0xb8] sm:$0xff]
    %v286 = vld [vmem:[%s1 + $0xc0] sm:$0xf]
    %v287 = vld [vmem:[%s1 + $0xc4] sm:$0xff]
    %v288 = vld [vmem:[%s1 + $0xcc] sm:$0xff]
    %v289 = vld [vmem:[%s1 + $0xd4] sm:$0xff]
    %v290 = vld [vmem:[%s1 + $0xdc] sm:$0xf]
    %v291 = vld [vmem:[%s1 + $0xe0] sm:$0xff]
    %v292 = vld [vmem:[%s1 + $0xe8] sm:$0xff]
    %v293 = vld [vmem:[%s1 + $0xf0] sm:$0xff]
    %v294 = vld [vmem:[%s1 + $0xf8] sm:$0xf]
    %v295 = vld [vmem:[%s1 + $0xfc] sm:$0xff]
    %v296 = vld [vmem:[%s1 + $0x104] sm:$0xff]
    %v297 = vld [vmem:[%s1 + $0x10c] sm:$0xff]
    %v298 = vld [vmem:[%s1 + $0x114] sm:$0xf]
    %v299 = vld [vmem:[%s1 + $0x118] sm:$0xff]
    %v300 = vld [vmem:[%s1 + $0x120] sm:$0xff]
    %v301 = vld [vmem:[%s1 + $0x128] sm:$0xff]
    %v302 = vld [vmem:[%s1 + $0x130] sm:$0xf]
    %v303 = vld [vmem:[%s1 + $0x134] sm:$0xff]
    %v304 = vld [vmem:[%s1 + $0x13c] sm:$0xff]
    %v305 = vld [vmem:[%s1 + $0x144] sm:$0xff]
    %v306 = vld [vmem:[%s1 + $0x14c] sm:$0xf]
    %v307 = vld [vmem:[%s1 + $0x150] sm:$0xff]
    %v308 = vld [vmem:[%s1 + $0x158] sm:$0xff]
    %v309 = vld [vmem:[%s1 + $0x160] sm:$0xff]
    %v310 = vld [vmem:[%s1 + $0x168] sm:$0xf]
    %v311 = vld [vmem:[%s1 + $0x16c] sm:$0xff]
    %v312 = vld [vmem:[%s1 + $0x174] sm:$0xff]
    %v313 = vld [vmem:[%s1 + $0x17c] sm:$0xff]
    %v314 = vld [vmem:[%s1 + $0x184] sm:$0xf]
    %v315 = vld [vmem:[%s1 + $0x188] sm:$0xff]
    %v316 = vld [vmem:[%s1 + $0x190] sm:$0xff]
    %v317 = vld [vmem:[%s1 + $0x198] sm:$0xff]
    %v318 = vld [vmem:[%s1 + $0x1a0] sm:$0xf]
    %v319 = vld [vmem:[%s1 + $0x1a4] sm:$0xff]
    %v320 = vld [vmem:[%s1 + $0x1ac] sm:$0xff]
    %v321 = vld [vmem:[%s1 + $0x1b4] sm:$0xff]
    %v322 = vld [vmem:[%s1 + $0x1bc] sm:$0xf]
    %v323 = vld [vmem:[%s1 + $0x1c0] sm:$0xff]
    %v324 = vld [vmem:[%s1 + $0x1c8] sm:$0xff]
    %v325 = vld [vmem:[%s1 + $0x1d0] sm:$0xff]
    %v326 = vld [vmem:[%s1 + $0x1d8] sm:$0xf]
    %v327 = vld [vmem:[%s1 + $0x1dc] sm:$0xff]
    %v328 = vld [vmem:[%s1 + $0x1e4] sm:$0xff]
    %v329 = vld [vmem:[%s1 + $0x1ec] sm:$0xff]
    %v330 = vld [vmem:[%s1 + $0x1f4] sm:$0xf]
    %v331 = vld [vmem:[%s1 + $0x1f8] sm:$0xff]
    %v332 = vld [vmem:[%s1 + $0x200] sm:$0xff]
    %v333 = vld [vmem:[%s1 + $0x208] sm:$0xff]
    %v334 = vld [vmem:[%s1 + $0x210] sm:$0xf]
    %v335 = vld [vmem:[%s1 + $0x214] sm:$0xff]
    %v336 = vld [vmem:[%s1 + $0x21c] sm:$0xff]
    %v337 = vld [vmem:[%s1 + $0x224] sm:$0xff]
    %v338 = vld [vmem:[%s1 + $0x22c] sm:$0xf]
    %v339 = vld [vmem:[%s1 + $0x230] sm:$0xff]
    %v340 = vld [vmem:[%s1 + $0x238] sm:$0xff]
    %v341 = vld [vmem:[%s1 + $0x240] sm:$0xff]
    %v342 = vld [vmem:[%s1 + $0x248] sm:$0xf]
    %v343 = vld [vmem:[%s1 + $0x24c] sm:$0xff]
    %v344 = vld [vmem:[%s1 + $0x254] sm:$0xff]
    %v345 = vld [vmem:[%s1 + $0x25c] sm:$0xff]
    %v346 = vld [vmem:[%s1 + $0x264] sm:$0xf]
    %v347 = vld [vmem:[%s1 + $0x268] sm:$0xff]
    %v348 = vld [vmem:[%s1 + $0x270] sm:$0xff]
    %v349 = vld [vmem:[%s1 + $0x278] sm:$0xff]
    %v350 = vld [vmem:[%s1 + $0x280] sm:$0xf]
    %v351 = vld [vmem:[%s1 + $0x284] sm:$0xff]
    %v352 = vld [vmem:[%s1 + $0x28c] sm:$0xff]
    %v353 = vld [vmem:[%s1 + $0x294] sm:$0xff]
    %v354 = vld [vmem:[%s1 + $0x29c] sm:$0xf]
    %v355 = vld [vmem:[%s1 + $0x2a0] sm:$0xff]
    %v356 = vld [vmem:[%s1 + $0x2a8] sm:$0xff]
    %v357 = vld [vmem:[%s1 + $0x2b0] sm:$0xff]
    %v358 = vld [vmem:[%s1 + $0x2b8] sm:$0xf]
    %v359 = vld [vmem:[%s1 + $0x2bc] sm:$0xff]
    %v360 = vld [vmem:[%s1 + $0x2c4] sm:$0xff]
    %v361 = vld [vmem:[%s1 + $0x2cc] sm:$0xff]
    %v362 = vld [vmem:[%s1 + $0x2d4] sm:$0xf]
    %v363 = vld [vmem:[%s1 + $0x2d8] sm:$0xff]
    %v364 = vld [vmem:[%s1 + $0x2e0] sm:$0xff]
    %v365 = vld [vmem:[%s1 + $0x2e8] sm:$0xff]
    %v366 = vld [vmem:[%s1 + $0x2f0] sm:$0xf]
    %v367 = vld [vmem:[%s1 + $0x2f4] sm:$0xff]
    %v368 = vld [vmem:[%s1 + $0x2fc] sm:$0xff]
    %v369 = vld [vmem:[%s1 + $0x304] sm:$0xff]
    %v370 = vld [vmem:[%s1 + $0x30c] sm:$0xf]
    %v371 = vld [vmem:[%s1 + $0x310] sm:$0xff]
    %v372 = vld [vmem:[%s1 + $0x318] sm:$0xff]
    %v373 = vld [vmem:[%s1 + $0x320] sm:$0xff]
    %v374 = vld [vmem:[%s1 + $0x328] sm:$0xf]
    %v375 = vld [vmem:[%s1 + $0x32c] sm:$0xff]
    %v376 = vld [vmem:[%s1 + $0x334] sm:$0xff]
    %v377 = vld [vmem:[%s1 + $0x33c] sm:$0xff]
    %v378 = vld [vmem:[%s1 + $0x344] sm:$0xf]
    %v379 = vld [vmem:[%s1 + $0x348] sm:$0x33]
    %v380 = vld [vmem:[%s1 + $0x350] sm:$0x33]
    %v381 = vld [vmem:[%s1 + $0x358] sm:$0x33]
    %v382 = vld [vmem:[%s1 + $0x360] sm:$0x3]
    %v383 = vld [vmem:[#allocation5] sm:$0x7f]
    %v385 = vperm.slane %v383, 0
    %v386 = vperm.slane %v383, 1
    %v387 = vperm.slane %v383, 2
    %v388 = vperm.slane %v383, 3
    %v389 = vperm.slane %v383, 4
    %v390 = vperm.slane %v383, 5
    %v391 = vperm.slane %v383, 6
    %400 = vst [vmem:[#allocation1] ss:$9 sm:$0xff] %v258
    %v401 = vld [vmem:[#allocation1] sm:$0xff]
    %v402 = vld [vmem:[#allocation1 + $0x9] sm:$0xff]
    %v528 = vunpack.c.l.b16 %v259
    %v529 = vunpack.c.h.b16 %v259
    %v530 = vunpack.c.l.b16 %v260
    %v531 = vunpack.c.h.b16 %v260
    %v532 = vunpack.c.l.b16 %v261
    %v533 = vunpack.c.h.b16 %v261
    %v534 = vunpack.c.l.b16 %v262
    %v535 = vunpack.c.l.b16 %v263
    %v536 = vunpack.c.h.b16 %v263
    %v537 = vunpack.c.l.b16 %v264
    %v538 = vunpack.c.h.b16 %v264
    %v539 = vunpack.c.l.b16 %v265
    %v540 = vunpack.c.h.b16 %v265
    %v541 = vunpack.c.l.b16 %v266
    %v542 = vunpack.c.l.b16 %v267
    %v543 = vunpack.c.h.b16 %v267
    %v544 = vunpack.c.l.b16 %v268
    %v545 = vunpack.c.h.b16 %v268
    %v546 = vunpack.c.l.b16 %v269
    %v547 = vunpack.c.h.b16 %v269
    %v548 = vunpack.c.l.b16 %v270
    %v549 = vunpack.c.l.b16 %v271
    %v550 = vunpack.c.h.b16 %v271
    %v551 = vunpack.c.l.b16 %v272
    %v552 = vunpack.c.h.b16 %v272
    %v553 = vunpack.c.l.b16 %v273
    %v554 = vunpack.c.h.b16 %v273
    %v555 = vunpack.c.l.b16 %v274
    %v556 = vunpack.c.l.b16 %v275
    %v557 = vunpack.c.h.b16 %v275
    %v558 = vunpack.c.l.b16 %v276
    %v559 = vunpack.c.h.b16 %v276
    %v560 = vunpack.c.l.b16 %v277
    %v561 = vunpack.c.h.b16 %v277
    %v562 = vunpack.c.l.b16 %v278
    %v563 = vunpack.c.l.b16 %v279
    %v564 = vunpack.c.h.b16 %v279
    %v565 = vunpack.c.l.b16 %v280
    %v566 = vunpack.c.h.b16 %v280
    %v567 = vunpack.c.l.b16 %v281
    %v568 = vunpack.c.h.b16 %v281
    %v569 = vunpack.c.l.b16 %v282
    %v570 = vunpack.c.l.b16 %v283
    %v571 = vunpack.c.h.b16 %v283
    %v572 = vunpack.c.l.b16 %v284
    %v573 = vunpack.c.h.b16 %v284
    %v574 = vunpack.c.l.b16 %v285
    %v575 = vunpack.c.h.b16 %v285
    %v576 = vunpack.c.l.b16 %v286
    %v577 = vunpack.c.l.b16 %v287
    %v578 = vunpack.c.h.b16 %v287
    %v579 = vunpack.c.l.b16 %v288
    %v580 = vunpack.c.h.b16 %v288
    %v581 = vunpack.c.l.b16 %v289
    %v582 = vunpack.c.h.b16 %v289
    %v583 = vunpack.c.l.b16 %v290
    %v584 = vunpack.c.l.b16 %v291
    %v585 = vunpack.c.h.b16 %v291
    %v586 = vunpack.c.l.b16 %v292
    %v587 = vunpack.c.h.b16 %v292
    %v588 = vunpack.c.l.b16 %v293
    %v589 = vunpack.c.h.b16 %v293
    %v590 = vunpack.c.l.b16 %v294
    %v591 = vunpack.c.l.b16 %v295
    %v592 = vunpack.c.h.b16 %v295
    %v593 = vunpack.c.l.b16 %v296
    %v594 = vunpack.c.h.b16 %v296
    %v595 = vunpack.c.l.b16 %v297
    %v596 = vunpack.c.h.b16 %v297
    %v597 = vunpack.c.l.b16 %v298
    %v598 = vunpack.c.l.b16 %v299
    %v599 = vunpack.c.h.b16 %v299
    %v600 = vunpack.c.l.b16 %v300
    %v601 = vunpack.c.h.b16 %v300
    %v602 = vunpack.c.l.b16 %v301
    %v603 = vunpack.c.h.b16 %v301
    %v604 = vunpack.c.l.b16 %v302
    %v605 = vunpack.c.l.b16 %v303
    %v606 = vunpack.c.h.b16 %v303
    %v607 = vunpack.c.l.b16 %v304
    %v608 = vunpack.c.h.b16 %v304
    %v609 = vunpack.c.l.b16 %v305
    %v610 = vunpack.c.h.b16 %v305
    %v611 = vunpack.c.l.b16 %v306
    %v612 = vunpack.c.l.b16 %v307
    %v613 = vunpack.c.h.b16 %v307
    %v614 = vunpack.c.l.b16 %v308
    %v615 = vunpack.c.h.b16 %v308
    %v616 = vunpack.c.l.b16 %v309
    %v617 = vunpack.c.h.b16 %v309
    %v618 = vunpack.c.l.b16 %v310
    %v619 = vunpack.c.l.b16 %v311
    %v620 = vunpack.c.h.b16 %v311
    %v621 = vunpack.c.l.b16 %v312
    %v622 = vunpack.c.h.b16 %v312
    %v623 = vunpack.c.l.b16 %v313
    %v624 = vunpack.c.h.b16 %v313
    %v625 = vunpack.c.l.b16 %v314
    %v626 = vunpack.c.l.b16 %v315
    %v627 = vunpack.c.h.b16 %v315
    %v628 = vunpack.c.l.b16 %v316
    %v629 = vunpack.c.h.b16 %v316
    %v630 = vunpack.c.l.b16 %v317
    %v631 = vunpack.c.h.b16 %v317
    %v632 = vunpack.c.l.b16 %v318
    %v633 = vunpack.c.l.b16 %v319
    %v634 = vunpack.c.h.b16 %v319
    %v635 = vunpack.c.l.b16 %v320
    %v636 = vunpack.c.h.b16 %v320
    %v637 = vunpack.c.l.b16 %v321
    %v638 = vunpack.c.h.b16 %v321
    %v639 = vunpack.c.l.b16 %v322
    %v640 = vunpack.c.l.b16 %v323
    %v641 = vunpack.c.h.b16 %v323
    %v642 = vunpack.c.l.b16 %v324
    %v643 = vunpack.c.h.b16 %v324
    %v644 = vunpack.c.l.b16 %v325
    %v645 = vunpack.c.h.b16 %v325
    %v646 = vunpack.c.l.b16 %v326
    %v647 = vunpack.c.l.b16 %v327
    %v648 = vunpack.c.h.b16 %v327
    %v649 = vunpack.c.l.b16 %v328
    %v650 = vunpack.c.h.b16 %v328
    %v651 = vunpack.c.l.b16 %v329
    %v652 = vunpack.c.h.b16 %v329
    %v653 = vunpack.c.l.b16 %v330
    %v654 = vunpack.c.l.b16 %v331
    %v655 = vunpack.c.h.b16 %v331
    %v656 = vunpack.c.l.b16 %v332
    %v657 = vunpack.c.h.b16 %v332
    %v658 = vunpack.c.l.b16 %v333
    %v659 = vunpack.c.h.b16 %v333
    %v660 = vunpack.c.l.b16 %v334
    %v661 = vunpack.c.l.b16 %v335
    %v662 = vunpack.c.h.b16 %v335
    %v663 = vunpack.c.l.b16 %v336
    %v664 = vunpack.c.h.b16 %v336
    %v665 = vunpack.c.l.b16 %v337
    %v666 = vunpack.c.h.b16 %v337
    %v667 = vunpack.c.l.b16 %v338
    %v668 = vunpack.c.l.b16 %v339
    %v669 = vunpack.c.h.b16 %v339
    %v670 = vunpack.c.l.b16 %v340
    %v671 = vunpack.c.h.b16 %v340
    %v672 = vunpack.c.l.b16 %v341
    %v673 = vunpack.c.h.b16 %v341
    %v674 = vunpack.c.l.b16 %v342
    %v675 = vunpack.c.l.b16 %v343
    %v676 = vunpack.c.h.b16 %v343
    %v677 = vunpack.c.l.b16 %v344
    %v678 = vunpack.c.h.b16 %v344
    %v679 = vunpack.c.l.b16 %v345
    %v680 = vunpack.c.h.b16 %v345
    %v681 = vunpack.c.l.b16 %v346
    %v682 = vunpack.c.l.b16 %v347
    %v683 = vunpack.c.h.b16 %v347
    %v684 = vunpack.c.l.b16 %v348
    %v685 = vunpack.c.h.b16 %v348
    %v686 = vunpack.c.l.b16 %v349
    %v687 = vunpack.c.h.b16 %v349
    %v688 = vunpack.c.l.b16 %v350
    %v689 = vunpack.c.l.b16 %v351
    %v690 = vunpack.c.h.b16 %v351
    %v691 = vunpack.c.l.b16 %v352
    %v692 = vunpack.c.h.b16 %v352
    %v693 = vunpack.c.l.b16 %v353
    %v694 = vunpack.c.h.b16 %v353
    %v695 = vunpack.c.l.b16 %v354
    %v696 = vunpack.c.l.b16 %v355
    %v697 = vunpack.c.h.b16 %v355
    %v698 = vunpack.c.l.b16 %v356
    %v699 = vunpack.c.h.b16 %v356
    %v700 = vunpack.c.l.b16 %v357
    %v701 = vunpack.c.h.b16 %v357
    %v702 = vunpack.c.l.b16 %v358
    %v703 = vunpack.c.l.b16 %v359
    %v704 = vunpack.c.h.b16 %v359
    %v705 = vunpack.c.l.b16 %v360
    %v706 = vunpack.c.h.b16 %v360
    %v707 = vunpack.c.l.b16 %v361
    %v708 = vunpack.c.h.b16 %v361
    %v709 = vunpack.c.l.b16 %v362
    %v710 = vunpack.c.l.b16 %v363
    %v711 = vunpack.c.h.b16 %v363
    %v712 = vunpack.c.l.b16 %v364
    %v713 = vunpack.c.h.b16 %v364
    %v714 = vunpack.c.l.b16 %v365
    %v715 = vunpack.c.h.b16 %v365
    %v716 = vunpack.c.l.b16 %v366
    %v717 = vunpack.c.l.b16 %v367
    %v718 = vunpack.c.h.b16 %v367
    %v719 = vunpack.c.l.b16 %v368
    %v720 = vunpack.c.h.b16 %v368
    %v721 = vunpack.c.l.b16 %v369
    %v722 = vunpack.c.h.b16 %v369
    %v723 = vunpack.c.l.b16 %v370
    %v724 = vunpack.c.l.b16 %v371
    %v725 = vunpack.c.h.b16 %v371
    %v726 = vunpack.c.l.b16 %v372
    %v727 = vunpack.c.h.b16 %v372
    %v728 = vunpack.c.l.b16 %v373
    %v729 = vunpack.c.h.b16 %v373
    %v730 = vunpack.c.l.b16 %v374
    %v731 = vunpack.c.l.b16 %v375
    %v732 = vunpack.c.h.b16 %v375
    %v733 = vunpack.c.l.b16 %v376
    %v734 = vunpack.c.h.b16 %v376
    %v735 = vunpack.c.l.b16 %v377
    %v736 = vunpack.c.h.b16 %v377
    %v737 = vunpack.c.l.b16 %v378
    %v738 = vunpack.c.l.b16 %v379
    %v739 = vunpack.c.h.b16 %v379
    %v740 = vunpack.c.l.b16 %v380
    %v741 = vunpack.c.h.b16 %v380
    %v742 = vunpack.c.l.b16 %v381
    %v743 = vunpack.c.h.b16 %v381
    %v744 = vunpack.c.l.b16 %v382
    %v745 = vpack.c.b16 %v535, %v528
    %v746 = vpack.c.b16 %v536, %v529
    %v747 = vpack.c.b16 %v537, %v530
    %v748 = vpack.c.b16 %v538, %v531
    %v749 = vpack.c.b16 %v539, %v532
    %v750 = vpack.c.b16 %v540, %v533
    %v751 = vpack.c.b16 %v541, %v534
    %v752 = vpack.c.b16 %v549, %v542
    %v753 = vpack.c.b16 %v550, %v543
    %v754 = vpack.c.b16 %v551, %v544
    %v755 = vpack.c.b16 %v552, %v545
    %v756 = vpack.c.b16 %v553, %v546
    %v757 = vpack.c.b16 %v554, %v547
    %v758 = vpack.c.b16 %v555, %v548
    %v759 = vpack.c.b16 %v563, %v556
    %v760 = vpack.c.b16 %v564, %v557
    %v761 = vpack.c.b16 %v565, %v558
    %v762 = vpack.c.b16 %v566, %v559
    %v763 = vpack.c.b16 %v567, %v560
    %v764 = vpack.c.b16 %v568, %v561
    %v765 = vpack.c.b16 %v569, %v562
    %v766 = vpack.c.b16 %v577, %v570
    %v767 = vpack.c.b16 %v578, %v571
    %v768 = vpack.c.b16 %v579, %v572
    %v769 = vpack.c.b16 %v580, %v573
    %v770 = vpack.c.b16 %v581, %v574
    %v771 = vpack.c.b16 %v582, %v575
    %v772 = vpack.c.b16 %v583, %v576
    %v773 = vpack.c.b16 %v591, %v584
    %v774 = vpack.c.b16 %v592, %v585
    %v775 = vpack.c.b16 %v593, %v586
    %v776 = vpack.c.b16 %v594, %v587
    %v777 = vpack.c.b16 %v595, %v588
    %v778 = vpack.c.b16 %v596, %v589
    %v779 = vpack.c.b16 %v597, %v590
    %v780 = vpack.c.b16 %v605, %v598
    %v781 = vpack.c.b16 %v606, %v599
    %v782 = vpack.c.b16 %v607, %v600
    %v783 = vpack.c.b16 %v608, %v601
    %v784 = vpack.c.b16 %v609, %v602
    %v785 = vpack.c.b16 %v610, %v603
    %v786 = vpack.c.b16 %v611, %v604
    %v787 = vpack.c.b16 %v619, %v612
    %v788 = vpack.c.b16 %v620, %v613
    %v789 = vpack.c.b16 %v621, %v614
    %v790 = vpack.c.b16 %v622, %v615
    %v791 = vpack.c.b16 %v623, %v616
    %v792 = vpack.c.b16 %v624, %v617
    %v793 = vpack.c.b16 %v625, %v618
    %v794 = vpack.c.b16 %v633, %v626
    %v795 = vpack.c.b16 %v634, %v627
    %v796 = vpack.c.b16 %v635, %v628
    %v797 = vpack.c.b16 %v636, %v629
    %v798 = vpack.c.b16 %v637, %v630
    %v799 = vpack.c.b16 %v638, %v631
    %v800 = vpack.c.b16 %v639, %v632
    %v801 = vpack.c.b16 %v647, %v640
    %v802 = vpack.c.b16 %v648, %v641
    %v803 = vpack.c.b16 %v649, %v642
    %v804 = vpack.c.b16 %v650, %v643
    %v805 = vpack.c.b16 %v651, %v644
    %v806 = vpack.c.b16 %v652, %v645
    %v807 = vpack.c.b16 %v653, %v646
    %v808 = vpack.c.b16 %v661, %v654
    %v809 = vpack.c.b16 %v662, %v655
    %v810 = vpack.c.b16 %v663, %v656
    %v811 = vpack.c.b16 %v664, %v657
    %v812 = vpack.c.b16 %v665, %v658
    %v813 = vpack.c.b16 %v666, %v659
    %v814 = vpack.c.b16 %v667, %v660
    %v815 = vpack.c.b16 %v675, %v668
    %v816 = vpack.c.b16 %v676, %v669
    %v817 = vpack.c.b16 %v677, %v670
    %v818 = vpack.c.b16 %v678, %v671
    %v819 = vpack.c.b16 %v679, %v672
    %v820 = vpack.c.b16 %v680, %v673
    %v821 = vpack.c.b16 %v681, %v674
    %v822 = vpack.c.b16 %v689, %v682
    %v823 = vpack.c.b16 %v690, %v683
    %v824 = vpack.c.b16 %v691, %v684
    %v825 = vpack.c.b16 %v692, %v685
    %v826 = vpack.c.b16 %v693, %v686
    %v827 = vpack.c.b16 %v694, %v687
    %v828 = vpack.c.b16 %v695, %v688
    %v829 = vpack.c.b16 %v703, %v696
    %v830 = vpack.c.b16 %v704, %v697
    %v831 = vpack.c.b16 %v705, %v698
    %v832 = vpack.c.b16 %v706, %v699
    %v833 = vpack.c.b16 %v707, %v700
    %v834 = vpack.c.b16 %v708, %v701
    %v835 = vpack.c.b16 %v709, %v702
    %v836 = vpack.c.b16 %v717, %v710
    %v837 = vpack.c.b16 %v718, %v711
    %v838 = vpack.c.b16 %v719, %v712
    %v839 = vpack.c.b16 %v720, %v713
    %v840 = vpack.c.b16 %v721, %v714
    %v841 = vpack.c.b16 %v722, %v715
    %v842 = vpack.c.b16 %v723, %v716
    %v843 = vpack.c.b16 %v731, %v724
    %v844 = vpack.c.b16 %v732, %v725
    %v845 = vpack.c.b16 %v733, %v726
    %v846 = vpack.c.b16 %v734, %v727
    %v847 = vpack.c.b16 %v735, %v728
    %v848 = vpack.c.b16 %v736, %v729
    %v849 = vpack.c.b16 %v737, %v730
    %v850 = vpack.c.b16 %v738, %v738
    %v851 = vpack.c.b16 %v739, %v739
    %v852 = vpack.c.b16 %v740, %v740
    %v853 = vpack.c.b16 %v741, %v741
    %v854 = vpack.c.b16 %v742, %v742
    %v855 = vpack.c.b16 %v743, %v743
    %v856 = vpack.c.b16 %v744, %v744
    %vm962 = vcmask 941056
    %v963 = vsel %vm962, %v402, 0
    %vm965 = vcmask 1040384
    %vm966 = vcmask 1041408
    %v967 = vsel %vm965, 4294967295, 65535
    %v968 = vsel %vm966, %v967, 0
    %v970 = vand.u32 %v850, %v968
    %v973 = vand.u32 %v851, %v968
    %v976 = vand.u32 %v852, %v968
    %v979 = vand.u32 %v853, %v968
    %v982 = vand.u32 %v854, %v968
    %v985 = vand.u32 %v855, %v968
    %v988 = vand.u32 %v856, %v968
    %990 = vmatpush.bf16.msra.mxu0 %v794
    %991 = vmatpush.bf16.msra.mxu0 %v787
    %992 = vmatpush.bf16.msra.mxu0 %v780
    %993 = vmatpush.bf16.msra.mxu0 %v773
    %994 = vmatpush.bf16.msra.mxu0 %v766
    %995 = vmatpush.bf16.msra.mxu0 %v759
    %996 = vmatpush.bf16.msra.mxu0 %v752
    %997 = vmatpush.bf16.msra.mxu0 %v745
    %998 = vmatmul.bf16.gmra.mxu0 %v401
    %v999 = vpop.f32.mrf.mxu0
    %v1000 = vadd.f32 %v385, %v999
    %v1001 = vpop.f32.mrf.mxu0
    %1002 = vdwg.mxu0
    %1003 = vmatpush.bf16.msra.mxu0 %v970
    %1004 = vmatpush.bf16.msra.mxu0 %v843
    %1005 = vmatpush.bf16.msra.mxu0 %v836
    %1006 = vmatpush.bf16.msra.mxu0 %v829
    %1007 = vmatpush.bf16.msra.mxu0 %v822
    %1008 = vmatpush.bf16.msra.mxu0 %v815
    %1009 = vmatpush.bf16.msra.mxu0 %v808
    %1010 = vmatpush.bf16.msra.mxu0 %v801
    %1011 = vmatmul.bf16.gmra.mxu0 %v963
    %v1012 = vpop.f32.mrf.mxu0
    %v1013 = vadd.f32 %v1000, %v1012
    %v1014 = vpop.f32.mrf.mxu0
    %1015 = vdwg.mxu0
    %1016 = vmatpush.bf16.msra.mxu0 %v795
    %1017 = vmatpush.bf16.msra.mxu0 %v788
    %1018 = vmatpush.bf16.msra.mxu0 %v781
    %1019 = vmatpush.bf16.msra.mxu0 %v774
    %1020 = vmatpush.bf16.msra.mxu0 %v767
    %1021 = vmatpush.bf16.msra.mxu0 %v760
    %1022 = vmatpush.bf16.msra.mxu0 %v753
    %1023 = vmatpush.bf16.msra.mxu0 %v746
    %1024 = vmatmul.bf16.gmra.mxu0 %v401
    %v1025 = vpop.f32.mrf.mxu0
    %v1026 = vadd.f32 %v386, %v1025
    %v1027 = vpop.f32.mrf.mxu0
    %1028 = vdwg.mxu0
    %1029 = vmatpush.bf16.msra.mxu0 %v973
    %1030 = vmatpush.bf16.msra.mxu0 %v844
    %1031 = vmatpush.bf16.msra.mxu0 %v837
    %1032 = vmatpush.bf16.msra.mxu0 %v830
    %1033 = vmatpush.bf16.msra.mxu0 %v823
    %1034 = vmatpush.bf16.msra.mxu0 %v816
    %1035 = vmatpush.bf16.msra.mxu0 %v809
    %1036 = vmatpush.bf16.msra.mxu0 %v802
    %1037 = vmatmul.bf16.gmra.mxu0 %v963
    %v1038 = vpop.f32.mrf.mxu0
    %v1039 = vadd.f32 %v1026, %v1038
    %v1040 = vpop.f32.mrf.mxu0
    %1041 = vdwg.mxu0
    %1042 = vmatpush.bf16.msra.mxu0 %v796
    %1043 = vmatpush.bf16.msra.mxu0 %v789
    %1044 = vmatpush.bf16.msra.mxu0 %v782
    %1045 = vmatpush.bf16.msra.mxu0 %v775
    %1046 = vmatpush.bf16.msra.mxu0 %v768
    %1047 = vmatpush.bf16.msra.mxu0 %v761
    %1048 = vmatpush.bf16.msra.mxu0 %v754
    %1049 = vmatpush.bf16.msra.mxu0 %v747
    %1050 = vmatmul.bf16.gmra.mxu0 %v401
    %v1051 = vpop.f32.mrf.mxu0
    %v1052 = vadd.f32 %v387, %v1051
    %v1053 = vpop.f32.mrf.mxu0
    %1054 = vdwg.mxu0
    %1055 = vmatpush.bf16.msra.mxu0 %v976
    %1056 = vmatpush.bf16.msra.mxu0 %v845
    %1057 = vmatpush.bf16.msra.mxu0 %v838
    %1058 = vmatpush.bf16.msra.mxu0 %v831
    %1059 = vmatpush.bf16.msra.mxu0 %v824
    %1060 = vmatpush.bf16.msra.mxu0 %v817
    %1061 = vmatpush.bf16.msra.mxu0 %v810
    %1062 = vmatpush.bf16.msra.mxu0 %v803
    %1063 = vmatmul.bf16.gmra.mxu0 %v963
    %v1064 = vpop.f32.mrf.mxu0
    %v1065 = vadd.f32 %v1052, %v1064
    %v1066 = vpop.f32.mrf.mxu0
    %1067 = vdwg.mxu0
    %1068 = vmatpush.bf16.msra.mxu0 %v797
    %1069 = vmatpush.bf16.msra.mxu0 %v790
    %1070 = vmatpush.bf16.msra.mxu0 %v783
    %1071 = vmatpush.bf16.msra.mxu0 %v776
    %1072 = vmatpush.bf16.msra.mxu0 %v769
    %1073 = vmatpush.bf16.msra.mxu0 %v762
    %1074 = vmatpush.bf16.msra.mxu0 %v755
    %1075 = vmatpush.bf16.msra.mxu0 %v748
    %1076 = vmatmul.bf16.gmra.mxu0 %v401
    %v1077 = vpop.f32.mrf.mxu0
    %v1078 = vadd.f32 %v388, %v1077
    %v1079 = vpop.f32.mrf.mxu0
    %1080 = vdwg.mxu0
    %1081 = vmatpush.bf16.msra.mxu0 %v979
    %1082 = vmatpush.bf16.msra.mxu0 %v846
    %1083 = vmatpush.bf16.msra.mxu0 %v839
    %1084 = vmatpush.bf16.msra.mxu0 %v832
    %1085 = vmatpush.bf16.msra.mxu0 %v825
    %1086 = vmatpush.bf16.msra.mxu0 %v818
    %1087 = vmatpush.bf16.msra.mxu0 %v811
    %1088 = vmatpush.bf16.msra.mxu0 %v804
    %1089 = vmatmul.bf16.gmra.mxu0 %v963
    %v1090 = vpop.f32.mrf.mxu0
    %v1091 = vadd.f32 %v1078, %v1090
    %v1092 = vpop.f32.mrf.mxu0
    %1093 = vdwg.mxu0
    %1094 = vmatpush.bf16.msra.mxu0 %v798
    %1095 = vmatpush.bf16.msra.mxu0 %v791
    %1096 = vmatpush.bf16.msra.mxu0 %v784
    %1097 = vmatpush.bf16.msra.mxu0 %v777
    %1098 = vmatpush.bf16.msra.mxu0 %v770
    %1099 = vmatpush.bf16.msra.mxu0 %v763
    %1100 = vmatpush.bf16.msra.mxu0 %v756
    %1101 = vmatpush.bf16.msra.mxu0 %v749
    %1102 = vmatmul.bf16.gmra.mxu0 %v401
    %v1103 = vpop.f32.mrf.mxu0
    %v1104 = vadd.f32 %v389, %v1103
    %v1105 = vpop.f32.mrf.mxu0
    %1106 = vdwg.mxu0
    %1107 = vmatpush.bf16.msra.mxu0 %v982
    %1108 = vmatpush.bf16.msra.mxu0 %v847
    %1109 = vmatpush.bf16.msra.mxu0 %v840
    %1110 = vmatpush.bf16.msra.mxu0 %v833
    %1111 = vmatpush.bf16.msra.mxu0 %v826
    %1112 = vmatpush.bf16.msra.mxu0 %v819
    %1113 = vmatpush.bf16.msra.mxu0 %v812
    %1114 = vmatpush.bf16.msra.mxu0 %v805
    %1115 = vmatmul.bf16.gmra.mxu0 %v963
    %v1116 = vpop.f32.mrf.mxu0
    %v1117 = vadd.f32 %v1104, %v1116
    %v1118 = vpop.f32.mrf.mxu0
    %1119 = vdwg.mxu0
    %1120 = vmatpush.bf16.msra.mxu0 %v799
    %1121 = vmatpush.bf16.msra.mxu0 %v792
    %1122 = vmatpush.bf16.msra.mxu0 %v785
    %1123 = vmatpush.bf16.msra.mxu0 %v778
    %1124 = vmatpush.bf16.msra.mxu0 %v771
    %1125 = vmatpush.bf16.msra.mxu0 %v764
    %1126 = vmatpush.bf16.msra.mxu0 %v757
    %1127 = vmatpush.bf16.msra.mxu0 %v750
    %1128 = vmatmul.bf16.gmra.mxu0 %v401
    %v1129 = vpop.f32.mrf.mxu0
    %v1130 = vadd.f32 %v390, %v1129
    %v1131 = vpop.f32.mrf.mxu0
    %1132 = vdwg.mxu0
    %1133 = vmatpush.bf16.msra.mxu0 %v985
    %1134 = vmatpush.bf16.msra.mxu0 %v848
    %1135 = vmatpush.bf16.msra.mxu0 %v841
    %1136 = vmatpush.bf16.msra.mxu0 %v834
    %1137 = vmatpush.bf16.msra.mxu0 %v827
    %1138 = vmatpush.bf16.msra.mxu0 %v820
    %1139 = vmatpush.bf16.msra.mxu0 %v813
    %1140 = vmatpush.bf16.msra.mxu0 %v806
    %1141 = vmatmul.bf16.gmra.mxu0 %v963
    %v1142 = vpop.f32.mrf.mxu0
    %v1143 = vadd.f32 %v1130, %v1142
    %v1144 = vpop.f32.mrf.mxu0
    %1145 = vdwg.mxu0
    %1146 = vmatpush.bf16.msra.mxu0 %v800
    %1147 = vmatpush.bf16.msra.mxu0 %v793
    %1148 = vmatpush.bf16.msra.mxu0 %v786
    %1149 = vmatpush.bf16.msra.mxu0 %v779
    %1150 = vmatpush.bf16.msra.mxu0 %v772
    %1151 = vmatpush.bf16.msra.mxu0 %v765
    %1152 = vmatpush.bf16.msra.mxu0 %v758
    %1153 = vmatpush.bf16.msra.mxu0 %v751
    %1154 = vmatmul.bf16.gmra.mxu0 %v401
    %v1155 = vpop.f32.mrf.mxu0
    %v1156 = vadd.f32 %v391, %v1155
    %v1157 = vpop.f32.mrf.mxu0
    %1158 = vdwg.mxu0
    %1159 = vmatpush.bf16.msra.mxu0 %v988
    %1160 = vmatpush.bf16.msra.mxu0 %v849
    %1161 = vmatpush.bf16.msra.mxu0 %v842
    %1162 = vmatpush.bf16.msra.mxu0 %v835
    %1163 = vmatpush.bf16.msra.mxu0 %v828
    %1164 = vmatpush.bf16.msra.mxu0 %v821
    %1165 = vmatpush.bf16.msra.mxu0 %v814
    %1166 = vmatpush.bf16.msra.mxu0 %v807
    %1167 = vmatmul.bf16.gmra.mxu0 %v963
    %v1168 = vpop.f32.mrf.mxu0
    %v1169 = vadd.f32 %v1156, %v1168
    %v1170 = vpop.f32.mrf.mxu0
    %1171 = vdwg.mxu0
    %v1172 = vld [vmem:[#allocation7] sm:$0x7f]
    %v1173 = vld [vmem:[#allocation8] sm:$0x7f]
    %v1174 = vld [vmem:[%s5] sm:$0xf]
    %v1175 = vld [vmem:[%s5 + $0x4] sm:$0xf]
    %v1176 = vld [vmem:[%s5 + $0x8] sm:$0xf]
    %v1177 = vld [vmem:[%s5 + $0xc] sm:$0xf]
    %v1178 = vld [vmem:[%s5 + $0x10] sm:$0xf]
    %v1179 = vld [vmem:[%s5 + $0x14] sm:$0xf]
    %v1180 = vld [vmem:[%s5 + $0x18] sm:$0xf]
    %v1181 = vld [vmem:[%s5 + $0x1c] sm:$0xf]
    %v1182 = vld [vmem:[%s5 + $0x20] sm:$0xf]
    %v1183 = vld [vmem:[%s5 + $0x24] sm:$0xf]
    %v1184 = vld [vmem:[%s5 + $0x28] sm:$0xf]
    %v1185 = vld [vmem:[%s5 + $0x2c] sm:$0xf]
    %v1186 = vld [vmem:[%s5 + $0x30] sm:$0xf]
    %v1187 = vld [vmem:[%s5 + $0x34] sm:$0xf]
    %v1188 = vld [vmem:[%s5 + $0x38] sm:$0xf]
    %v1189 = vld [vmem:[%s5 + $0x3c] sm:$0xf]
    %v1190 = vld [vmem:[%s5 + $0x40] sm:$0xf]
    %v1191 = vld [vmem:[%s5 + $0x44] sm:$0xf]
    %v1192 = vld [vmem:[%s5 + $0x48] sm:$0xf]
    %v1193 = vld [vmem:[%s5 + $0x4c] sm:$0xf]
    %v1194 = vld [vmem:[%s5 + $0x50] sm:$0xf]
    %v1195 = vld [vmem:[%s5 + $0x54] sm:$0xf]
    %v1196 = vld [vmem:[%s5 + $0x58] sm:$0xf]
    %v1197 = vld [vmem:[%s5 + $0x5c] sm:$0xf]
    %v1198 = vld [vmem:[%s5 + $0x60] sm:$0xf]
    %v1199 = vld [vmem:[%s5 + $0x64] sm:$0xf]
    %v1200 = vld [vmem:[%s5 + $0x68] sm:$0xf]
    %v1201 = vld [vmem:[%s5 + $0x6c] sm:$0xf]
    %v1202 = vld [vmem:[%s5 + $0x70] sm:$0xf]
    %v1203 = vld [vmem:[%s5 + $0x74] sm:$0xf]
    %v1204 = vld [vmem:[%s5 + $0x78] sm:$0xf]
    %v1205 = vld [vmem:[%s5 + $0x7c] sm:$0xf]
    %v1206 = vld [vmem:[%s5 + $0x80] sm:$0xf]
    %v1207 = vld [vmem:[%s5 + $0x84] sm:$0xf]
    %v1208 = vld [vmem:[%s5 + $0x88] sm:$0xf]
    %v1209 = vld [vmem:[%s5 + $0x8c] sm:$0xf]
    %v1210 = vld [vmem:[%s5 + $0x90] sm:$0xf]
    %v1211 = vld [vmem:[%s5 + $0x94] sm:$0xf]
    %v1212 = vld [vmem:[%s5 + $0x98] sm:$0xf]
    %v1213 = vld [vmem:[%s5 + $0x9c] sm:$0xf]
    %v1214 = vld [vmem:[%s5 + $0xa0] sm:$0xf]
    %v1215 = vld [vmem:[%s5 + $0xa4] sm:$0xf]
    %v1216 = vld [vmem:[%s5 + $0xa8] sm:$0xf]
    %v1217 = vld [vmem:[%s5 + $0xac] sm:$0xf]
    %v1218 = vld [vmem:[%s5 + $0xb0] sm:$0xf]
    %v1219 = vld [vmem:[%s5 + $0xb4] sm:$0xf]
    %v1220 = vld [vmem:[%s5 + $0xb8] sm:$0xf]
    %v1221 = vld [vmem:[%s5 + $0xbc] sm:$0xf]
    %v1222 = vld [vmem:[%s5 + $0xc0] sm:$0xf]
    %v1223 = vld [vmem:[%s5 + $0xc4] sm:$0xf]
    %v1224 = vld [vmem:[%s5 + $0xc8] sm:$0xf]
    %v1225 = vld [vmem:[%s5 + $0xcc] sm:$0xf]
    %v1226 = vld [vmem:[%s5 + $0xd0] sm:$0xf]
    %v1227 = vld [vmem:[%s5 + $0xd4] sm:$0xf]
    %v1228 = vld [vmem:[%s5 + $0xd8] sm:$0xf]
    %v1229 = vld [vmem:[%s5 + $0xdc] sm:$0xf]
    %v1230 = vld [vmem:[%s5 + $0xe0] sm:$0xf]
    %v1231 = vld [vmem:[%s5 + $0xe4] sm:$0xf]
    %v1232 = vld [vmem:[%s5 + $0xe8] sm:$0xf]
    %v1233 = vld [vmem:[%s5 + $0xec] sm:$0xf]
    %v1234 = vld [vmem:[%s5 + $0xf0] sm:$0xf]
    %v1235 = vld [vmem:[%s5 + $0xf4] sm:$0xf]
    %v1236 = vld [vmem:[%s5 + $0xf8] sm:$0xf]
    %v1237 = vld [vmem:[%s5 + $0xfc] sm:$0xf]
    %v1238 = vld [vmem:[%s5 + $0x100] sm:$0xf]
    %v1239 = vld [vmem:[%s5 + $0x104] sm:$0xf]
    %v1240 = vld [vmem:[%s5 + $0x108] sm:$0xf]
    %v1241 = vld [vmem:[%s5 + $0x10c] sm:$0xf]
    %v1242 = vld [vmem:[%s5 + $0x110] sm:$0xf]
    %v1243 = vld [vmem:[%s5 + $0x114] sm:$0xf]
    %v1244 = vld [vmem:[%s5 + $0x118] sm:$0xf]
    %v1245 = vld [vmem:[%s5 + $0x11c] sm:$0xf]
    %v1246 = vld [vmem:[%s5 + $0x120] sm:$0xf]
    %v1247 = vld [vmem:[%s5 + $0x124] sm:$0xf]
    %v1248 = vld [vmem:[%s5 + $0x128] sm:$0xf]
    %v1249 = vld [vmem:[%s5 + $0x12c] sm:$0xf]
    %v1250 = vld [vmem:[%s5 + $0x130] sm:$0xf]
    %v1251 = vld [vmem:[%s5 + $0x134] sm:$0xf]
    %v1252 = vld [vmem:[%s5 + $0x138] sm:$0xf]
    %v1253 = vld [vmem:[%s5 + $0x13c] sm:$0xf]
    %v1254 = vld [vmem:[%s5 + $0x140] sm:$0xf]
    %v1255 = vld [vmem:[%s5 + $0x144] sm:$0xf]
    %v1256 = vld [vmem:[%s5 + $0x148] sm:$0xf]
    %v1257 = vld [vmem:[%s5 + $0x14c] sm:$0xf]
    %v1258 = vld [vmem:[%s5 + $0x150] sm:$0xf]
    %v1259 = vld [vmem:[%s5 + $0x154] sm:$0xf]
    %v1260 = vld [vmem:[%s5 + $0x158] sm:$0xf]
    %v1261 = vld [vmem:[%s5 + $0x15c] sm:$0xf]
    %v1262 = vld [vmem:[%s5 + $0x160] sm:$0xf]
    %v1263 = vld [vmem:[%s5 + $0x164] sm:$0xf]
    %v1264 = vld [vmem:[%s5 + $0x168] sm:$0xf]
    %v1265 = vld [vmem:[%s5 + $0x16c] sm:$0xf]
    %v1266 = vld [vmem:[%s5 + $0x170] sm:$0xf]
    %v1267 = vld [vmem:[%s5 + $0x174] sm:$0xf]
    %v1268 = vld [vmem:[%s5 + $0x178] sm:$0xf]
    %v1269 = vld [vmem:[%s5 + $0x17c] sm:$0xf]
    %v1270 = vld [vmem:[%s5 + $0x180] sm:$0xf]
    %v1271 = vld [vmem:[%s5 + $0x184] sm:$0xf]
    %v1272 = vld [vmem:[#allocation10] sm:$0xff]
    %v1273 = vld [vmem:[#allocation10 + $0x8] sm:$0xff]
    %v1274 = vld [vmem:[#allocation10 + $0x10] sm:$0xff]
    %v1275 = vld [vmem:[#allocation10 + $0x18] sm:$0xf]
    %v1276 = vld [vmem:[#allocation10 + $0x1c] sm:$0xff]
    %v1277 = vld [vmem:[#allocation10 + $0x24] sm:$0xff]
    %v1278 = vld [vmem:[#allocation10 + $0x2c] sm:$0xff]
    %v1279 = vld [vmem:[#allocation10 + $0x34] sm:$0xf]
    %v1280 = vsel %vm966, %v1013, 0.0
    %v1281 = vrot.slane %v1280, 4
    %v1282 = vadd.f32 %v1280, %v1281
    %v1283 = vrot.slane %v1282, 2
    %v1284 = vadd.f32 %v1282, %v1283
    %v1285 = vrot.slane %v1284, 1
    %v1286 = vadd.f32 %v1284, %v1285
    %v1287 = vsel %vm966, %v1039, 0.0
    %v1288 = vrot.slane %v1287, 4
    %v1289 = vadd.f32 %v1287, %v1288
    %v1290 = vrot.slane %v1289, 2
    %v1291 = vadd.f32 %v1289, %v1290
    %v1292 = vrot.slane %v1291, 1
    %v1293 = vadd.f32 %v1291, %v1292
    %v1294 = vsel %vm966, %v1065, 0.0
    %v1295 = vrot.slane %v1294, 4
    %v1296 = vadd.f32 %v1294, %v1295
    %v1297 = vrot.slane %v1296, 2
    %v1298 = vadd.f32 %v1296, %v1297
    %v1299 = vrot.slane %v1298, 1
    %v1300 = vadd.f32 %v1298, %v1299
    %v1301 = vsel %vm966, %v1091, 0.0
    %v1302 = vrot.slane %v1301, 4
    %v1303 = vadd.f32 %v1301, %v1302
    %v1304 = vrot.slane %v1303, 2
    %v1305 = vadd.f32 %v1303, %v1304
    %v1306 = vrot.slane %v1305, 1
    %v1307 = vadd.f32 %v1305, %v1306
    %v1308 = vsel %vm966, %v1117, 0.0
    %v1309 = vrot.slane %v1308, 4
    %v1310 = vadd.f32 %v1308, %v1309
    %v1311 = vrot.slane %v1310, 2
    %v1312 = vadd.f32 %v1310, %v1311
    %v1313 = vrot.slane %v1312, 1
    %v1314 = vadd.f32 %v1312, %v1313
    %v1315 = vsel %vm966, %v1143, 0.0
    %v1316 = vrot.slane %v1315, 4
    %v1317 = vadd.f32 %v1315, %v1316
    %v1318 = vrot.slane %v1317, 2
    %v1319 = vadd.f32 %v1317, %v1318
    %v1320 = vrot.slane %v1319, 1
    %v1321 = vadd.f32 %v1319, %v1320
    %vm1322 = vcmask 123904
    %v1323 = vsel %vm1322, %v1169, 0.0
    %v1324 = vrot.slane %v1323, 4
    %v1325 = vadd.f32 %v1323, %v1324
    %v1326 = vrot.slane %v1325, 2
    %v1327 = vadd.f32 %v1325, %v1326
    %v1328 = vrot.slane %v1327, 1
    %v1329 = vadd.f32 %v1327, %v1328
    %v1330 = vpack.c.bf16 %v1286, %v1286
    %v1331 = vpack.c.bf16 %v1293, %v1293
    %v1332 = vpack.c.bf16 %v1300, %v1300
    %v1333 = vpack.c.bf16 %v1307, %v1307
    %v1334 = vpack.c.bf16 %v1314, %v1314
    %v1335 = vpack.c.bf16 %v1321, %v1321
    %v1336 = vpack.c.bf16 %v1329, %v1329
    %v1435 = vunpack.c.l.b16 %v1174
    %v1436 = vunpack.c.l.b16 %v1175
    %v1437 = vunpack.c.l.b16 %v1176
    %v1438 = vunpack.c.l.b16 %v1177
    %v1439 = vunpack.c.l.b16 %v1178
    %v1440 = vunpack.c.l.b16 %v1179
    %v1441 = vunpack.c.l.b16 %v1180
    %v1442 = vunpack.c.l.b16 %v1181
    %v1443 = vunpack.c.l.b16 %v1182
    %v1444 = vunpack.c.l.b16 %v1183
    %v1445 = vunpack.c.l.b16 %v1184
    %v1446 = vunpack.c.l.b16 %v1185
    %v1447 = vunpack.c.l.b16 %v1186
    %v1448 = vunpack.c.l.b16 %v1187
    %v1449 = vunpack.c.l.b16 %v1188
    %v1450 = vunpack.c.l.b16 %v1189
    %v1451 = vunpack.c.l.b16 %v1190
    %v1452 = vunpack.c.l.b16 %v1191
    %v1453 = vunpack.c.l.b16 %v1192
    %v1454 = vunpack.c.l.b16 %v1193
    %v1455 = vunpack.c.l.b16 %v1194
    %v1456 = vunpack.c.l.b16 %v1195
    %v1457 = vunpack.c.l.b16 %v1196
    %v1458 = vunpack.c.l.b16 %v1197
    %v1459 = vunpack.c.l.b16 %v1198
    %v1460 = vunpack.c.l.b16 %v1199
    %v1461 = vunpack.c.l.b16 %v1200
    %v1462 = vunpack.c.l.b16 %v1201
    %v1463 = vunpack.c.l.b16 %v1202
    %v1464 = vunpack.c.l.b16 %v1203
    %v1465 = vunpack.c.l.b16 %v1204
    %v1466 = vunpack.c.l.b16 %v1205
    %v1467 = vunpack.c.l.b16 %v1206
    %v1468 = vunpack.c.l.b16 %v1207
    %v1469 = vunpack.c.l.b16 %v1208
    %v1470 = vunpack.c.l.b16 %v1209
    %v1471 = vunpack.c.l.b16 %v1210
    %v1472 = vunpack.c.l.b16 %v1211
    %v1473 = vunpack.c.l.b16 %v1212
    %v1474 = vunpack.c.l.b16 %v1213
    %v1475 = vunpack.c.l.b16 %v1214
    %v1476 = vunpack.c.l.b16 %v1215
    %v1477 = vunpack.c.l.b16 %v1216
    %v1478 = vunpack.c.l.b16 %v1217
    %v1479 = vunpack.c.l.b16 %v1218
    %v1480 = vunpack.c.l.b16 %v1219
    %v1481 = vunpack.c.l.b16 %v1220
    %v1482 = vunpack.c.l.b16 %v1221
    %v1483 = vunpack.c.l.b16 %v1222
    %v1484 = vunpack.c.l.b16 %v1223
    %v1485 = vunpack.c.l.b16 %v1224
    %v1486 = vunpack.c.l.b16 %v1225
    %v1487 = vunpack.c.l.b16 %v1226
    %v1488 = vunpack.c.l.b16 %v1227
    %v1489 = vunpack.c.l.b16 %v1228
    %v1490 = vunpack.c.l.b16 %v1229
    %v1491 = vunpack.c.l.b16 %v1230
    %v1492 = vunpack.c.l.b16 %v1231
    %v1493 = vunpack.c.l.b16 %v1232
    %v1494 = vunpack.c.l.b16 %v1233
    %v1495 = vunpack.c.l.b16 %v1234
    %v1496 = vunpack.c.l.b16 %v1235
    %v1497 = vunpack.c.l.b16 %v1236
    %v1498 = vunpack.c.l.b16 %v1237
    %v1499 = vunpack.c.l.b16 %v1238
    %v1500 = vunpack.c.l.b16 %v1239
    %v1501 = vunpack.c.l.b16 %v1240
    %v1502 = vunpack.c.l.b16 %v1241
    %v1503 = vunpack.c.l.b16 %v1242
    %v1504 = vunpack.c.l.b16 %v1243
    %v1505 = vunpack.c.l.b16 %v1244
    %v1506 = vunpack.c.l.b16 %v1245
    %v1507 = vunpack.c.l.b16 %v1246
    %v1508 = vunpack.c.l.b16 %v1247
    %v1509 = vunpack.c.l.b16 %v1248
    %v1510 = vunpack.c.l.b16 %v1249
    %v1511 = vunpack.c.l.b16 %v1250
    %v1512 = vunpack.c.l.b16 %v1251
    %v1513 = vunpack.c.l.b16 %v1252
    %v1514 = vunpack.c.l.b16 %v1253
    %v1515 = vunpack.c.l.b16 %v1254
    %v1516 = vunpack.c.l.b16 %v1255
    %v1517 = vunpack.c.l.b16 %v1256
    %v1518 = vunpack.c.l.b16 %v1257
    %v1519 = vunpack.c.l.b16 %v1258
    %v1520 = vunpack.c.l.b16 %v1259
    %v1521 = vunpack.c.l.b16 %v1260
    %v1522 = vunpack.c.l.b16 %v1261
    %v1523 = vunpack.c.l.b16 %v1262
    %v1524 = vunpack.c.l.b16 %v1263
    %v1525 = vunpack.c.l.b16 %v1264
    %v1526 = vunpack.c.l.b16 %v1265
    %v1527 = vunpack.c.l.b16 %v1266
    %v1528 = vunpack.c.l.b16 %v1267
    %v1529 = vunpack.c.l.b16 %v1268
    %v1530 = vunpack.c.l.b16 %v1269
    %v1531 = vunpack.c.l.b16 %v1270
    %v1532 = vunpack.c.l.b16 %v1271
    %v1533 = vpack.c.b16 %v1436, %v1435
    %v1534 = vpack.c.b16 %v1438, %v1437
    %v1535 = vpack.c.b16 %v1440, %v1439
    %v1536 = vpack.c.b16 %v1442, %v1441
    %v1537 = vpack.c.b16 %v1444, %v1443
    %v1538 = vpack.c.b16 %v1446, %v1445
    %v1539 = vpack.c.b16 %v1448, %v1447
    %v1540 = vpack.c.b16 %v1450, %v1449
    %v1541 = vpack.c.b16 %v1452, %v1451
    %v1542 = vpack.c.b16 %v1454, %v1453
    %v1543 = vpack.c.b16 %v1456, %v1455
    %v1544 = vpack.c.b16 %v1458, %v1457
    %v1545 = vpack.c.b16 %v1460, %v1459
    %v1546 = vpack.c.b16 %v1462, %v1461
    %v1547 = vpack.c.b16 %v1464, %v1463
    %v1548 = vpack.c.b16 %v1466, %v1465
    %v1549 = vpack.c.b16 %v1468, %v1467
    %v1550 = vpack.c.b16 %v1470, %v1469
    %v1551 = vpack.c.b16 %v1472, %v1471
    %v1552 = vpack.c.b16 %v1474, %v1473
    %v1553 = vpack.c.b16 %v1476, %v1475
    %v1554 = vpack.c.b16 %v1478, %v1477
    %v1555 = vpack.c.b16 %v1480, %v1479
    %v1556 = vpack.c.b16 %v1482, %v1481
    %v1557 = vpack.c.b16 %v1484, %v1483
    %v1558 = vpack.c.b16 %v1486, %v1485
    %v1559 = vpack.c.b16 %v1488, %v1487
    %v1560 = vpack.c.b16 %v1490, %v1489
    %v1561 = vpack.c.b16 %v1492, %v1491
    %v1562 = vpack.c.b16 %v1494, %v1493
    %v1563 = vpack.c.b16 %v1496, %v1495
    %v1564 = vpack.c.b16 %v1498, %v1497
    %v1565 = vpack.c.b16 %v1500, %v1499
    %v1566 = vpack.c.b16 %v1502, %v1501
    %v1567 = vpack.c.b16 %v1504, %v1503
    %v1568 = vpack.c.b16 %v1506, %v1505
    %v1569 = vpack.c.b16 %v1508, %v1507
    %v1570 = vpack.c.b16 %v1510, %v1509
    %v1571 = vpack.c.b16 %v1512, %v1511
    %v1572 = vpack.c.b16 %v1514, %v1513
    %v1573 = vpack.c.b16 %v1516, %v1515
    %v1574 = vpack.c.b16 %v1518, %v1517
    %v1575 = vpack.c.b16 %v1520, %v1519
    %v1576 = vpack.c.b16 %v1522, %v1521
    %v1577 = vpack.c.b16 %v1524, %v1523
    %v1578 = vpack.c.b16 %v1526, %v1525
    %v1579 = vpack.c.b16 %v1528, %v1527
    %v1580 = vpack.c.b16 %v1530, %v1529
    %v1581 = vpack.c.b16 %v1532, %v1531
    %vm1631 = vcmask 130048
    %v1633 = vsel %vm1631, %v1336, 0
    %1635 = vmatpush.bf16.msra.mxu0 %v1540
    %1636 = vmatpush.bf16.msra.mxu0 %v1539
    %1637 = vmatpush.bf16.msra.mxu0 %v1538
    %1638 = vmatpush.bf16.msra.mxu0 %v1537
    %1639 = vmatpush.bf16.msra.mxu0 %v1536
    %1640 = vmatpush.bf16.msra.mxu0 %v1535
    %1641 = vmatpush.bf16.msra.mxu0 %v1534
    %1642 = vmatpush.bf16.msra.mxu0 %v1533
    %1643 = vmatmul.bf16.gmra.mxu0 %v1330
    %v1644 = vpop.f32.mrf.mxu0
    %v1645 = vadd.f32 0.0, %v1644
    %v1646 = vpop.f32.mrf.mxu0
    %1647 = vdwg.mxu0
    %1648 = vmatpush.bf16.msra.mxu0 %v1548
    %1649 = vmatpush.bf16.msra.mxu0 %v1547
    %1650 = vmatpush.bf16.msra.mxu0 %v1546
    %1651 = vmatpush.bf16.msra.mxu0 %v1545
    %1652 = vmatpush.bf16.msra.mxu0 %v1544
    %1653 = vmatpush.bf16.msra.mxu0 %v1543
    %1654 = vmatpush.bf16.msra.mxu0 %v1542
    %1655 = vmatpush.bf16.msra.mxu0 %v1541
    %1656 = vmatmul.bf16.gmra.mxu0 %v1331
    %v1657 = vpop.f32.mrf.mxu0
    %v1658 = vadd.f32 %v1645, %v1657
    %v1659 = vpop.f32.mrf.mxu0
    %1660 = vdwg.mxu0
    %1661 = vmatpush.bf16.msra.mxu0 %v1556
    %1662 = vmatpush.bf16.msra.mxu0 %v1555
    %1663 = vmatpush.bf16.msra.mxu0 %v1554
    %1664 = vmatpush.bf16.msra.mxu0 %v1553
    %1665 = vmatpush.bf16.msra.mxu0 %v1552
    %1666 = vmatpush.bf16.msra.mxu0 %v1551
    %1667 = vmatpush.bf16.msra.mxu0 %v1550
    %1668 = vmatpush.bf16.msra.mxu0 %v1549
    %1669 = vmatmul.bf16.gmra.mxu0 %v1332
    %v1670 = vpop.f32.mrf.mxu0
    %v1671 = vadd.f32 %v1658, %v1670
    %v1672 = vpop.f32.mrf.mxu0
    %1673 = vdwg.mxu0
    %1674 = vmatpush.bf16.msra.mxu0 %v1564
    %1675 = vmatpush.bf16.msra.mxu0 %v1563
    %1676 = vmatpush.bf16.msra.mxu0 %v1562
    %1677 = vmatpush.bf16.msra.mxu0 %v1561
    %1678 = vmatpush.bf16.msra.mxu0 %v1560
    %1679 = vmatpush.bf16.msra.mxu0 %v1559
    %1680 = vmatpush.bf16.msra.mxu0 %v1558
    %1681 = vmatpush.bf16.msra.mxu0 %v1557
    %1682 = vmatmul.bf16.gmra.mxu0 %v1333
    %v1683 = vpop.f32.mrf.mxu0
    %v1684 = vadd.f32 %v1671, %v1683
    %v1685 = vpop.f32.mrf.mxu0
    %1686 = vdwg.mxu0
    %1687 = vmatpush.bf16.msra.mxu0 %v1572
    %1688 = vmatpush.bf16.msra.mxu0 %v1571
    %1689 = vmatpush.bf16.msra.mxu0 %v1570
    %1690 = vmatpush.bf16.msra.mxu0 %v1569
    %1691 = vmatpush.bf16.msra.mxu0 %v1568
    %1692 = vmatpush.bf16.msra.mxu0 %v1567
    %1693 = vmatpush.bf16.msra.mxu0 %v1566
    %1694 = vmatpush.bf16.msra.mxu0 %v1565
    %1695 = vmatmul.bf16.gmra.mxu0 %v1334
    %v1696 = vpop.f32.mrf.mxu0
    %v1697 = vadd.f32 %v1684, %v1696
    %v1698 = vpop.f32.mrf.mxu0
    %1699 = vdwg.mxu0
    %1700 = vmatpush.bf16.msra.mxu0 %v1580
    %1701 = vmatpush.bf16.msra.mxu0 %v1579
    %1702 = vmatpush.bf16.msra.mxu0 %v1578
    %1703 = vmatpush.bf16.msra.mxu0 %v1577
    %1704 = vmatpush.bf16.msra.mxu0 %v1576
    %1705 = vmatpush.bf16.msra.mxu0 %v1575
    %1706 = vmatpush.bf16.msra.mxu0 %v1574
    %1707 = vmatpush.bf16.msra.mxu0 %v1573
    %1708 = vmatmul.bf16.gmra.mxu0 %v1335
    %v1709 = vpop.f32.mrf.mxu0
    %v1710 = vadd.f32 %v1697, %v1709
    %v1711 = vpop.f32.mrf.mxu0
    %1712 = vdwg.mxu0
    %1713 = vmatpush.bf16.msra.mxu0 0
    %1714 = vmatpush.bf16.msra.mxu0 0
    %1715 = vmatpush.bf16.msra.mxu0 0
    %1716 = vmatpush.bf16.msra.mxu0 0
    %1717 = vmatpush.bf16.msra.mxu0 0
    %1718 = vmatpush.bf16.msra.mxu0 0
    %1719 = vmatpush.bf16.msra.mxu0 0
    %1720 = vmatpush.bf16.msra.mxu0 %v1581
    %1721 = vmatmul.bf16.gmra.mxu0 %v1633
    %v1722 = vpop.f32.mrf.mxu0
    %v1723 = vadd.f32 %v1710, %v1722
    %v1724 = vpop.f32.mrf.mxu0
    %1725 = vdwg.mxu0
    %v1726 = vmul.f32 %v1723, 0.010204081
    %v1727 = vpack.c.bf16 %v1726, %v1726
    %v1736 = vunpack.c.l.b16 %v1272
    %v1737 = vunpack.c.h.b16 %v1272
    %v1738 = vunpack.c.l.b16 %v1273
    %v1739 = vunpack.c.h.b16 %v1273
    %v1740 = vunpack.c.l.b16 %v1274
    %v1741 = vunpack.c.h.b16 %v1274
    %v1742 = vunpack.c.l.b16 %v1275
    %v1743 = vunpack.c.l.b16 %v1276
    %v1744 = vunpack.c.h.b16 %v1276
    %v1745 = vunpack.c.l.b16 %v1277
    %v1746 = vunpack.c.h.b16 %v1277
    %v1747 = vunpack.c.l.b16 %v1278
    %v1748 = vunpack.c.h.b16 %v1278
    %v1749 = vunpack.c.l.b16 %v1279
    %v1750 = vpack.c.b16 %v1743, %v1736
    %v1751 = vpack.c.b16 %v1744, %v1737
    %v1752 = vpack.c.b16 %v1745, %v1738
    %v1753 = vpack.c.b16 %v1746, %v1739
    %v1754 = vpack.c.b16 %v1747, %v1740
    %v1755 = vpack.c.b16 %v1748, %v1741
    %v1756 = vpack.c.b16 %v1749, %v1742
    %v1765 = vsel %vm1631, %v1727, 0
    %1767 = vmatpush.bf16.msra.mxu0 0
    %1768 = vmatpush.bf16.msra.mxu0 0
    %1769 = vmatpush.bf16.msra.mxu0 0
    %1770 = vmatpush.bf16.msra.mxu0 0
    %1771 = vmatpush.bf16.msra.mxu0 0
    %1772 = vmatpush.bf16.msra.mxu0 0
    %1773 = vmatpush.bf16.msra.mxu0 0
    %1774 = vmatpush.bf16.msra.mxu0 %v1750
    %1775 = vmatmul.bf16.gmra.mxu0 %v1765
    %v1776 = vpop.f32.mrf.mxu0
    %v1777 = vadd.f32 0.0, %v1776
    %v1778 = vpop.f32.mrf.mxu0
    %1779 = vdwg.mxu0
    %1780 = vmatpush.bf16.msra.mxu0 0
    %1781 = vmatpush.bf16.msra.mxu0 0
    %1782 = vmatpush.bf16.msra.mxu0 0
    %1783 = vmatpush.bf16.msra.mxu0 0
    %1784 = vmatpush.bf16.msra.mxu0 0
    %1785 = vmatpush.bf16.msra.mxu0 0
    %1786 = vmatpush.bf16.msra.mxu0 0
    %1787 = vmatpush.bf16.msra.mxu0 %v1751
    %1788 = vmatmul.bf16.gmra.mxu0 %v1765
    %v1789 = vpop.f32.mrf.mxu0
    %v1790 = vadd.f32 0.0, %v1789
    %v1791 = vpop.f32.mrf.mxu0
    %1792 = vdwg.mxu0
    %1793 = vmatpush.bf16.msra.mxu0 0
    %1794 = vmatpush.bf16.msra.mxu0 0
    %1795 = vmatpush.bf16.msra.mxu0 0
    %1796 = vmatpush.bf16.msra.mxu0 0
    %1797 = vmatpush.bf16.msra.mxu0 0
    %1798 = vmatpush.bf16.msra.mxu0 0
    %1799 = vmatpush.bf16.msra.mxu0 0
    %1800 = vmatpush.bf16.msra.mxu0 %v1752
    %1801 = vmatmul.bf16.gmra.mxu0 %v1765
    %v1802 = vpop.f32.mrf.mxu0
    %v1803 = vadd.f32 0.0, %v1802
    %v1804 = vpop.f32.mrf.mxu0
    %1805 = vdwg.mxu0
    %1806 = vmatpush.bf16.msra.mxu0 0
    %1807 = vmatpush.bf16.msra.mxu0 0
    %1808 = vmatpush.bf16.msra.mxu0 0
    %1809 = vmatpush.bf16.msra.mxu0 0
    %1810 = vmatpush.bf16.msra.mxu0 0
    %1811 = vmatpush.bf16.msra.mxu0 0
    %1812 = vmatpush.bf16.msra.mxu0 0
    %1813 = vmatpush.bf16.msra.mxu0 %v1753
    %1814 = vmatmul.bf16.gmra.mxu0 %v1765
    %v1815 = vpop.f32.mrf.mxu0
    %v1816 = vadd.f32 0.0, %v1815
    %v1817 = vpop.f32.mrf.mxu0
    %1818 = vdwg.mxu0
    %1819 = vmatpush.bf16.msra.mxu0 0
    %1820 = vmatpush.bf16.msra.mxu0 0
    %1821 = vmatpush.bf16.msra.mxu0 0
    %1822 = vmatpush.bf16.msra.mxu0 0
    %1823 = vmatpush.bf16.msra.mxu0 0
    %1824 = vmatpush.bf16.msra.mxu0 0
    %1825 = vmatpush.bf16.msra.mxu0 0
    %1826 = vmatpush.bf16.msra.mxu0 %v1754
    %1827 = vmatmul.bf16.gmra.mxu0 %v1765
    %v1828 = vpop.f32.mrf.mxu0
    %v1829 = vadd.f32 0.0, %v1828
    %v1830 = vpop.f32.mrf.mxu0
    %1831 = vdwg.mxu0
    %1832 = vmatpush.bf16.msra.mxu0 0
    %1833 = vmatpush.bf16.msra.mxu0 0
    %1834 = vmatpush.bf16.msra.mxu0 0
    %1835 = vmatpush.bf16.msra.mxu0 0
    %1836 = vmatpush.bf16.msra.mxu0 0
    %1837 = vmatpush.bf16.msra.mxu0 0
    %1838 = vmatpush.bf16.msra.mxu0 0
    %1839 = vmatpush.bf16.msra.mxu0 %v1755
    %1840 = vmatmul.bf16.gmra.mxu0 %v1765
    %v1841 = vpop.f32.mrf.mxu0
    %v1842 = vadd.f32 0.0, %v1841
    %v1843 = vpop.f32.mrf.mxu0
    %1844 = vdwg.mxu0
    %1845 = vmatpush.bf16.msra.mxu0 0
    %1846 = vmatpush.bf16.msra.mxu0 0
    %1847 = vmatpush.bf16.msra.mxu0 0
    %1848 = vmatpush.bf16.msra.mxu0 0
    %1849 = vmatpush.bf16.msra.mxu0 0
    %1850 = vmatpush.bf16.msra.mxu0 0
    %1851 = vmatpush.bf16.msra.mxu0 0
    %1852 = vmatpush.bf16.msra.mxu0 %v1756
    %1853 = vmatmul.bf16.gmra.mxu0 %v1765
    %v1854 = vpop.f32.mrf.mxu0
    %v1855 = vadd.f32 0.0, %v1854
    %v1856 = vpop.f32.mrf.mxu0
    %1857 = vdwg.mxu0
    %v1858 = vperm.slane %v1777, 0
    %v1859 = vperm.slane %v1790, 0
    %v1860 = vperm.slane %v1803, 0
    %v1861 = vperm.slane %v1816, 0
    %v1862 = vperm.slane %v1829, 0
    %v1863 = vperm.slane %v1842, 0
    %v1864 = vperm.slane %v1855, 0
    %v1865 = vsub.f32 %v1013, %v1858
    %v1866 = vsub.f32 %v1039, %v1859
    %v1867 = vsub.f32 %v1065, %v1860
    %v1868 = vsub.f32 %v1091, %v1861
    %v1869 = vsub.f32 %v1117, %v1862
    %v1870 = vsub.f32 %v1143, %v1863
    %v1871 = vsub.f32 %v1169, %v1864
    %v1872 = vmul.f32 %v1865, %v1865
    %v1873 = vmul.f32 %v1866, %v1866
    %v1874 = vmul.f32 %v1867, %v1867
    %v1875 = vmul.f32 %v1868, %v1868
    %v1876 = vmul.f32 %v1869, %v1869
    %v1877 = vmul.f32 %v1870, %v1870
    %v1878 = vmul.f32 %v1871, %v1871
    %v1879 = vsel %vm966, %v1872, 0.0
    %v1880 = vrot.slane %v1879, 4
    %v1881 = vadd.f32 %v1879, %v1880
    %v1882 = vrot.slane %v1881, 2
    %v1883 = vadd.f32 %v1881, %v1882
    %v1884 = vrot.slane %v1883, 1
    %v1885 = vadd.f32 %v1883, %v1884
    %v1886 = vsel %vm966, %v1873, 0.0
    %v1887 = vrot.slane %v1886, 4
    %v1888 = vadd.f32 %v1886, %v1887
    %v1889 = vrot.slane %v1888, 2
    %v1890 = vadd.f32 %v1888, %v1889
    %v1891 = vrot.slane %v1890, 1
    %v1892 = vadd.f32 %v1890, %v1891
    %v1893 = vsel %vm966, %v1874, 0.0
    %v1894 = vrot.slane %v1893, 4
    %v1895 = vadd.f32 %v1893, %v1894
    %v1896 = vrot.slane %v1895, 2
    %v1897 = vadd.f32 %v1895, %v1896
    %v1898 = vrot.slane %v1897, 1
    %v1899 = vadd.f32 %v1897, %v1898
    %v1900 = vsel %vm966, %v1875, 0.0
    %v1901 = vrot.slane %v1900, 4
    %v1902 = vadd.f32 %v1900, %v1901
    %v1903 = vrot.slane %v1902, 2
    %v1904 = vadd.f32 %v1902, %v1903
    %v1905 = vrot.slane %v1904, 1
    %v1906 = vadd.f32 %v1904, %v1905
    %v1907 = vsel %vm966, %v1876, 0.0
    %v1908 = vrot.slane %v1907, 4
    %v1909 = vadd.f32 %v1907, %v1908
    %v1910 = vrot.slane %v1909, 2
    %v1911 = vadd.f32 %v1909, %v1910
    %v1912 = vrot.slane %v1911, 1
    %v1913 = vadd.f32 %v1911, %v1912
    %v1914 = vsel %vm966, %v1877, 0.0
    %v1915 = vrot.slane %v1914, 4
    %v1916 = vadd.f32 %v1914, %v1915
    %v1917 = vrot.slane %v1916, 2
    %v1918 = vadd.f32 %v1916, %v1917
    %v1919 = vrot.slane %v1918, 1
    %v1920 = vadd.f32 %v1918, %v1919
    %v1921 = vsel %vm1322, %v1878, 0.0
    %v1922 = vrot.slane %v1921, 4
    %v1923 = vadd.f32 %v1921, %v1922
    %v1924 = vrot.slane %v1923, 2
    %v1925 = vadd.f32 %v1923, %v1924
    %v1926 = vrot.slane %v1925, 1
    %v1927 = vadd.f32 %v1925, %v1926
    %v1928 = vpack.c.bf16 %v1885, %v1885
    %v1929 = vpack.c.bf16 %v1892, %v1892
    %v1930 = vpack.c.bf16 %v1899, %v1899
    %v1931 = vpack.c.bf16 %v1906, %v1906
    %v1932 = vpack.c.bf16 %v1913, %v1913
    %v1933 = vpack.c.bf16 %v1920, %v1920
    %v1934 = vpack.c.bf16 %v1927, %v1927
    %v1936 = vsel %vm1631, %v1934, 0
    %1938 = vmatpush.bf16.msra.mxu0 %v1540
    %1939 = vmatpush.bf16.msra.mxu0 %v1539
    %1940 = vmatpush.bf16.msra.mxu0 %v1538
    %1941 = vmatpush.bf16.msra.mxu0 %v1537
    %1942 = vmatpush.bf16.msra.mxu0 %v1536
    %1943 = vmatpush.bf16.msra.mxu0 %v1535
    %1944 = vmatpush.bf16.msra.mxu0 %v1534
    %1945 = vmatpush.bf16.msra.mxu0 %v1533
    %1946 = vmatmul.bf16.gmra.mxu0 %v1928
    %v1947 = vpop.f32.mrf.mxu0
    %v1948 = vadd.f32 0.0, %v1947
    %v1949 = vpop.f32.mrf.mxu0
    %1950 = vdwg.mxu0
    %1951 = vmatpush.bf16.msra.mxu0 %v1548
    %1952 = vmatpush.bf16.msra.mxu0 %v1547
    %1953 = vmatpush.bf16.msra.mxu0 %v1546
    %1954 = vmatpush.bf16.msra.mxu0 %v1545
    %1955 = vmatpush.bf16.msra.mxu0 %v1544
    %1956 = vmatpush.bf16.msra.mxu0 %v1543
    %1957 = vmatpush.bf16.msra.mxu0 %v1542
    %1958 = vmatpush.bf16.msra.mxu0 %v1541
    %1959 = vmatmul.bf16.gmra.mxu0 %v1929
    %v1960 = vpop.f32.mrf.mxu0
    %v1961 = vadd.f32 %v1948, %v1960
    %v1962 = vpop.f32.mrf.mxu0
    %1963 = vdwg.mxu0
    %1964 = vmatpush.bf16.msra.mxu0 %v1556
    %1965 = vmatpush.bf16.msra.mxu0 %v1555
    %1966 = vmatpush.bf16.msra.mxu0 %v1554
    %1967 = vmatpush.bf16.msra.mxu0 %v1553
    %1968 = vmatpush.bf16.msra.mxu0 %v1552
    %1969 = vmatpush.bf16.msra.mxu0 %v1551
    %1970 = vmatpush.bf16.msra.mxu0 %v1550
    %1971 = vmatpush.bf16.msra.mxu0 %v1549
    %1972 = vmatmul.bf16.gmra.mxu0 %v1930
    %v1973 = vpop.f32.mrf.mxu0
    %v1974 = vadd.f32 %v1961, %v1973
    %v1975 = vpop.f32.mrf.mxu0
    %1976 = vdwg.mxu0
    %1977 = vmatpush.bf16.msra.mxu0 %v1564
    %1978 = vmatpush.bf16.msra.mxu0 %v1563
    %1979 = vmatpush.bf16.msra.mxu0 %v1562
    %1980 = vmatpush.bf16.msra.mxu0 %v1561
    %1981 = vmatpush.bf16.msra.mxu0 %v1560
    %1982 = vmatpush.bf16.msra.mxu0 %v1559
    %1983 = vmatpush.bf16.msra.mxu0 %v1558
    %1984 = vmatpush.bf16.msra.mxu0 %v1557
    %1985 = vmatmul.bf16.gmra.mxu0 %v1931
    %v1986 = vpop.f32.mrf.mxu0
    %v1987 = vadd.f32 %v1974, %v1986
    %v1988 = vpop.f32.mrf.mxu0
    %1989 = vdwg.mxu0
    %1990 = vmatpush.bf16.msra.mxu0 %v1572
    %1991 = vmatpush.bf16.msra.mxu0 %v1571
    %1992 = vmatpush.bf16.msra.mxu0 %v1570
    %1993 = vmatpush.bf16.msra.mxu0 %v1569
    %1994 = vmatpush.bf16.msra.mxu0 %v1568
    %1995 = vmatpush.bf16.msra.mxu0 %v1567
    %1996 = vmatpush.bf16.msra.mxu0 %v1566
    %1997 = vmatpush.bf16.msra.mxu0 %v1565
    %1998 = vmatmul.bf16.gmra.mxu0 %v1932
    %v1999 = vpop.f32.mrf.mxu0
    %v2000 = vadd.f32 %v1987, %v1999
    %v2001 = vpop.f32.mrf.mxu0
    %2002 = vdwg.mxu0
    %2003 = vmatpush.bf16.msra.mxu0 %v1580
    %2004 = vmatpush.bf16.msra.mxu0 %v1579
    %2005 = vmatpush.bf16.msra.mxu0 %v1578
    %2006 = vmatpush.bf16.msra.mxu0 %v1577
    %2007 = vmatpush.bf16.msra.mxu0 %v1576
    %2008 = vmatpush.bf16.msra.mxu0 %v1575
    %2009 = vmatpush.bf16.msra.mxu0 %v1574
    %2010 = vmatpush.bf16.msra.mxu0 %v1573
    %2011 = vmatmul.bf16.gmra.mxu0 %v1933
    %v2012 = vpop.f32.mrf.mxu0
    %v2013 = vadd.f32 %v2000, %v2012
    %v2014 = vpop.f32.mrf.mxu0
    %2015 = vdwg.mxu0
    %2016 = vmatpush.bf16.msra.mxu0 0
    %2017 = vmatpush.bf16.msra.mxu0 0
    %2018 = vmatpush.bf16.msra.mxu0 0
    %2019 = vmatpush.bf16.msra.mxu0 0
    %2020 = vmatpush.bf16.msra.mxu0 0
    %2021 = vmatpush.bf16.msra.mxu0 0
    %2022 = vmatpush.bf16.msra.mxu0 0
    %2023 = vmatpush.bf16.msra.mxu0 %v1581
    %2024 = vmatmul.bf16.gmra.mxu0 %v1936
    %v2025 = vpop.f32.mrf.mxu0
    %v2026 = vadd.f32 %v2013, %v2025
    %v2027 = vpop.f32.mrf.mxu0
    %2028 = vdwg.mxu0
    %v2029 = vmul.f32 %v2026, 0.010204081
    %v2030 = vpack.c.bf16 %v2029, %v2029
    %v2032 = vsel %vm1631, %v2030, 0
    %2034 = vmatpush.bf16.msra.mxu0 0
    %2035 = vmatpush.bf16.msra.mxu0 0
    %2036 = vmatpush.bf16.msra.mxu0 0
    %2037 = vmatpush.bf16.msra.mxu0 0
    %2038 = vmatpush.bf16.msra.mxu0 0
    %2039 = vmatpush.bf16.msra.mxu0 0
    %2040 = vmatpush.bf16.msra.mxu0 0
    %2041 = vmatpush.bf16.msra.mxu0 %v1750
    %2042 = vmatmul.bf16.gmra.mxu0 %v2032
    %v2043 = vpop.f32.mrf.mxu0
    %v2044 = vadd.f32 1e-05, %v2043
    %v2045 = vpop.f32.mrf.mxu0
    %2046 = vdwg.mxu0
    %2047 = vmatpush.bf16.msra.mxu0 0
    %2048 = vmatpush.bf16.msra.mxu0 0
    %2049 = vmatpush.bf16.msra.mxu0 0
    %2050 = vmatpush.bf16.msra.mxu0 0
    %2051 = vmatpush.bf16.msra.mxu0 0
    %2052 = vmatpush.bf16.msra.mxu0 0
    %2053 = vmatpush.bf16.msra.mxu0 0
    %2054 = vmatpush.bf16.msra.mxu0 %v1751
    %2055 = vmatmul.bf16.gmra.mxu0 %v2032
    %v2056 = vpop.f32.mrf.mxu0
    %v2057 = vadd.f32 1e-05, %v2056
    %v2058 = vpop.f32.mrf.mxu0
    %2059 = vdwg.mxu0
    %2060 = vmatpush.bf16.msra.mxu0 0
    %2061 = vmatpush.bf16.msra.mxu0 0
    %2062 = vmatpush.bf16.msra.mxu0 0
    %2063 = vmatpush.bf16.msra.mxu0 0
    %2064 = vmatpush.bf16.msra.mxu0 0
    %2065 = vmatpush.bf16.msra.mxu0 0
    %2066 = vmatpush.bf16.msra.mxu0 0
    %2067 = vmatpush.bf16.msra.mxu0 %v1752
    %2068 = vmatmul.bf16.gmra.mxu0 %v2032
    %v2069 = vpop.f32.mrf.mxu0
    %v2070 = vadd.f32 1e-05, %v2069
    %v2071 = vpop.f32.mrf.mxu0
    %2072 = vdwg.mxu0
    %2073 = vmatpush.bf16.msra.mxu0 0
    %2074 = vmatpush.bf16.msra.mxu0 0
    %2075 = vmatpush.bf16.msra.mxu0 0
    %2076 = vmatpush.bf16.msra.mxu0 0
    %2077 = vmatpush.bf16.msra.mxu0 0
    %2078 = vmatpush.bf16.msra.mxu0 0
    %2079 = vmatpush.bf16.msra.mxu0 0
    %2080 = vmatpush.bf16.msra.mxu0 %v1753
    %2081 = vmatmul.bf16.gmra.mxu0 %v2032
    %v2082 = vpop.f32.mrf.mxu0
    %v2083 = vadd.f32 1e-05, %v2082
    %v2084 = vpop.f32.mrf.mxu0
    %2085 = vdwg.mxu0
    %2086 = vmatpush.bf16.msra.mxu0 0
    %2087 = vmatpush.bf16.msra.mxu0 0
    %2088 = vmatpush.bf16.msra.mxu0 0
    %2089 = vmatpush.bf16.msra.mxu0 0
    %2090 = vmatpush.bf16.msra.mxu0 0
    %2091 = vmatpush.bf16.msra.mxu0 0
    %2092 = vmatpush.bf16.msra.mxu0 0
    %2093 = vmatpush.bf16.msra.mxu0 %v1754
    %2094 = vmatmul.bf16.gmra.mxu0 %v2032
    %v2095 = vpop.f32.mrf.mxu0
    %v2096 = vadd.f32 1e-05, %v2095
    %v2097 = vpop.f32.mrf.mxu0
    %2098 = vdwg.mxu0
    %2099 = vmatpush.bf16.msra.mxu0 0
    %2100 = vmatpush.bf16.msra.mxu0 0
    %2101 = vmatpush.bf16.msra.mxu0 0
    %2102 = vmatpush.bf16.msra.mxu0 0
    %2103 = vmatpush.bf16.msra.mxu0 0
    %2104 = vmatpush.bf16.msra.mxu0 0
    %2105 = vmatpush.bf16.msra.mxu0 0
    %2106 = vmatpush.bf16.msra.mxu0 %v1755
    %2107 = vmatmul.bf16.gmra.mxu0 %v2032
    %v2108 = vpop.f32.mrf.mxu0
    %v2109 = vadd.f32 1e-05, %v2108
    %v2110 = vpop.f32.mrf.mxu0
    %2111 = vdwg.mxu0
    %2112 = vmatpush.bf16.msra.mxu0 0
    %2113 = vmatpush.bf16.msra.mxu0 0
    %2114 = vmatpush.bf16.msra.mxu0 0
    %2115 = vmatpush.bf16.msra.mxu0 0
    %2116 = vmatpush.bf16.msra.mxu0 0
    %2117 = vmatpush.bf16.msra.mxu0 0
    %2118 = vmatpush.bf16.msra.mxu0 0
    %2119 = vmatpush.bf16.msra.mxu0 %v1756
    %2120 = vmatmul.bf16.gmra.mxu0 %v2032
    %v2121 = vpop.f32.mrf.mxu0
    %v2122 = vadd.f32 1e-05, %v2121
    %v2123 = vpop.f32.mrf.mxu0
    %2124 = vdwg.mxu0
    %v2125 = vrsqrt.pop %v2044
    %v2126 = vmul.f32 %v2125, %v2044
    %v2127 = vmul.f32 %v2126, %v2125
    %v2128 = vmul.f32 0.5, %v2127
    %v2129 = vsub.f32 1.5, %v2128
    %v2130 = vmul.f32 %v2125, %v2129
    %vm2131 = vweird.f32 %v2044
    %vm2132 = vweird.f32 %v2125
    %vm2133 = vmor %vm2131, %vm2132
    %v2134 = vsel %vm2133, %v2125, %v2130
    %v2135 = vrsqrt.pop %v2057
    %v2136 = vmul.f32 %v2135, %v2057
    %v2137 = vmul.f32 %v2136, %v2135
    %v2138 = vmul.f32 0.5, %v2137
    %v2139 = vsub.f32 1.5, %v2138
    %v2140 = vmul.f32 %v2135, %v2139
    %vm2141 = vweird.f32 %v2057
    %vm2142 = vweird.f32 %v2135
    %vm2143 = vmor %vm2141, %vm2142
    %v2144 = vsel %vm2143, %v2135, %v2140
    %v2145 = vrsqrt.pop %v2070
    %v2146 = vmul.f32 %v2145, %v2070
    %v2147 = vmul.f32 %v2146, %v2145
    %v2148 = vmul.f32 0.5, %v2147
    %v2149 = vsub.f32 1.5, %v2148
    %v2150 = vmul.f32 %v2145, %v2149
    %vm2151 = vweird.f32 %v2070
    %vm2152 = vweird.f32 %v2145
    %vm2153 = vmor %vm2151, %vm2152
    %v2154 = vsel %vm2153, %v2145, %v2150
    %v2155 = vrsqrt.pop %v2083
    %v2156 = vmul.f32 %v2155, %v2083
    %v2157 = vmul.f32 %v2156, %v2155
    %v2158 = vmul.f32 0.5, %v2157
    %v2159 = vsub.f32 1.5, %v2158
    %v2160 = vmul.f32 %v2155, %v2159
    %vm2161 = vweird.f32 %v2083
    %vm2162 = vweird.f32 %v2155
    %vm2163 = vmor %vm2161, %vm2162
    %v2164 = vsel %vm2163, %v2155, %v2160
    %v2165 = vrsqrt.pop %v2096
    %v2166 = vmul.f32 %v2165, %v2096
    %v2167 = vmul.f32 %v2166, %v2165
    %v2168 = vmul.f32 0.5, %v2167
    %v2169 = vsub.f32 1.5, %v2168
    %v2170 = vmul.f32 %v2165, %v2169
    %vm2171 = vweird.f32 %v2096
    %vm2172 = vweird.f32 %v2165
    %vm2173 = vmor %vm2171, %vm2172
    %v2174 = vsel %vm2173, %v2165, %v2170
    %v2175 = vrsqrt.pop %v2109
    %v2176 = vmul.f32 %v2175, %v2109
    %v2177 = vmul.f32 %v2176, %v2175
    %v2178 = vmul.f32 0.5, %v2177
    %v2179 = vsub.f32 1.5, %v2178
    %v2180 = vmul.f32 %v2175, %v2179
    %vm2181 = vweird.f32 %v2109
    %vm2182 = vweird.f32 %v2175
    %vm2183 = vmor %vm2181, %vm2182
    %v2184 = vsel %vm2183, %v2175, %v2180
    %v2185 = vrsqrt.pop %v2122
    %v2186 = vmul.f32 %v2185, %v2122
    %v2187 = vmul.f32 %v2186, %v2185
    %v2188 = vmul.f32 0.5, %v2187
    %v2189 = vsub.f32 1.5, %v2188
    %v2190 = vmul.f32 %v2185, %v2189
    %vm2191 = vweird.f32 %v2122
    %vm2192 = vweird.f32 %v2185
    %vm2193 = vmor %vm2191, %vm2192
    %v2194 = vsel %vm2193, %v2185, %v2190
    %v2202 = vrot.slane %v2144, 7
    %v2203 = vrot.slane %v2154, 6
    %v2204 = vrot.slane %v2164, 5
    %v2205 = vrot.slane %v2174, 4
    %v2206 = vrot.slane %v2184, 3
    %v2207 = vrot.slane %v2194, 2
    %v2208 = vsel %vm965, %v2134, %v2202
    %vm2209 = vcmask 1042434
    %v2210 = vsel %vm2209, %v2203, %v2204
    %v2211 = vsel %vm966, %v2208, %v2210
    %vm2212 = vcmask 1044484
    %v2213 = vsel %vm2212, %v2205, %v2206
    %vm2214 = vcmask 1045508
    %v2215 = vsel %vm2214, %v2213, %v2207
    %vm2216 = vcmask 1043456
    %v2217 = vsel %vm2216, %v2211, %v2215
    %v2219 = vmul.f32 %v1172, %v2217
    %v2221 = vperm.slane %v2219, 0
    %v2222 = vperm.slane %v2219, 1
    %v2223 = vperm.slane %v2219, 2
    %v2224 = vperm.slane %v2219, 3
    %v2225 = vperm.slane %v2219, 4
    %v2226 = vperm.slane %v2219, 5
    %v2227 = vperm.slane %v2219, 6
    %v2235 = vmul.f32 %v1865, %v2221
    %v2236 = vmul.f32 %v1866, %v2222
    %v2237 = vmul.f32 %v1867, %v2223
    %v2238 = vmul.f32 %v1868, %v2224
    %v2239 = vmul.f32 %v1869, %v2225
    %v2240 = vmul.f32 %v1870, %v2226
    %v2241 = vmul.f32 %v1871, %v2227
    %v2243 = vperm.slane %v1173, 0
    %v2244 = vperm.slane %v1173, 1
    %v2245 = vperm.slane %v1173, 2
    %v2246 = vperm.slane %v1173, 3
    %v2247 = vperm.slane %v1173, 4
    %v2248 = vperm.slane %v1173, 5
    %v2249 = vperm.slane %v1173, 6
    %v2257 = vadd.f32 %v2235, %v2243
    %v2258 = vadd.f32 %v2236, %v2244
    %v2259 = vadd.f32 %v2237, %v2245
    %v2260 = vadd.f32 %v2238, %v2246
    %v2261 = vadd.f32 %v2239, %v2247
    %v2262 = vadd.f32 %v2240, %v2248
    %v2263 = vadd.f32 %v2241, %v2249
    %v2264 = vpack.c.bf16 %v2257, %v2257
    %v2265 = vpack.c.bf16 %v2258, %v2258
    %v2266 = vpack.c.bf16 %v2259, %v2259
    %v2267 = vpack.c.bf16 %v2260, %v2260
    %v2268 = vpack.c.bf16 %v2261, %v2261
    %v2269 = vpack.c.bf16 %v2262, %v2262
    %v2270 = vpack.c.bf16 %v2263, %v2263
    %v2271 = vld [vmem:[#allocation11] sm:$0xff]
    %v2272 = vld [vmem:[#allocation11 + $0x8] sm:$0xff]
    %v2273 = vld [vmem:[#allocation11 + $0x10] sm:$0xff]
    %v2274 = vld [vmem:[#allocation11 + $0x18] sm:$0xf]
    %v2275 = vld [vmem:[#allocation11 + $0x1c] sm:$0xff]
    %v2276 = vld [vmem:[#allocation11 + $0x24] sm:$0xff]
    %v2277 = vld [vmem:[#allocation11 + $0x2c] sm:$0xff]
    %v2278 = vld [vmem:[#allocation11 + $0x34] sm:$0xf]
    %v2279 = vld [vmem:[#allocation11 + $0x38] sm:$0xff]
    %v2280 = vld [vmem:[#allocation11 + $0x40] sm:$0xff]
    %v2281 = vld [vmem:[#allocation11 + $0x48] sm:$0xff]
    %v2282 = vld [vmem:[#allocation11 + $0x50] sm:$0xf]
    %v2283 = vld [vmem:[#allocation11 + $0x54] sm:$0xff]
    %v2284 = vld [vmem:[#allocation11 + $0x5c] sm:$0xff]
    %v2285 = vld [vmem:[#allocation11 + $0x64] sm:$0xff]
    %v2286 = vld [vmem:[#allocation11 + $0x6c] sm:$0xf]
    %v2287 = vld [vmem:[#allocation11 + $0x70] sm:$0xff]
    %v2288 = vld [vmem:[#allocation11 + $0x78] sm:$0xff]
    %v2289 = vld [vmem:[#allocation11 + $0x80] sm:$0xff]
    %v2290 = vld [vmem:[#allocation11 + $0x88] sm:$0xf]
    %v2291 = vld [vmem:[#allocation11 + $0x8c] sm:$0xff]
    %v2292 = vld [vmem:[#allocation11 + $0x94] sm:$0xff]
    %v2293 = vld [vmem:[#allocation11 + $0x9c] sm:$0xff]
    %v2294 = vld [vmem:[#allocation11 + $0xa4] sm:$0xf]
    %v2295 = vld [vmem:[#allocation11 + $0xa8] sm:$0xff]
    %v2296 = vld [vmem:[#allocation11 + $0xb0] sm:$0xff]
    %v2297 = vld [vmem:[#allocation11 + $0xb8] sm:$0xff]
    %v2298 = vld [vmem:[#allocation11 + $0xc0] sm:$0xf]
    %v2299 = vld [vmem:[#allocation11 + $0xc4] sm:$0xff]
    %v2300 = vld [vmem:[#allocation11 + $0xcc] sm:$0xff]
    %v2301 = vld [vmem:[#allocation11 + $0xd4] sm:$0xff]
    %v2302 = vld [vmem:[#allocation11 + $0xdc] sm:$0xf]
    %v2303 = vld [vmem:[#allocation11 + $0xe0] sm:$0xff]
    %v2304 = vld [vmem:[#allocation11 + $0xe8] sm:$0xff]
    %v2305 = vld [vmem:[#allocation11 + $0xf0] sm:$0xff]
    %v2306 = vld [vmem:[#allocation11 + $0xf8] sm:$0xf]
    %v2307 = vld [vmem:[#allocation11 + $0xfc] sm:$0xff]
    %v2308 = vld [vmem:[#allocation11 + $0x104] sm:$0xff]
    %v2309 = vld [vmem:[#allocation11 + $0x10c] sm:$0xff]
    %v2310 = vld [vmem:[#allocation11 + $0x114] sm:$0xf]
    %v2311 = vld [vmem:[#allocation11 + $0x118] sm:$0xff]
    %v2312 = vld [vmem:[#allocation11 + $0x120] sm:$0xff]
    %v2313 = vld [vmem:[#allocation11 + $0x128] sm:$0xff]
    %v2314 = vld [vmem:[#allocation11 + $0x130] sm:$0xf]
    %v2315 = vld [vmem:[#allocation11 + $0x134] sm:$0xff]
    %v2316 = vld [vmem:[#allocation11 + $0x13c] sm:$0xff]
    %v2317 = vld [vmem:[#allocation11 + $0x144] sm:$0xff]
    %v2318 = vld [vmem:[#allocation11 + $0x14c] sm:$0xf]
    %v2319 = vld [vmem:[#allocation11 + $0x150] sm:$0xff]
    %v2320 = vld [vmem:[#allocation11 + $0x158] sm:$0xff]
    %v2321 = vld [vmem:[#allocation11 + $0x160] sm:$0xff]
    %v2322 = vld [vmem:[#allocation11 + $0x168] sm:$0xf]
    %v2323 = vld [vmem:[#allocation11 + $0x16c] sm:$0xff]
    %v2324 = vld [vmem:[#allocation11 + $0x174] sm:$0xff]
    %v2325 = vld [vmem:[#allocation11 + $0x17c] sm:$0xff]
    %v2326 = vld [vmem:[#allocation11 + $0x184] sm:$0xf]
    %v2327 = vld [vmem:[#allocation11 + $0x188] sm:$0xff]
    %v2328 = vld [vmem:[#allocation11 + $0x190] sm:$0xff]
    %v2329 = vld [vmem:[#allocation11 + $0x198] sm:$0xff]
    %v2330 = vld [vmem:[#allocation11 + $0x1a0] sm:$0xf]
    %v2331 = vld [vmem:[#allocation11 + $0x1a4] sm:$0xff]
    %v2332 = vld [vmem:[#allocation11 + $0x1ac] sm:$0xff]
    %v2333 = vld [vmem:[#allocation11 + $0x1b4] sm:$0xff]
    %v2334 = vld [vmem:[#allocation11 + $0x1bc] sm:$0xf]
    %v2335 = vld [vmem:[#allocation11 + $0x1c0] sm:$0xff]
    %v2336 = vld [vmem:[#allocation11 + $0x1c8] sm:$0xff]
    %v2337 = vld [vmem:[#allocation11 + $0x1d0] sm:$0xff]
    %v2338 = vld [vmem:[#allocation11 + $0x1d8] sm:$0xf]
    %v2339 = vld [vmem:[#allocation11 + $0x1dc] sm:$0xff]
    %v2340 = vld [vmem:[#allocation11 + $0x1e4] sm:$0xff]
    %v2341 = vld [vmem:[#allocation11 + $0x1ec] sm:$0xff]
    %v2342 = vld [vmem:[#allocation11 + $0x1f4] sm:$0xf]
    %v2343 = vld [vmem:[#allocation11 + $0x1f8] sm:$0xff]
    %v2344 = vld [vmem:[#allocation11 + $0x200] sm:$0xff]
    %v2345 = vld [vmem:[#allocation11 + $0x208] sm:$0xff]
    %v2346 = vld [vmem:[#allocation11 + $0x210] sm:$0xf]
    %v2347 = vld [vmem:[#allocation11 + $0x214] sm:$0xff]
    %v2348 = vld [vmem:[#allocation11 + $0x21c] sm:$0xff]
    %v2349 = vld [vmem:[#allocation11 + $0x224] sm:$0xff]
    %v2350 = vld [vmem:[#allocation11 + $0x22c] sm:$0xf]
    %v2351 = vld [vmem:[#allocation11 + $0x230] sm:$0xff]
    %v2352 = vld [vmem:[#allocation11 + $0x238] sm:$0xff]
    %v2353 = vld [vmem:[#allocation11 + $0x240] sm:$0xff]
    %v2354 = vld [vmem:[#allocation11 + $0x248] sm:$0xf]
    %v2355 = vld [vmem:[#allocation11 + $0x24c] sm:$0xff]
    %v2356 = vld [vmem:[#allocation11 + $0x254] sm:$0xff]
    %v2357 = vld [vmem:[#allocation11 + $0x25c] sm:$0xff]
    %v2358 = vld [vmem:[#allocation11 + $0x264] sm:$0xf]
    %v2359 = vld [vmem:[#allocation11 + $0x268] sm:$0xff]
    %v2360 = vld [vmem:[#allocation11 + $0x270] sm:$0xff]
    %v2361 = vld [vmem:[#allocation11 + $0x278] sm:$0xff]
    %v2362 = vld [vmem:[#allocation11 + $0x280] sm:$0xf]
    %v2363 = vld [vmem:[#allocation11 + $0x284] sm:$0xff]
    %v2364 = vld [vmem:[#allocation11 + $0x28c] sm:$0xff]
    %v2365 = vld [vmem:[#allocation11 + $0x294] sm:$0xff]
    %v2366 = vld [vmem:[#allocation11 + $0x29c] sm:$0xf]
    %v2367 = vld [vmem:[#allocation11 + $0x2a0] sm:$0xff]
    %v2368 = vld [vmem:[#allocation11 + $0x2a8] sm:$0xff]
    %v2369 = vld [vmem:[#allocation11 + $0x2b0] sm:$0xff]
    %v2370 = vld [vmem:[#allocation11 + $0x2b8] sm:$0xf]
    %v2371 = vld [vmem:[#allocation11 + $0x2bc] sm:$0xff]
    %v2372 = vld [vmem:[#allocation11 + $0x2c4] sm:$0xff]
    %v2373 = vld [vmem:[#allocation11 + $0x2cc] sm:$0xff]
    %v2374 = vld [vmem:[#allocation11 + $0x2d4] sm:$0xf]
    %v2375 = vld [vmem:[#allocation11 + $0x2d8] sm:$0xff]
    %v2376 = vld [vmem:[#allocation11 + $0x2e0] sm:$0xff]
    %v2377 = vld [vmem:[#allocation11 + $0x2e8] sm:$0xff]
    %v2378 = vld [vmem:[#allocation11 + $0x2f0] sm:$0xf]
    %v2379 = vld [vmem:[#allocation11 + $0x2f4] sm:$0xff]
    %v2380 = vld [vmem:[#allocation11 + $0x2fc] sm:$0xff]
    %v2381 = vld [vmem:[#allocation11 + $0x304] sm:$0xff]
    %v2382 = vld [vmem:[#allocation11 + $0x30c] sm:$0xf]
    %v2383 = vld [vmem:[#allocation11 + $0x310] sm:$0xff]
    %v2384 = vld [vmem:[#allocation11 + $0x318] sm:$0xff]
    %v2385 = vld [vmem:[#allocation11 + $0x320] sm:$0xff]
    %v2386 = vld [vmem:[#allocation11 + $0x328] sm:$0xf]
    %v2387 = vld [vmem:[#allocation11 + $0x32c] sm:$0xff]
    %v2388 = vld [vmem:[#allocation11 + $0x334] sm:$0xff]
    %v2389 = vld [vmem:[#allocation11 + $0x33c] sm:$0xff]
    %v2390 = vld [vmem:[#allocation11 + $0x344] sm:$0xf]
    %v2391 = vld [vmem:[#allocation11 + $0x348] sm:$0xff]
    %v2392 = vld [vmem:[#allocation11 + $0x350] sm:$0xff]
    %v2393 = vld [vmem:[#allocation11 + $0x358] sm:$0xff]
    %v2394 = vld [vmem:[#allocation11 + $0x360] sm:$0xf]
    %v2395 = vld [vmem:[#allocation11 + $0x364] sm:$0xff]
    %v2396 = vld [vmem:[#allocation11 + $0x36c] sm:$0xff]
    %v2397 = vld [vmem:[#allocation11 + $0x374] sm:$0xff]
    %v2398 = vld [vmem:[#allocation11 + $0x37c] sm:$0xf]
    %v2399 = vld [vmem:[#allocation11 + $0x380] sm:$0xff]
    %v2400 = vld [vmem:[#allocation11 + $0x388] sm:$0xff]
    %v2401 = vld [vmem:[#allocation11 + $0x390] sm:$0xff]
    %v2402 = vld [vmem:[#allocation11 + $0x398] sm:$0xf]
    %v2403 = vld [vmem:[#allocation11 + $0x39c] sm:$0xff]
    %v2404 = vld [vmem:[#allocation11 + $0x3a4] sm:$0xff]
    %v2405 = vld [vmem:[#allocation11 + $0x3ac] sm:$0xff]
    %v2406 = vld [vmem:[#allocation11 + $0x3b4] sm:$0xf]
    %v2407 = vld [vmem:[#allocation11 + $0x3b8] sm:$0xff]
    %v2408 = vld [vmem:[#allocation11 + $0x3c0] sm:$0xff]
    %v2409 = vld [vmem:[#allocation11 + $0x3c8] sm:$0xff]
    %v2410 = vld [vmem:[#allocation11 + $0x3d0] sm:$0xf]
    %v2411 = vld [vmem:[#allocation11 + $0x3d4] sm:$0xff]
    %v2412 = vld [vmem:[#allocation11 + $0x3dc] sm:$0xff]
    %v2413 = vld [vmem:[#allocation11 + $0x3e4] sm:$0xff]
    %v2414 = vld [vmem:[#allocation11 + $0x3ec] sm:$0xf]
    %v2415 = vld [vmem:[#allocation11 + $0x3f0] sm:$0xff]
    %v2416 = vld [vmem:[#allocation11 + $0x3f8] sm:$0xff]
    %v2417 = vld [vmem:[#allocation11 + $0x400] sm:$0xff]
    %v2418 = vld [vmem:[#allocation11 + $0x408] sm:$0xf]
    %v2419 = vld [vmem:[#allocation11 + $0x40c] sm:$0xff]
    %v2420 = vld [vmem:[#allocation11 + $0x414] sm:$0xff]
    %v2421 = vld [vmem:[#allocation11 + $0x41c] sm:$0xff]
    %v2422 = vld [vmem:[#allocation11 + $0x424] sm:$0xf]
    %v2423 = vld [vmem:[#allocation11 + $0x428] sm:$0xff]
    %v2424 = vld [vmem:[#allocation11 + $0x430] sm:$0xff]
    %v2425 = vld [vmem:[#allocation11 + $0x438] sm:$0xff]
    %v2426 = vld [vmem:[#allocation11 + $0x440] sm:$0xf]
    %v2427 = vld [vmem:[#allocation11 + $0x444] sm:$0xff]
    %v2428 = vld [vmem:[#allocation11 + $0x44c] sm:$0xff]
    %v2429 = vld [vmem:[#allocation11 + $0x454] sm:$0xff]
    %v2430 = vld [vmem:[#allocation11 + $0x45c] sm:$0xf]
    %v2431 = vld [vmem:[#allocation11 + $0x460] sm:$0xff]
    %v2432 = vld [vmem:[#allocation11 + $0x468] sm:$0xff]
    %v2433 = vld [vmem:[#allocation11 + $0x470] sm:$0xff]
    %v2434 = vld [vmem:[#allocation11 + $0x478] sm:$0xf]
    %v2435 = vld [vmem:[#allocation11 + $0x47c] sm:$0xff]
    %v2436 = vld [vmem:[#allocation11 + $0x484] sm:$0xff]
    %v2437 = vld [vmem:[#allocation11 + $0x48c] sm:$0xff]
    %v2438 = vld [vmem:[#allocation11 + $0x494] sm:$0xf]
    %v2439 = vld [vmem:[#allocation11 + $0x498] sm:$0xff]
    %v2440 = vld [vmem:[#allocation11 + $0x4a0] sm:$0xff]
    %v2441 = vld [vmem:[#allocation11 + $0x4a8] sm:$0xff]
    %v2442 = vld [vmem:[#allocation11 + $0x4b0] sm:$0xf]
    %v2443 = vld [vmem:[#allocation11 + $0x4b4] sm:$0xff]
    %v2444 = vld [vmem:[#allocation11 + $0x4bc] sm:$0xff]
    %v2445 = vld [vmem:[#allocation11 + $0x4c4] sm:$0xff]
    %v2446 = vld [vmem:[#allocation11 + $0x4cc] sm:$0xf]
    %v2447 = vld [vmem:[#allocation11 + $0x4d0] sm:$0xff]
    %v2448 = vld [vmem:[#allocation11 + $0x4d8] sm:$0xff]
    %v2449 = vld [vmem:[#allocation11 + $0x4e0] sm:$0xff]
    %v2450 = vld [vmem:[#allocation11 + $0x4e8] sm:$0xf]
    %v2451 = vld [vmem:[#allocation11 + $0x4ec] sm:$0xff]
    %v2452 = vld [vmem:[#allocation11 + $0x4f4] sm:$0xff]
    %v2453 = vld [vmem:[#allocation11 + $0x4fc] sm:$0xff]
    %v2454 = vld [vmem:[#allocation11 + $0x504] sm:$0xf]
    %v2455 = vld [vmem:[#allocation11 + $0x508] sm:$0xff]
    %v2456 = vld [vmem:[#allocation11 + $0x510] sm:$0xff]
    %v2457 = vld [vmem:[#allocation11 + $0x518] sm:$0xff]
    %v2458 = vld [vmem:[#allocation11 + $0x520] sm:$0xf]
    %v2459 = vld [vmem:[#allocation11 + $0x524] sm:$0xff]
    %v2460 = vld [vmem:[#allocation11 + $0x52c] sm:$0xff]
    %v2461 = vld [vmem:[#allocation11 + $0x534] sm:$0xff]
    %v2462 = vld [vmem:[#allocation11 + $0x53c] sm:$0xf]
    %v2463 = vld [vmem:[#allocation11 + $0x540] sm:$0xff]
    %v2464 = vld [vmem:[#allocation11 + $0x548] sm:$0xff]
    %v2465 = vld [vmem:[#allocation11 + $0x550] sm:$0xff]
    %v2466 = vld [vmem:[#allocation11 + $0x558] sm:$0xf]
    %v2467 = vld [vmem:[#allocation11 + $0x55c] sm:$0xff]
    %v2468 = vld [vmem:[#allocation11 + $0x564] sm:$0xff]
    %v2469 = vld [vmem:[#allocation11 + $0x56c] sm:$0xff]
    %v2470 = vld [vmem:[#allocation11 + $0x574] sm:$0xf]
    %v2471 = vld [vmem:[#allocation11 + $0x578] sm:$0xff]
    %v2472 = vld [vmem:[#allocation11 + $0x580] sm:$0xff]
    %v2473 = vld [vmem:[#allocation11 + $0x588] sm:$0xff]
    %v2474 = vld [vmem:[#allocation11 + $0x590] sm:$0xf]
    %v2475 = vld [vmem:[#allocation11 + $0x594] sm:$0xff]
    %v2476 = vld [vmem:[#allocation11 + $0x59c] sm:$0xff]
    %v2477 = vld [vmem:[#allocation11 + $0x5a4] sm:$0xff]
    %v2478 = vld [vmem:[#allocation11 + $0x5ac] sm:$0xf]
    %v2479 = vld [vmem:[#allocation11 + $0x5b0] sm:$0xff]
    %v2480 = vld [vmem:[#allocation11 + $0x5b8] sm:$0xff]
    %v2481 = vld [vmem:[#allocation11 + $0x5c0] sm:$0xff]
    %v2482 = vld [vmem:[#allocation11 + $0x5c8] sm:$0xf]
    %v2483 = vld [vmem:[#allocation11 + $0x5cc] sm:$0xff]
    %v2484 = vld [vmem:[#allocation11 + $0x5d4] sm:$0xff]
    %v2485 = vld [vmem:[#allocation11 + $0x5dc] sm:$0xff]
    %v2486 = vld [vmem:[#allocation11 + $0x5e4] sm:$0xf]
    %v2487 = vld [vmem:[#allocation11 + $0x5e8] sm:$0xff]
    %v2488 = vld [vmem:[#allocation11 + $0x5f0] sm:$0xff]
    %v2489 = vld [vmem:[#allocation11 + $0x5f8] sm:$0xff]
    %v2490 = vld [vmem:[#allocation11 + $0x600] sm:$0xf]
    %v2491 = vld [vmem:[#allocation11 + $0x604] sm:$0xff]
    %v2492 = vld [vmem:[#allocation11 + $0x60c] sm:$0xff]
    %v2493 = vld [vmem:[#allocation11 + $0x614] sm:$0xff]
    %v2494 = vld [vmem:[#allocation11 + $0x61c] sm:$0xf]
    %v2495 = vld [vmem:[#allocation11 + $0x620] sm:$0xff]
    %v2496 = vld [vmem:[#allocation11 + $0x628] sm:$0xff]
    %v2497 = vld [vmem:[#allocation11 + $0x630] sm:$0xff]
    %v2498 = vld [vmem:[#allocation11 + $0x638] sm:$0xf]
    %v2499 = vld [vmem:[#allocation11 + $0x63c] sm:$0xff]
    %v2500 = vld [vmem:[#allocation11 + $0x644] sm:$0xff]
    %v2501 = vld [vmem:[#allocation11 + $0x64c] sm:$0xff]
    %v2502 = vld [vmem:[#allocation11 + $0x654] sm:$0xf]
    %v2503 = vld [vmem:[#allocation11 + $0x658] sm:$0xff]
    %v2504 = vld [vmem:[#allocation11 + $0x660] sm:$0xff]
    %v2505 = vld [vmem:[#allocation11 + $0x668] sm:$0xff]
    %v2506 = vld [vmem:[#allocation11 + $0x670] sm:$0xf]
    %v2507 = vld [vmem:[#allocation11 + $0x674] sm:$0xff]
    %v2508 = vld [vmem:[#allocation11 + $0x67c] sm:$0xff]
    %v2509 = vld [vmem:[#allocation11 + $0x684] sm:$0xff]
    %v2510 = vld [vmem:[#allocation11 + $0x68c] sm:$0xf]
    %v2511 = vld [vmem:[#allocation11 + $0x690] sm:$0xff]
    %v2512 = vld [vmem:[#allocation11 + $0x698] sm:$0xff]
    %v2513 = vld [vmem:[#allocation11 + $0x6a0] sm:$0xff]
    %v2514 = vld [vmem:[#allocation11 + $0x6a8] sm:$0xf]
    %v2515 = vld [vmem:[#allocation11 + $0x6ac] sm:$0xff]
    %v2516 = vld [vmem:[#allocation11 + $0x6b4] sm:$0xff]
    %v2517 = vld [vmem:[#allocation11 + $0x6bc] sm:$0xff]
    %v2518 = vld [vmem:[#allocation11 + $0x6c4] sm:$0xf]
    %v2519 = vld [vmem:[#allocation11 + $0x6c8] sm:$0xff]
    %v2520 = vld [vmem:[#allocation11 + $0x6d0] sm:$0xff]
    %v2521 = vld [vmem:[#allocation11 + $0x6d8] sm:$0xff]
    %v2522 = vld [vmem:[#allocation11 + $0x6e0] sm:$0xf]
    %v2523 = vld [vmem:[#allocation11 + $0x6e4] sm:$0xff]
    %v2524 = vld [vmem:[#allocation11 + $0x6ec] sm:$0xff]
    %v2525 = vld [vmem:[#allocation11 + $0x6f4] sm:$0xff]
    %v2526 = vld [vmem:[#allocation11 + $0x6fc] sm:$0xf]
    %v2527 = vld [vmem:[#allocation11 + $0x700] sm:$0xff]
    %v2528 = vld [vmem:[#allocation11 + $0x708] sm:$0xff]
    %v2529 = vld [vmem:[#allocation11 + $0x710] sm:$0xff]
    %v2530 = vld [vmem:[#allocation11 + $0x718] sm:$0xf]
    %v2531 = vld [vmem:[#allocation11 + $0x71c] sm:$0xff]
    %v2532 = vld [vmem:[#allocation11 + $0x724] sm:$0xff]
    %v2533 = vld [vmem:[#allocation11 + $0x72c] sm:$0xff]
    %v2534 = vld [vmem:[#allocation11 + $0x734] sm:$0xf]
    %v2535 = vld [vmem:[#allocation11 + $0x738] sm:$0xff]
    %v2536 = vld [vmem:[#allocation11 + $0x740] sm:$0xff]
    %v2537 = vld [vmem:[#allocation11 + $0x748] sm:$0xff]
    %v2538 = vld [vmem:[#allocation11 + $0x750] sm:$0xf]
    %v2539 = vld [vmem:[#allocation11 + $0x754] sm:$0xff]
    %v2540 = vld [vmem:[#allocation11 + $0x75c] sm:$0xff]
    %v2541 = vld [vmem:[#allocation11 + $0x764] sm:$0xff]
    %v2542 = vld [vmem:[#allocation11 + $0x76c] sm:$0xf]
    %v2543 = vld [vmem:[#allocation11 + $0x770] sm:$0xff]
    %v2544 = vld [vmem:[#allocation11 + $0x778] sm:$0xff]
    %v2545 = vld [vmem:[#allocation11 + $0x780] sm:$0xff]
    %v2546 = vld [vmem:[#allocation11 + $0x788] sm:$0xf]
    %v2547 = vld [vmem:[#allocation11 + $0x78c] sm:$0xff]
    %v2548 = vld [vmem:[#allocation11 + $0x794] sm:$0xff]
    %v2549 = vld [vmem:[#allocation11 + $0x79c] sm:$0xff]
    %v2550 = vld [vmem:[#allocation11 + $0x7a4] sm:$0xf]
    %v2551 = vld [vmem:[#allocation11 + $0x7a8] sm:$0xff]
    %v2552 = vld [vmem:[#allocation11 + $0x7b0] sm:$0xff]
    %v2553 = vld [vmem:[#allocation11 + $0x7b8] sm:$0xff]
    %v2554 = vld [vmem:[#allocation11 + $0x7c0] sm:$0xf]
    %v2555 = vld [vmem:[#allocation11 + $0x7c4] sm:$0xff]
    %v2556 = vld [vmem:[#allocation11 + $0x7cc] sm:$0xff]
    %v2557 = vld [vmem:[#allocation11 + $0x7d4] sm:$0xff]
    %v2558 = vld [vmem:[#allocation11 + $0x7dc] sm:$0xf]
    %v2559 = vld [vmem:[#allocation11 + $0x7e0] sm:$0xff]
    %v2560 = vld [vmem:[#allocation11 + $0x7e8] sm:$0xff]
    %v2561 = vld [vmem:[#allocation11 + $0x7f0] sm:$0xff]
    %v2562 = vld [vmem:[#allocation11 + $0x7f8] sm:$0xf]
    %v2563 = vld [vmem:[#allocation11 + $0x7fc] sm:$0xff]
    %v2564 = vld [vmem:[#allocation11 + $0x804] sm:$0xff]
    %v2565 = vld [vmem:[#allocation11 + $0x80c] sm:$0xff]
    %v2566 = vld [vmem:[#allocation11 + $0x814] sm:$0xf]
    %v2567 = vld [vmem:[#allocation11 + $0x818] sm:$0xff]
    %v2568 = vld [vmem:[#allocation11 + $0x820] sm:$0xff]
    %v2569 = vld [vmem:[#allocation11 + $0x828] sm:$0xff]
    %v2570 = vld [vmem:[#allocation11 + $0x830] sm:$0xf]
    %v2571 = vld [vmem:[#allocation11 + $0x834] sm:$0xff]
    %v2572 = vld [vmem:[#allocation11 + $0x83c] sm:$0xff]
    %v2573 = vld [vmem:[#allocation11 + $0x844] sm:$0xff]
    %v2574 = vld [vmem:[#allocation11 + $0x84c] sm:$0xf]
    %v2575 = vld [vmem:[#allocation11 + $0x850] sm:$0xff]
    %v2576 = vld [vmem:[#allocation11 + $0x858] sm:$0xff]
    %v2577 = vld [vmem:[#allocation11 + $0x860] sm:$0xff]
    %v2578 = vld [vmem:[#allocation11 + $0x868] sm:$0xf]
    %v2579 = vld [vmem:[#allocation11 + $0x86c] sm:$0xff]
    %v2580 = vld [vmem:[#allocation11 + $0x874] sm:$0xff]
    %v2581 = vld [vmem:[#allocation11 + $0x87c] sm:$0xff]
    %v2582 = vld [vmem:[#allocation11 + $0x884] sm:$0xf]
    %v2583 = vld [vmem:[#allocation11 + $0x888] sm:$0xff]
    %v2584 = vld [vmem:[#allocation11 + $0x890] sm:$0xff]
    %v2585 = vld [vmem:[#allocation11 + $0x898] sm:$0xff]
    %v2586 = vld [vmem:[#allocation11 + $0x8a0] sm:$0xf]
    %v2587 = vld [vmem:[#allocation11 + $0x8a4] sm:$0xff]
    %v2588 = vld [vmem:[#allocation11 + $0x8ac] sm:$0xff]
    %v2589 = vld [vmem:[#allocation11 + $0x8b4] sm:$0xff]
    %v2590 = vld [vmem:[#allocation11 + $0x8bc] sm:$0xf]
    %v2591 = vld [vmem:[#allocation11 + $0x8c0] sm:$0xff]
    %v2592 = vld [vmem:[#allocation11 + $0x8c8] sm:$0xff]
    %v2593 = vld [vmem:[#allocation11 + $0x8d0] sm:$0xff]
    %v2594 = vld [vmem:[#allocation11 + $0x8d8] sm:$0xf]
    %v2595 = vld [vmem:[#allocation11 + $0x8dc] sm:$0xff]
    %v2596 = vld [vmem:[#allocation11 + $0x8e4] sm:$0xff]
    %v2597 = vld [vmem:[#allocation11 + $0x8ec] sm:$0xff]
    %v2598 = vld [vmem:[#allocation11 + $0x8f4] sm:$0xf]
    %v2599 = vld [vmem:[#allocation11 + $0x8f8] sm:$0xff]
    %v2600 = vld [vmem:[#allocation11 + $0x900] sm:$0xff]
    %v2601 = vld [vmem:[#allocation11 + $0x908] sm:$0xff]
    %v2602 = vld [vmem:[#allocation11 + $0x910] sm:$0xf]
    %v2603 = vld [vmem:[#allocation11 + $0x914] sm:$0xff]
    %v2604 = vld [vmem:[#allocation11 + $0x91c] sm:$0xff]
    %v2605 = vld [vmem:[#allocation11 + $0x924] sm:$0xff]
    %v2606 = vld [vmem:[#allocation11 + $0x92c] sm:$0xf]
    %v2607 = vld [vmem:[#allocation11 + $0x930] sm:$0xff]
    %v2608 = vld [vmem:[#allocation11 + $0x938] sm:$0xff]
    %v2609 = vld [vmem:[#allocation11 + $0x940] sm:$0xff]
    %v2610 = vld [vmem:[#allocation11 + $0x948] sm:$0xf]
    %v2611 = vld [vmem:[#allocation11 + $0x94c] sm:$0xff]
    %v2612 = vld [vmem:[#allocation11 + $0x954] sm:$0xff]
    %v2613 = vld [vmem:[#allocation11 + $0x95c] sm:$0xff]
    %v2614 = vld [vmem:[#allocation11 + $0x964] sm:$0xf]
    %v2615 = vld [vmem:[#allocation11 + $0x968] sm:$0xff]
    %v2616 = vld [vmem:[#allocation11 + $0x970] sm:$0xff]
    %v2617 = vld [vmem:[#allocation11 + $0x978] sm:$0xff]
    %v2618 = vld [vmem:[#allocation11 + $0x980] sm:$0xf]
    %v2619 = vld [vmem:[#allocation11 + $0x984] sm:$0xff]
    %v2620 = vld [vmem:[#allocation11 + $0x98c] sm:$0xff]
    %v2621 = vld [vmem:[#allocation11 + $0x994] sm:$0xff]
    %v2622 = vld [vmem:[#allocation11 + $0x99c] sm:$0xf]
    %v2623 = vld [vmem:[#allocation11 + $0x9a0] sm:$0xff]
    %v2624 = vld [vmem:[#allocation11 + $0x9a8] sm:$0xff]
    %v2625 = vld [vmem:[#allocation11 + $0x9b0] sm:$0xff]
    %v2626 = vld [vmem:[#allocation11 + $0x9b8] sm:$0xf]
    %v2627 = vld [vmem:[#allocation11 + $0x9bc] sm:$0xff]
    %v2628 = vld [vmem:[#allocation11 + $0x9c4] sm:$0xff]
    %v2629 = vld [vmem:[#allocation11 + $0x9cc] sm:$0xff]
    %v2630 = vld [vmem:[#allocation11 + $0x9d4] sm:$0xf]
    %v2631 = vld [vmem:[#allocation11 + $0x9d8] sm:$0xff]
    %v2632 = vld [vmem:[#allocation11 + $0x9e0] sm:$0xff]
    %v2633 = vld [vmem:[#allocation11 + $0x9e8] sm:$0xff]
    %v2634 = vld [vmem:[#allocation11 + $0x9f0] sm:$0xf]
    %v2635 = vld [vmem:[#allocation11 + $0x9f4] sm:$0xff]
    %v2636 = vld [vmem:[#allocation11 + $0x9fc] sm:$0xff]
    %v2637 = vld [vmem:[#allocation11 + $0xa04] sm:$0xff]
    %v2638 = vld [vmem:[#allocation11 + $0xa0c] sm:$0xf]
    %v2639 = vld [vmem:[#allocation11 + $0xa10] sm:$0xff]
    %v2640 = vld [vmem:[#allocation11 + $0xa18] sm:$0xff]
    %v2641 = vld [vmem:[#allocation11 + $0xa20] sm:$0xff]
    %v2642 = vld [vmem:[#allocation11 + $0xa28] sm:$0xf]
    %v2643 = vld [vmem:[#allocation11 + $0xa2c] sm:$0xff]
    %v2644 = vld [vmem:[#allocation11 + $0xa34] sm:$0xff]
    %v2645 = vld [vmem:[#allocation11 + $0xa3c] sm:$0xff]
    %v2646 = vld [vmem:[#allocation11 + $0xa44] sm:$0xf]
    %v2647 = vld [vmem:[#allocation11 + $0xa48] sm:$0xff]
    %v2648 = vld [vmem:[#allocation11 + $0xa50] sm:$0xff]
    %v2649 = vld [vmem:[#allocation11 + $0xa58] sm:$0xff]
    %v2650 = vld [vmem:[#allocation11 + $0xa60] sm:$0xf]
    %v2651 = vld [vmem:[#allocation11 + $0xa64] sm:$0xff]
    %v2652 = vld [vmem:[#allocation11 + $0xa6c] sm:$0xff]
    %v2653 = vld [vmem:[#allocation11 + $0xa74] sm:$0xff]
    %v2654 = vld [vmem:[#allocation11 + $0xa7c] sm:$0xf]
    %v2655 = vld [vmem:[#allocation11 + $0xa80] sm:$0xff]
    %v2656 = vld [vmem:[#allocation11 + $0xa88] sm:$0xff]
    %v2657 = vld [vmem:[#allocation11 + $0xa90] sm:$0xff]
    %v2658 = vld [vmem:[#allocation11 + $0xa98] sm:$0xf]
    %v2659 = vld [vmem:[#allocation11 + $0xa9c] sm:$0xff]
    %v2660 = vld [vmem:[#allocation11 + $0xaa4] sm:$0xff]
    %v2661 = vld [vmem:[#allocation11 + $0xaac] sm:$0xff]
    %v2662 = vld [vmem:[#allocation11 + $0xab4] sm:$0xf]
    %v2663 = vld [vmem:[#allocation13] sm:$0x7f]
    %v2665 = vperm.slane %v2663, 0
    %v2666 = vperm.slane %v2663, 1
    %v2667 = vperm.slane %v2663, 2
    %v2668 = vperm.slane %v2663, 3
    %v2669 = vperm.slane %v2663, 4
    %v2670 = vperm.slane %v2663, 5
    %v2671 = vperm.slane %v2663, 6
    %v3071 = vunpack.c.l.b16 %v2271
    %v3072 = vunpack.c.h.b16 %v2271
    %v3073 = vunpack.c.l.b16 %v2272
    %v3074 = vunpack.c.h.b16 %v2272
    %v3075 = vunpack.c.l.b16 %v2273
    %v3076 = vunpack.c.h.b16 %v2273
    %v3077 = vunpack.c.l.b16 %v2274
    %v3078 = vunpack.c.l.b16 %v2275
    %v3079 = vunpack.c.h.b16 %v2275
    %v3080 = vunpack.c.l.b16 %v2276
    %v3081 = vunpack.c.h.b16 %v2276
    %v3082 = vunpack.c.l.b16 %v2277
    %v3083 = vunpack.c.h.b16 %v2277
    %v3084 = vunpack.c.l.b16 %v2278
    %v3085 = vunpack.c.l.b16 %v2279
    %v3086 = vunpack.c.h.b16 %v2279
    %v3087 = vunpack.c.l.b16 %v2280
    %v3088 = vunpack.c.h.b16 %v2280
    %v3089 = vunpack.c.l.b16 %v2281
    %v3090 = vunpack.c.h.b16 %v2281
    %v3091 = vunpack.c.l.b16 %v2282
    %v3092 = vunpack.c.l.b16 %v2283
    %v3093 = vunpack.c.h.b16 %v2283
    %v3094 = vunpack.c.l.b16 %v2284
    %v3095 = vunpack.c.h.b16 %v2284
    %v3096 = vunpack.c.l.b16 %v2285
    %v3097 = vunpack.c.h.b16 %v2285
    %v3098 = vunpack.c.l.b16 %v2286
    %v3099 = vunpack.c.l.b16 %v2287
    %v3100 = vunpack.c.h.b16 %v2287
    %v3101 = vunpack.c.l.b16 %v2288
    %v3102 = vunpack.c.h.b16 %v2288
    %v3103 = vunpack.c.l.b16 %v2289
    %v3104 = vunpack.c.h.b16 %v2289
    %v3105 = vunpack.c.l.b16 %v2290
    %v3106 = vunpack.c.l.b16 %v2291
    %v3107 = vunpack.c.h.b16 %v2291
    %v3108 = vunpack.c.l.b16 %v2292
    %v3109 = vunpack.c.h.b16 %v2292
    %v3110 = vunpack.c.l.b16 %v2293
    %v3111 = vunpack.c.h.b16 %v2293
    %v3112 = vunpack.c.l.b16 %v2294
    %v3113 = vunpack.c.l.b16 %v2295
    %v3114 = vunpack.c.h.b16 %v2295
    %v3115 = vunpack.c.l.b16 %v2296
    %v3116 = vunpack.c.h.b16 %v2296
    %v3117 = vunpack.c.l.b16 %v2297
    %v3118 = vunpack.c.h.b16 %v2297
    %v3119 = vunpack.c.l.b16 %v2298
    %v3120 = vunpack.c.l.b16 %v2299
    %v3121 = vunpack.c.h.b16 %v2299
    %v3122 = vunpack.c.l.b16 %v2300
    %v3123 = vunpack.c.h.b16 %v2300
    %v3124 = vunpack.c.l.b16 %v2301
    %v3125 = vunpack.c.h.b16 %v2301
    %v3126 = vunpack.c.l.b16 %v2302
    %v3127 = vunpack.c.l.b16 %v2303
    %v3128 = vunpack.c.h.b16 %v2303
    %v3129 = vunpack.c.l.b16 %v2304
    %v3130 = vunpack.c.h.b16 %v2304
    %v3131 = vunpack.c.l.b16 %v2305
    %v3132 = vunpack.c.h.b16 %v2305
    %v3133 = vunpack.c.l.b16 %v2306
    %v3134 = vunpack.c.l.b16 %v2307
    %v3135 = vunpack.c.h.b16 %v2307
    %v3136 = vunpack.c.l.b16 %v2308
    %v3137 = vunpack.c.h.b16 %v2308
    %v3138 = vunpack.c.l.b16 %v2309
    %v3139 = vunpack.c.h.b16 %v2309
    %v3140 = vunpack.c.l.b16 %v2310
    %v3141 = vunpack.c.l.b16 %v2311
    %v3142 = vunpack.c.h.b16 %v2311
    %v3143 = vunpack.c.l.b16 %v2312
    %v3144 = vunpack.c.h.b16 %v2312
    %v3145 = vunpack.c.l.b16 %v2313
    %v3146 = vunpack.c.h.b16 %v2313
    %v3147 = vunpack.c.l.b16 %v2314
    %v3148 = vunpack.c.l.b16 %v2315
    %v3149 = vunpack.c.h.b16 %v2315
    %v3150 = vunpack.c.l.b16 %v2316
    %v3151 = vunpack.c.h.b16 %v2316
    %v3152 = vunpack.c.l.b16 %v2317
    %v3153 = vunpack.c.h.b16 %v2317
    %v3154 = vunpack.c.l.b16 %v2318
    %v3155 = vunpack.c.l.b16 %v2319
    %v3156 = vunpack.c.h.b16 %v2319
    %v3157 = vunpack.c.l.b16 %v2320
    %v3158 = vunpack.c.h.b16 %v2320
    %v3159 = vunpack.c.l.b16 %v2321
    %v3160 = vunpack.c.h.b16 %v2321
    %v3161 = vunpack.c.l.b16 %v2322
    %v3162 = vunpack.c.l.b16 %v2323
    %v3163 = vunpack.c.h.b16 %v2323
    %v3164 = vunpack.c.l.b16 %v2324
    %v3165 = vunpack.c.h.b16 %v2324
    %v3166 = vunpack.c.l.b16 %v2325
    %v3167 = vunpack.c.h.b16 %v2325
    %v3168 = vunpack.c.l.b16 %v2326
    %v3169 = vunpack.c.l.b16 %v2327
    %v3170 = vunpack.c.h.b16 %v2327
    %v3171 = vunpack.c.l.b16 %v2328
    %v3172 = vunpack.c.h.b16 %v2328
    %v3173 = vunpack.c.l.b16 %v2329
    %v3174 = vunpack.c.h.b16 %v2329
    %v3175 = vunpack.c.l.b16 %v2330
    %v3176 = vunpack.c.l.b16 %v2331
    %v3177 = vunpack.c.h.b16 %v2331
    %v3178 = vunpack.c.l.b16 %v2332
    %v3179 = vunpack.c.h.b16 %v2332
    %v3180 = vunpack.c.l.b16 %v2333
    %v3181 = vunpack.c.h.b16 %v2333
    %v3182 = vunpack.c.l.b16 %v2334
    %v3183 = vunpack.c.l.b16 %v2335
    %v3184 = vunpack.c.h.b16 %v2335
    %v3185 = vunpack.c.l.b16 %v2336
    %v3186 = vunpack.c.h.b16 %v2336
    %v3187 = vunpack.c.l.b16 %v2337
    %v3188 = vunpack.c.h.b16 %v2337
    %v3189 = vunpack.c.l.b16 %v2338
    %v3190 = vunpack.c.l.b16 %v2339
    %v3191 = vunpack.c.h.b16 %v2339
    %v3192 = vunpack.c.l.b16 %v2340
    %v3193 = vunpack.c.h.b16 %v2340
    %v3194 = vunpack.c.l.b16 %v2341
    %v3195 = vunpack.c.h.b16 %v2341
    %v3196 = vunpack.c.l.b16 %v2342
    %v3197 = vunpack.c.l.b16 %v2343
    %v3198 = vunpack.c.h.b16 %v2343
    %v3199 = vunpack.c.l.b16 %v2344
    %v3200 = vunpack.c.h.b16 %v2344
    %v3201 = vunpack.c.l.b16 %v2345
    %v3202 = vunpack.c.h.b16 %v2345
    %v3203 = vunpack.c.l.b16 %v2346
    %v3204 = vunpack.c.l.b16 %v2347
    %v3205 = vunpack.c.h.b16 %v2347
    %v3206 = vunpack.c.l.b16 %v2348
    %v3207 = vunpack.c.h.b16 %v2348
    %v3208 = vunpack.c.l.b16 %v2349
    %v3209 = vunpack.c.h.b16 %v2349
    %v3210 = vunpack.c.l.b16 %v2350
    %v3211 = vunpack.c.l.b16 %v2351
    %v3212 = vunpack.c.h.b16 %v2351
    %v3213 = vunpack.c.l.b16 %v2352
    %v3214 = vunpack.c.h.b16 %v2352
    %v3215 = vunpack.c.l.b16 %v2353
    %v3216 = vunpack.c.h.b16 %v2353
    %v3217 = vunpack.c.l.b16 %v2354
    %v3218 = vunpack.c.l.b16 %v2355
    %v3219 = vunpack.c.h.b16 %v2355
    %v3220 = vunpack.c.l.b16 %v2356
    %v3221 = vunpack.c.h.b16 %v2356
    %v3222 = vunpack.c.l.b16 %v2357
    %v3223 = vunpack.c.h.b16 %v2357
    %v3224 = vunpack.c.l.b16 %v2358
    %v3225 = vunpack.c.l.b16 %v2359
    %v3226 = vunpack.c.h.b16 %v2359
    %v3227 = vunpack.c.l.b16 %v2360
    %v3228 = vunpack.c.h.b16 %v2360
    %v3229 = vunpack.c.l.b16 %v2361
    %v3230 = vunpack.c.h.b16 %v2361
    %v3231 = vunpack.c.l.b16 %v2362
    %v3232 = vunpack.c.l.b16 %v2363
    %v3233 = vunpack.c.h.b16 %v2363
    %v3234 = vunpack.c.l.b16 %v2364
    %v3235 = vunpack.c.h.b16 %v2364
    %v3236 = vunpack.c.l.b16 %v2365
    %v3237 = vunpack.c.h.b16 %v2365
    %v3238 = vunpack.c.l.b16 %v2366
    %v3239 = vunpack.c.l.b16 %v2367
    %v3240 = vunpack.c.h.b16 %v2367
    %v3241 = vunpack.c.l.b16 %v2368
    %v3242 = vunpack.c.h.b16 %v2368
    %v3243 = vunpack.c.l.b16 %v2369
    %v3244 = vunpack.c.h.b16 %v2369
    %v3245 = vunpack.c.l.b16 %v2370
    %v3246 = vunpack.c.l.b16 %v2371
    %v3247 = vunpack.c.h.b16 %v2371
    %v3248 = vunpack.c.l.b16 %v2372
    %v3249 = vunpack.c.h.b16 %v2372
    %v3250 = vunpack.c.l.b16 %v2373
    %v3251 = vunpack.c.h.b16 %v2373
    %v3252 = vunpack.c.l.b16 %v2374
    %v3253 = vunpack.c.l.b16 %v2375
    %v3254 = vunpack.c.h.b16 %v2375
    %v3255 = vunpack.c.l.b16 %v2376
    %v3256 = vunpack.c.h.b16 %v2376
    %v3257 = vunpack.c.l.b16 %v2377
    %v3258 = vunpack.c.h.b16 %v2377
    %v3259 = vunpack.c.l.b16 %v2378
    %v3260 = vunpack.c.l.b16 %v2379
    %v3261 = vunpack.c.h.b16 %v2379
    %v3262 = vunpack.c.l.b16 %v2380
    %v3263 = vunpack.c.h.b16 %v2380
    %v3264 = vunpack.c.l.b16 %v2381
    %v3265 = vunpack.c.h.b16 %v2381
    %v3266 = vunpack.c.l.b16 %v2382
    %v3267 = vunpack.c.l.b16 %v2383
    %v3268 = vunpack.c.h.b16 %v2383
    %v3269 = vunpack.c.l.b16 %v2384
    %v3270 = vunpack.c.h.b16 %v2384
    %v3271 = vunpack.c.l.b16 %v2385
    %v3272 = vunpack.c.h.b16 %v2385
    %v3273 = vunpack.c.l.b16 %v2386
    %v3274 = vunpack.c.l.b16 %v2387
    %v3275 = vunpack.c.h.b16 %v2387
    %v3276 = vunpack.c.l.b16 %v2388
    %v3277 = vunpack.c.h.b16 %v2388
    %v3278 = vunpack.c.l.b16 %v2389
    %v3279 = vunpack.c.h.b16 %v2389
    %v3280 = vunpack.c.l.b16 %v2390
    %v3281 = vunpack.c.l.b16 %v2391
    %v3282 = vunpack.c.h.b16 %v2391
    %v3283 = vunpack.c.l.b16 %v2392
    %v3284 = vunpack.c.h.b16 %v2392
    %v3285 = vunpack.c.l.b16 %v2393
    %v3286 = vunpack.c.h.b16 %v2393
    %v3287 = vunpack.c.l.b16 %v2394
    %v3288 = vunpack.c.l.b16 %v2395
    %v3289 = vunpack.c.h.b16 %v2395
    %v3290 = vunpack.c.l.b16 %v2396
    %v3291 = vunpack.c.h.b16 %v2396
    %v3292 = vunpack.c.l.b16 %v2397
    %v3293 = vunpack.c.h.b16 %v2397
    %v3294 = vunpack.c.l.b16 %v2398
    %v3295 = vunpack.c.l.b16 %v2399
    %v3296 = vunpack.c.h.b16 %v2399
    %v3297 = vunpack.c.l.b16 %v2400
    %v3298 = vunpack.c.h.b16 %v2400
    %v3299 = vunpack.c.l.b16 %v2401
    %v3300 = vunpack.c.h.b16 %v2401
    %v3301 = vunpack.c.l.b16 %v2402
    %v3302 = vunpack.c.l.b16 %v2403
    %v3303 = vunpack.c.h.b16 %v2403
    %v3304 = vunpack.c.l.b16 %v2404
    %v3305 = vunpack.c.h.b16 %v2404
    %v3306 = vunpack.c.l.b16 %v2405
    %v3307 = vunpack.c.h.b16 %v2405
    %v3308 = vunpack.c.l.b16 %v2406
    %v3309 = vunpack.c.l.b16 %v2407
    %v3310 = vunpack.c.h.b16 %v2407
    %v3311 = vunpack.c.l.b16 %v2408
    %v3312 = vunpack.c.h.b16 %v2408
    %v3313 = vunpack.c.l.b16 %v2409
    %v3314 = vunpack.c.h.b16 %v2409
    %v3315 = vunpack.c.l.b16 %v2410
    %v3316 = vunpack.c.l.b16 %v2411
    %v3317 = vunpack.c.h.b16 %v2411
    %v3318 = vunpack.c.l.b16 %v2412
    %v3319 = vunpack.c.h.b16 %v2412
    %v3320 = vunpack.c.l.b16 %v2413
    %v3321 = vunpack.c.h.b16 %v2413
    %v3322 = vunpack.c.l.b16 %v2414
    %v3323 = vunpack.c.l.b16 %v2415
    %v3324 = vunpack.c.h.b16 %v2415
    %v3325 = vunpack.c.l.b16 %v2416
    %v3326 = vunpack.c.h.b16 %v2416
    %v3327 = vunpack.c.l.b16 %v2417
    %v3328 = vunpack.c.h.b16 %v2417
    %v3329 = vunpack.c.l.b16 %v2418
    %v3330 = vunpack.c.l.b16 %v2419
    %v3331 = vunpack.c.h.b16 %v2419
    %v3332 = vunpack.c.l.b16 %v2420
    %v3333 = vunpack.c.h.b16 %v2420
    %v3334 = vunpack.c.l.b16 %v2421
    %v3335 = vunpack.c.h.b16 %v2421
    %v3336 = vunpack.c.l.b16 %v2422
    %v3337 = vunpack.c.l.b16 %v2423
    %v3338 = vunpack.c.h.b16 %v2423
    %v3339 = vunpack.c.l.b16 %v2424
    %v3340 = vunpack.c.h.b16 %v2424
    %v3341 = vunpack.c.l.b16 %v2425
    %v3342 = vunpack.c.h.b16 %v2425
    %v3343 = vunpack.c.l.b16 %v2426
    %v3344 = vunpack.c.l.b16 %v2427
    %v3345 = vunpack.c.h.b16 %v2427
    %v3346 = vunpack.c.l.b16 %v2428
    %v3347 = vunpack.c.h.b16 %v2428
    %v3348 = vunpack.c.l.b16 %v2429
    %v3349 = vunpack.c.h.b16 %v2429
    %v3350 = vunpack.c.l.b16 %v2430
    %v3351 = vunpack.c.l.b16 %v2431
    %v3352 = vunpack.c.h.b16 %v2431
    %v3353 = vunpack.c.l.b16 %v2432
    %v3354 = vunpack.c.h.b16 %v2432
    %v3355 = vunpack.c.l.b16 %v2433
    %v3356 = vunpack.c.h.b16 %v2433
    %v3357 = vunpack.c.l.b16 %v2434
    %v3358 = vunpack.c.l.b16 %v2435
    %v3359 = vunpack.c.h.b16 %v2435
    %v3360 = vunpack.c.l.b16 %v2436
    %v3361 = vunpack.c.h.b16 %v2436
    %v3362 = vunpack.c.l.b16 %v2437
    %v3363 = vunpack.c.h.b16 %v2437
    %v3364 = vunpack.c.l.b16 %v2438
    %v3365 = vunpack.c.l.b16 %v2439
    %v3366 = vunpack.c.h.b16 %v2439
    %v3367 = vunpack.c.l.b16 %v2440
    %v3368 = vunpack.c.h.b16 %v2440
    %v3369 = vunpack.c.l.b16 %v2441
    %v3370 = vunpack.c.h.b16 %v2441
    %v3371 = vunpack.c.l.b16 %v2442
    %v3372 = vunpack.c.l.b16 %v2443
    %v3373 = vunpack.c.h.b16 %v2443
    %v3374 = vunpack.c.l.b16 %v2444
    %v3375 = vunpack.c.h.b16 %v2444
    %v3376 = vunpack.c.l.b16 %v2445
    %v3377 = vunpack.c.h.b16 %v2445
    %v3378 = vunpack.c.l.b16 %v2446
    %v3379 = vunpack.c.l.b16 %v2447
    %v3380 = vunpack.c.h.b16 %v2447
    %v3381 = vunpack.c.l.b16 %v2448
    %v3382 = vunpack.c.h.b16 %v2448
    %v3383 = vunpack.c.l.b16 %v2449
    %v3384 = vunpack.c.h.b16 %v2449
    %v3385 = vunpack.c.l.b16 %v2450
    %v3386 = vunpack.c.l.b16 %v2451
    %v3387 = vunpack.c.h.b16 %v2451
    %v3388 = vunpack.c.l.b16 %v2452
    %v3389 = vunpack.c.h.b16 %v2452
    %v3390 = vunpack.c.l.b16 %v2453
    %v3391 = vunpack.c.h.b16 %v2453
    %v3392 = vunpack.c.l.b16 %v2454
    %v3393 = vunpack.c.l.b16 %v2455
    %v3394 = vunpack.c.h.b16 %v2455
    %v3395 = vunpack.c.l.b16 %v2456
    %v3396 = vunpack.c.h.b16 %v2456
    %v3397 = vunpack.c.l.b16 %v2457
    %v3398 = vunpack.c.h.b16 %v2457
    %v3399 = vunpack.c.l.b16 %v2458
    %v3400 = vunpack.c.l.b16 %v2459
    %v3401 = vunpack.c.h.b16 %v2459
    %v3402 = vunpack.c.l.b16 %v2460
    %v3403 = vunpack.c.h.b16 %v2460
    %v3404 = vunpack.c.l.b16 %v2461
    %v3405 = vunpack.c.h.b16 %v2461
    %v3406 = vunpack.c.l.b16 %v2462
    %v3407 = vunpack.c.l.b16 %v2463
    %v3408 = vunpack.c.h.b16 %v2463
    %v3409 = vunpack.c.l.b16 %v2464
    %v3410 = vunpack.c.h.b16 %v2464
    %v3411 = vunpack.c.l.b16 %v2465
    %v3412 = vunpack.c.h.b16 %v2465
    %v3413 = vunpack.c.l.b16 %v2466
    %v3414 = vunpack.c.l.b16 %v2467
    %v3415 = vunpack.c.h.b16 %v2467
    %v3416 = vunpack.c.l.b16 %v2468
    %v3417 = vunpack.c.h.b16 %v2468
    %v3418 = vunpack.c.l.b16 %v2469
    %v3419 = vunpack.c.h.b16 %v2469
    %v3420 = vunpack.c.l.b16 %v2470
    %v3421 = vunpack.c.l.b16 %v2471
    %v3422 = vunpack.c.h.b16 %v2471
    %v3423 = vunpack.c.l.b16 %v2472
    %v3424 = vunpack.c.h.b16 %v2472
    %v3425 = vunpack.c.l.b16 %v2473
    %v3426 = vunpack.c.h.b16 %v2473
    %v3427 = vunpack.c.l.b16 %v2474
    %v3428 = vunpack.c.l.b16 %v2475
    %v3429 = vunpack.c.h.b16 %v2475
    %v3430 = vunpack.c.l.b16 %v2476
    %v3431 = vunpack.c.h.b16 %v2476
    %v3432 = vunpack.c.l.b16 %v2477
    %v3433 = vunpack.c.h.b16 %v2477
    %v3434 = vunpack.c.l.b16 %v2478
    %v3435 = vunpack.c.l.b16 %v2479
    %v3436 = vunpack.c.h.b16 %v2479
    %v3437 = vunpack.c.l.b16 %v2480
    %v3438 = vunpack.c.h.b16 %v2480
    %v3439 = vunpack.c.l.b16 %v2481
    %v3440 = vunpack.c.h.b16 %v2481
    %v3441 = vunpack.c.l.b16 %v2482
    %v3442 = vunpack.c.l.b16 %v2483
    %v3443 = vunpack.c.h.b16 %v2483
    %v3444 = vunpack.c.l.b16 %v2484
    %v3445 = vunpack.c.h.b16 %v2484
    %v3446 = vunpack.c.l.b16 %v2485
    %v3447 = vunpack.c.h.b16 %v2485
    %v3448 = vunpack.c.l.b16 %v2486
    %v3449 = vunpack.c.l.b16 %v2487
    %v3450 = vunpack.c.h.b16 %v2487
    %v3451 = vunpack.c.l.b16 %v2488
    %v3452 = vunpack.c.h.b16 %v2488
    %v3453 = vunpack.c.l.b16 %v2489
    %v3454 = vunpack.c.h.b16 %v2489
    %v3455 = vunpack.c.l.b16 %v2490
    %v3456 = vunpack.c.l.b16 %v2491
    %v3457 = vunpack.c.h.b16 %v2491
    %v3458 = vunpack.c.l.b16 %v2492
    %v3459 = vunpack.c.h.b16 %v2492
    %v3460 = vunpack.c.l.b16 %v2493
    %v3461 = vunpack.c.h.b16 %v2493
    %v3462 = vunpack.c.l.b16 %v2494
    %v3463 = vunpack.c.l.b16 %v2495
    %v3464 = vunpack.c.h.b16 %v2495
    %v3465 = vunpack.c.l.b16 %v2496
    %v3466 = vunpack.c.h.b16 %v2496
    %v3467 = vunpack.c.l.b16 %v2497
    %v3468 = vunpack.c.h.b16 %v2497
    %v3469 = vunpack.c.l.b16 %v2498
    %v3470 = vunpack.c.l.b16 %v2499
    %v3471 = vunpack.c.h.b16 %v2499
    %v3472 = vunpack.c.l.b16 %v2500
    %v3473 = vunpack.c.h.b16 %v2500
    %v3474 = vunpack.c.l.b16 %v2501
    %v3475 = vunpack.c.h.b16 %v2501
    %v3476 = vunpack.c.l.b16 %v2502
    %v3477 = vunpack.c.l.b16 %v2503
    %v3478 = vunpack.c.h.b16 %v2503
    %v3479 = vunpack.c.l.b16 %v2504
    %v3480 = vunpack.c.h.b16 %v2504
    %v3481 = vunpack.c.l.b16 %v2505
    %v3482 = vunpack.c.h.b16 %v2505
    %v3483 = vunpack.c.l.b16 %v2506
    %v3484 = vunpack.c.l.b16 %v2507
    %v3485 = vunpack.c.h.b16 %v2507
    %v3486 = vunpack.c.l.b16 %v2508
    %v3487 = vunpack.c.h.b16 %v2508
    %v3488 = vunpack.c.l.b16 %v2509
    %v3489 = vunpack.c.h.b16 %v2509
    %v3490 = vunpack.c.l.b16 %v2510
    %v3491 = vunpack.c.l.b16 %v2511
    %v3492 = vunpack.c.h.b16 %v2511
    %v3493 = vunpack.c.l.b16 %v2512
    %v3494 = vunpack.c.h.b16 %v2512
    %v3495 = vunpack.c.l.b16 %v2513
    %v3496 = vunpack.c.h.b16 %v2513
    %v3497 = vunpack.c.l.b16 %v2514
    %v3498 = vunpack.c.l.b16 %v2515
    %v3499 = vunpack.c.h.b16 %v2515
    %v3500 = vunpack.c.l.b16 %v2516
    %v3501 = vunpack.c.h.b16 %v2516
    %v3502 = vunpack.c.l.b16 %v2517
    %v3503 = vunpack.c.h.b16 %v2517
    %v3504 = vunpack.c.l.b16 %v2518
    %v3505 = vunpack.c.l.b16 %v2519
    %v3506 = vunpack.c.h.b16 %v2519
    %v3507 = vunpack.c.l.b16 %v2520
    %v3508 = vunpack.c.h.b16 %v2520
    %v3509 = vunpack.c.l.b16 %v2521
    %v3510 = vunpack.c.h.b16 %v2521
    %v3511 = vunpack.c.l.b16 %v2522
    %v3512 = vunpack.c.l.b16 %v2523
    %v3513 = vunpack.c.h.b16 %v2523
    %v3514 = vunpack.c.l.b16 %v2524
    %v3515 = vunpack.c.h.b16 %v2524
    %v3516 = vunpack.c.l.b16 %v2525
    %v3517 = vunpack.c.h.b16 %v2525
    %v3518 = vunpack.c.l.b16 %v2526
    %v3519 = vunpack.c.l.b16 %v2527
    %v3520 = vunpack.c.h.b16 %v2527
    %v3521 = vunpack.c.l.b16 %v2528
    %v3522 = vunpack.c.h.b16 %v2528
    %v3523 = vunpack.c.l.b16 %v2529
    %v3524 = vunpack.c.h.b16 %v2529
    %v3525 = vunpack.c.l.b16 %v2530
    %v3526 = vunpack.c.l.b16 %v2531
    %v3527 = vunpack.c.h.b16 %v2531
    %v3528 = vunpack.c.l.b16 %v2532
    %v3529 = vunpack.c.h.b16 %v2532
    %v3530 = vunpack.c.l.b16 %v2533
    %v3531 = vunpack.c.h.b16 %v2533
    %v3532 = vunpack.c.l.b16 %v2534
    %v3533 = vunpack.c.l.b16 %v2535
    %v3534 = vunpack.c.h.b16 %v2535
    %v3535 = vunpack.c.l.b16 %v2536
    %v3536 = vunpack.c.h.b16 %v2536
    %v3537 = vunpack.c.l.b16 %v2537
    %v3538 = vunpack.c.h.b16 %v2537
    %v3539 = vunpack.c.l.b16 %v2538
    %v3540 = vunpack.c.l.b16 %v2539
    %v3541 = vunpack.c.h.b16 %v2539
    %v3542 = vunpack.c.l.b16 %v2540
    %v3543 = vunpack.c.h.b16 %v2540
    %v3544 = vunpack.c.l.b16 %v2541
    %v3545 = vunpack.c.h.b16 %v2541
    %v3546 = vunpack.c.l.b16 %v2542
    %v3547 = vunpack.c.l.b16 %v2543
    %v3548 = vunpack.c.h.b16 %v2543
    %v3549 = vunpack.c.l.b16 %v2544
    %v3550 = vunpack.c.h.b16 %v2544
    %v3551 = vunpack.c.l.b16 %v2545
    %v3552 = vunpack.c.h.b16 %v2545
    %v3553 = vunpack.c.l.b16 %v2546
    %v3554 = vunpack.c.l.b16 %v2547
    %v3555 = vunpack.c.h.b16 %v2547
    %v3556 = vunpack.c.l.b16 %v2548
    %v3557 = vunpack.c.h.b16 %v2548
    %v3558 = vunpack.c.l.b16 %v2549
    %v3559 = vunpack.c.h.b16 %v2549
    %v3560 = vunpack.c.l.b16 %v2550
    %v3561 = vunpack.c.l.b16 %v2551
    %v3562 = vunpack.c.h.b16 %v2551
    %v3563 = vunpack.c.l.b16 %v2552
    %v3564 = vunpack.c.h.b16 %v2552
    %v3565 = vunpack.c.l.b16 %v2553
    %v3566 = vunpack.c.h.b16 %v2553
    %v3567 = vunpack.c.l.b16 %v2554
    %v3568 = vunpack.c.l.b16 %v2555
    %v3569 = vunpack.c.h.b16 %v2555
    %v3570 = vunpack.c.l.b16 %v2556
    %v3571 = vunpack.c.h.b16 %v2556
    %v3572 = vunpack.c.l.b16 %v2557
    %v3573 = vunpack.c.h.b16 %v2557
    %v3574 = vunpack.c.l.b16 %v2558
    %v3575 = vunpack.c.l.b16 %v2559
    %v3576 = vunpack.c.h.b16 %v2559
    %v3577 = vunpack.c.l.b16 %v2560
    %v3578 = vunpack.c.h.b16 %v2560
    %v3579 = vunpack.c.l.b16 %v2561
    %v3580 = vunpack.c.h.b16 %v2561
    %v3581 = vunpack.c.l.b16 %v2562
    %v3582 = vunpack.c.l.b16 %v2563
    %v3583 = vunpack.c.h.b16 %v2563
    %v3584 = vunpack.c.l.b16 %v2564
    %v3585 = vunpack.c.h.b16 %v2564
    %v3586 = vunpack.c.l.b16 %v2565
    %v3587 = vunpack.c.h.b16 %v2565
    %v3588 = vunpack.c.l.b16 %v2566
    %v3589 = vunpack.c.l.b16 %v2567
    %v3590 = vunpack.c.h.b16 %v2567
    %v3591 = vunpack.c.l.b16 %v2568
    %v3592 = vunpack.c.h.b16 %v2568
    %v3593 = vunpack.c.l.b16 %v2569
    %v3594 = vunpack.c.h.b16 %v2569
    %v3595 = vunpack.c.l.b16 %v2570
    %v3596 = vunpack.c.l.b16 %v2571
    %v3597 = vunpack.c.h.b16 %v2571
    %v3598 = vunpack.c.l.b16 %v2572
    %v3599 = vunpack.c.h.b16 %v2572
    %v3600 = vunpack.c.l.b16 %v2573
    %v3601 = vunpack.c.h.b16 %v2573
    %v3602 = vunpack.c.l.b16 %v2574
    %v3603 = vunpack.c.l.b16 %v2575
    %v3604 = vunpack.c.h.b16 %v2575
    %v3605 = vunpack.c.l.b16 %v2576
    %v3606 = vunpack.c.h.b16 %v2576
    %v3607 = vunpack.c.l.b16 %v2577
    %v3608 = vunpack.c.h.b16 %v2577
    %v3609 = vunpack.c.l.b16 %v2578
    %v3610 = vunpack.c.l.b16 %v2579
    %v3611 = vunpack.c.h.b16 %v2579
    %v3612 = vunpack.c.l.b16 %v2580
    %v3613 = vunpack.c.h.b16 %v2580
    %v3614 = vunpack.c.l.b16 %v2581
    %v3615 = vunpack.c.h.b16 %v2581
    %v3616 = vunpack.c.l.b16 %v2582
    %v3617 = vunpack.c.l.b16 %v2583
    %v3618 = vunpack.c.h.b16 %v2583
    %v3619 = vunpack.c.l.b16 %v2584
    %v3620 = vunpack.c.h.b16 %v2584
    %v3621 = vunpack.c.l.b16 %v2585
    %v3622 = vunpack.c.h.b16 %v2585
    %v3623 = vunpack.c.l.b16 %v2586
    %v3624 = vunpack.c.l.b16 %v2587
    %v3625 = vunpack.c.h.b16 %v2587
    %v3626 = vunpack.c.l.b16 %v2588
    %v3627 = vunpack.c.h.b16 %v2588
    %v3628 = vunpack.c.l.b16 %v2589
    %v3629 = vunpack.c.h.b16 %v2589
    %v3630 = vunpack.c.l.b16 %v2590
    %v3631 = vunpack.c.l.b16 %v2591
    %v3632 = vunpack.c.h.b16 %v2591
    %v3633 = vunpack.c.l.b16 %v2592
    %v3634 = vunpack.c.h.b16 %v2592
    %v3635 = vunpack.c.l.b16 %v2593
    %v3636 = vunpack.c.h.b16 %v2593
    %v3637 = vunpack.c.l.b16 %v2594
    %v3638 = vunpack.c.l.b16 %v2595
    %v3639 = vunpack.c.h.b16 %v2595
    %v3640 = vunpack.c.l.b16 %v2596
    %v3641 = vunpack.c.h.b16 %v2596
    %v3642 = vunpack.c.l.b16 %v2597
    %v3643 = vunpack.c.h.b16 %v2597
    %v3644 = vunpack.c.l.b16 %v2598
    %v3645 = vunpack.c.l.b16 %v2599
    %v3646 = vunpack.c.h.b16 %v2599
    %v3647 = vunpack.c.l.b16 %v2600
    %v3648 = vunpack.c.h.b16 %v2600
    %v3649 = vunpack.c.l.b16 %v2601
    %v3650 = vunpack.c.h.b16 %v2601
    %v3651 = vunpack.c.l.b16 %v2602
    %v3652 = vunpack.c.l.b16 %v2603
    %v3653 = vunpack.c.h.b16 %v2603
    %v3654 = vunpack.c.l.b16 %v2604
    %v3655 = vunpack.c.h.b16 %v2604
    %v3656 = vunpack.c.l.b16 %v2605
    %v3657 = vunpack.c.h.b16 %v2605
    %v3658 = vunpack.c.l.b16 %v2606
    %v3659 = vunpack.c.l.b16 %v2607
    %v3660 = vunpack.c.h.b16 %v2607
    %v3661 = vunpack.c.l.b16 %v2608
    %v3662 = vunpack.c.h.b16 %v2608
    %v3663 = vunpack.c.l.b16 %v2609
    %v3664 = vunpack.c.h.b16 %v2609
    %v3665 = vunpack.c.l.b16 %v2610
    %v3666 = vunpack.c.l.b16 %v2611
    %v3667 = vunpack.c.h.b16 %v2611
    %v3668 = vunpack.c.l.b16 %v2612
    %v3669 = vunpack.c.h.b16 %v2612
    %v3670 = vunpack.c.l.b16 %v2613
    %v3671 = vunpack.c.h.b16 %v2613
    %v3672 = vunpack.c.l.b16 %v2614
    %v3673 = vunpack.c.l.b16 %v2615
    %v3674 = vunpack.c.h.b16 %v2615
    %v3675 = vunpack.c.l.b16 %v2616
    %v3676 = vunpack.c.h.b16 %v2616
    %v3677 = vunpack.c.l.b16 %v2617
    %v3678 = vunpack.c.h.b16 %v2617
    %v3679 = vunpack.c.l.b16 %v2618
    %v3680 = vunpack.c.l.b16 %v2619
    %v3681 = vunpack.c.h.b16 %v2619
    %v3682 = vunpack.c.l.b16 %v2620
    %v3683 = vunpack.c.h.b16 %v2620
    %v3684 = vunpack.c.l.b16 %v2621
    %v3685 = vunpack.c.h.b16 %v2621
    %v3686 = vunpack.c.l.b16 %v2622
    %v3687 = vunpack.c.l.b16 %v2623
    %v3688 = vunpack.c.h.b16 %v2623
    %v3689 = vunpack.c.l.b16 %v2624
    %v3690 = vunpack.c.h.b16 %v2624
    %v3691 = vunpack.c.l.b16 %v2625
    %v3692 = vunpack.c.h.b16 %v2625
    %v3693 = vunpack.c.l.b16 %v2626
    %v3694 = vunpack.c.l.b16 %v2627
    %v3695 = vunpack.c.h.b16 %v2627
    %v3696 = vunpack.c.l.b16 %v2628
    %v3697 = vunpack.c.h.b16 %v2628
    %v3698 = vunpack.c.l.b16 %v2629
    %v3699 = vunpack.c.h.b16 %v2629
    %v3700 = vunpack.c.l.b16 %v2630
    %v3701 = vunpack.c.l.b16 %v2631
    %v3702 = vunpack.c.h.b16 %v2631
    %v3703 = vunpack.c.l.b16 %v2632
    %v3704 = vunpack.c.h.b16 %v2632
    %v3705 = vunpack.c.l.b16 %v2633
    %v3706 = vunpack.c.h.b16 %v2633
    %v3707 = vunpack.c.l.b16 %v2634
    %v3708 = vunpack.c.l.b16 %v2635
    %v3709 = vunpack.c.h.b16 %v2635
    %v3710 = vunpack.c.l.b16 %v2636
    %v3711 = vunpack.c.h.b16 %v2636
    %v3712 = vunpack.c.l.b16 %v2637
    %v3713 = vunpack.c.h.b16 %v2637
    %v3714 = vunpack.c.l.b16 %v2638
    %v3715 = vunpack.c.l.b16 %v2639
    %v3716 = vunpack.c.h.b16 %v2639
    %v3717 = vunpack.c.l.b16 %v2640
    %v3718 = vunpack.c.h.b16 %v2640
    %v3719 = vunpack.c.l.b16 %v2641
    %v3720 = vunpack.c.h.b16 %v2641
    %v3721 = vunpack.c.l.b16 %v2642
    %v3722 = vunpack.c.l.b16 %v2643
    %v3723 = vunpack.c.h.b16 %v2643
    %v3724 = vunpack.c.l.b16 %v2644
    %v3725 = vunpack.c.h.b16 %v2644
    %v3726 = vunpack.c.l.b16 %v2645
    %v3727 = vunpack.c.h.b16 %v2645
    %v3728 = vunpack.c.l.b16 %v2646
    %v3729 = vunpack.c.l.b16 %v2647
    %v3730 = vunpack.c.h.b16 %v2647
    %v3731 = vunpack.c.l.b16 %v2648
    %v3732 = vunpack.c.h.b16 %v2648
    %v3733 = vunpack.c.l.b16 %v2649
    %v3734 = vunpack.c.h.b16 %v2649
    %v3735 = vunpack.c.l.b16 %v2650
    %v3736 = vunpack.c.l.b16 %v2651
    %v3737 = vunpack.c.h.b16 %v2651
    %v3738 = vunpack.c.l.b16 %v2652
    %v3739 = vunpack.c.h.b16 %v2652
    %v3740 = vunpack.c.l.b16 %v2653
    %v3741 = vunpack.c.h.b16 %v2653
    %v3742 = vunpack.c.l.b16 %v2654
    %v3743 = vunpack.c.l.b16 %v2655
    %v3744 = vunpack.c.h.b16 %v2655
    %v3745 = vunpack.c.l.b16 %v2656
    %v3746 = vunpack.c.h.b16 %v2656
    %v3747 = vunpack.c.l.b16 %v2657
    %v3748 = vunpack.c.h.b16 %v2657
    %v3749 = vunpack.c.l.b16 %v2658
    %v3750 = vunpack.c.l.b16 %v2659
    %v3751 = vunpack.c.h.b16 %v2659
    %v3752 = vunpack.c.l.b16 %v2660
    %v3753 = vunpack.c.h.b16 %v2660
    %v3754 = vunpack.c.l.b16 %v2661
    %v3755 = vunpack.c.h.b16 %v2661
    %v3756 = vunpack.c.l.b16 %v2662
    %v3757 = vpack.c.b16 %v3078, %v3071
    %v3758 = vpack.c.b16 %v3079, %v3072
    %v3759 = vpack.c.b16 %v3080, %v3073
    %v3760 = vpack.c.b16 %v3081, %v3074
    %v3761 = vpack.c.b16 %v3082, %v3075
    %v3762 = vpack.c.b16 %v3083, %v3076
    %v3763 = vpack.c.b16 %v3084, %v3077
    %v3764 = vpack.c.b16 %v3092, %v3085
    %v3765 = vpack.c.b16 %v3093, %v3086
    %v3766 = vpack.c.b16 %v3094, %v3087
    %v3767 = vpack.c.b16 %v3095, %v3088
    %v3768 = vpack.c.b16 %v3096, %v3089
    %v3769 = vpack.c.b16 %v3097, %v3090
    %v3770 = vpack.c.b16 %v3098, %v3091
    %v3771 = vpack.c.b16 %v3106, %v3099
    %v3772 = vpack.c.b16 %v3107, %v3100
    %v3773 = vpack.c.b16 %v3108, %v3101
    %v3774 = vpack.c.b16 %v3109, %v3102
    %v3775 = vpack.c.b16 %v3110, %v3103
    %v3776 = vpack.c.b16 %v3111, %v3104
    %v3777 = vpack.c.b16 %v3112, %v3105
    %v3778 = vpack.c.b16 %v3120, %v3113
    %v3779 = vpack.c.b16 %v3121, %v3114
    %v3780 = vpack.c.b16 %v3122, %v3115
    %v3781 = vpack.c.b16 %v3123, %v3116
    %v3782 = vpack.c.b16 %v3124, %v3117
    %v3783 = vpack.c.b16 %v3125, %v3118
    %v3784 = vpack.c.b16 %v3126, %v3119
    %v3785 = vpack.c.b16 %v3134, %v3127
    %v3786 = vpack.c.b16 %v3135, %v3128
    %v3787 = vpack.c.b16 %v3136, %v3129
    %v3788 = vpack.c.b16 %v3137, %v3130
    %v3789 = vpack.c.b16 %v3138, %v3131
    %v3790 = vpack.c.b16 %v3139, %v3132
    %v3791 = vpack.c.b16 %v3140, %v3133
    %v3792 = vpack.c.b16 %v3148, %v3141
    %v3793 = vpack.c.b16 %v3149, %v3142
    %v3794 = vpack.c.b16 %v3150, %v3143
    %v3795 = vpack.c.b16 %v3151, %v3144
    %v3796 = vpack.c.b16 %v3152, %v3145
    %v3797 = vpack.c.b16 %v3153, %v3146
    %v3798 = vpack.c.b16 %v3154, %v3147
    %v3799 = vpack.c.b16 %v3162, %v3155
    %v3800 = vpack.c.b16 %v3163, %v3156
    %v3801 = vpack.c.b16 %v3164, %v3157
    %v3802 = vpack.c.b16 %v3165, %v3158
    %v3803 = vpack.c.b16 %v3166, %v3159
    %v3804 = vpack.c.b16 %v3167, %v3160
    %v3805 = vpack.c.b16 %v3168, %v3161
    %v3806 = vpack.c.b16 %v3176, %v3169
    %v3807 = vpack.c.b16 %v3177, %v3170
    %v3808 = vpack.c.b16 %v3178, %v3171
    %v3809 = vpack.c.b16 %v3179, %v3172
    %v3810 = vpack.c.b16 %v3180, %v3173
    %v3811 = vpack.c.b16 %v3181, %v3174
    %v3812 = vpack.c.b16 %v3182, %v3175
    %v3813 = vpack.c.b16 %v3190, %v3183
    %v3814 = vpack.c.b16 %v3191, %v3184
    %v3815 = vpack.c.b16 %v3192, %v3185
    %v3816 = vpack.c.b16 %v3193, %v3186
    %v3817 = vpack.c.b16 %v3194, %v3187
    %v3818 = vpack.c.b16 %v3195, %v3188
    %v3819 = vpack.c.b16 %v3196, %v3189
    %v3820 = vpack.c.b16 %v3204, %v3197
    %v3821 = vpack.c.b16 %v3205, %v3198
    %v3822 = vpack.c.b16 %v3206, %v3199
    %v3823 = vpack.c.b16 %v3207, %v3200
    %v3824 = vpack.c.b16 %v3208, %v3201
    %v3825 = vpack.c.b16 %v3209, %v3202
    %v3826 = vpack.c.b16 %v3210, %v3203
    %v3827 = vpack.c.b16 %v3218, %v3211
    %v3828 = vpack.c.b16 %v3219, %v3212
    %v3829 = vpack.c.b16 %v3220, %v3213
    %v3830 = vpack.c.b16 %v3221, %v3214
    %v3831 = vpack.c.b16 %v3222, %v3215
    %v3832 = vpack.c.b16 %v3223, %v3216
    %v3833 = vpack.c.b16 %v3224, %v3217
    %v3834 = vpack.c.b16 %v3232, %v3225
    %v3835 = vpack.c.b16 %v3233, %v3226
    %v3836 = vpack.c.b16 %v3234, %v3227
    %v3837 = vpack.c.b16 %v3235, %v3228
    %v3838 = vpack.c.b16 %v3236, %v3229
    %v3839 = vpack.c.b16 %v3237, %v3230
    %v3840 = vpack.c.b16 %v3238, %v3231
    %v3841 = vpack.c.b16 %v3246, %v3239
    %v3842 = vpack.c.b16 %v3247, %v3240
    %v3843 = vpack.c.b16 %v3248, %v3241
    %v3844 = vpack.c.b16 %v3249, %v3242
    %v3845 = vpack.c.b16 %v3250, %v3243
    %v3846 = vpack.c.b16 %v3251, %v3244
    %v3847 = vpack.c.b16 %v3252, %v3245
    %v3848 = vpack.c.b16 %v3260, %v3253
    %v3849 = vpack.c.b16 %v3261, %v3254
    %v3850 = vpack.c.b16 %v3262, %v3255
    %v3851 = vpack.c.b16 %v3263, %v3256
    %v3852 = vpack.c.b16 %v3264, %v3257
    %v3853 = vpack.c.b16 %v3265, %v3258
    %v3854 = vpack.c.b16 %v3266, %v3259
    %v3855 = vpack.c.b16 %v3274, %v3267
    %v3856 = vpack.c.b16 %v3275, %v3268
    %v3857 = vpack.c.b16 %v3276, %v3269
    %v3858 = vpack.c.b16 %v3277, %v3270
    %v3859 = vpack.c.b16 %v3278, %v3271
    %v3860 = vpack.c.b16 %v3279, %v3272
    %v3861 = vpack.c.b16 %v3280, %v3273
    %v3862 = vpack.c.b16 %v3288, %v3281
    %v3863 = vpack.c.b16 %v3289, %v3282
    %v3864 = vpack.c.b16 %v3290, %v3283
    %v3865 = vpack.c.b16 %v3291, %v3284
    %v3866 = vpack.c.b16 %v3292, %v3285
    %v3867 = vpack.c.b16 %v3293, %v3286
    %v3868 = vpack.c.b16 %v3294, %v3287
    %v3869 = vpack.c.b16 %v3302, %v3295
    %v3870 = vpack.c.b16 %v3303, %v3296
    %v3871 = vpack.c.b16 %v3304, %v3297
    %v3872 = vpack.c.b16 %v3305, %v3298
    %v3873 = vpack.c.b16 %v3306, %v3299
    %v3874 = vpack.c.b16 %v3307, %v3300
    %v3875 = vpack.c.b16 %v3308, %v3301
    %v3876 = vpack.c.b16 %v3316, %v3309
    %v3877 = vpack.c.b16 %v3317, %v3310
    %v3878 = vpack.c.b16 %v3318, %v3311
    %v3879 = vpack.c.b16 %v3319, %v3312
    %v3880 = vpack.c.b16 %v3320, %v3313
    %v3881 = vpack.c.b16 %v3321, %v3314
    %v3882 = vpack.c.b16 %v3322, %v3315
    %v3883 = vpack.c.b16 %v3330, %v3323
    %v3884 = vpack.c.b16 %v3331, %v3324
    %v3885 = vpack.c.b16 %v3332, %v3325
    %v3886 = vpack.c.b16 %v3333, %v3326
    %v3887 = vpack.c.b16 %v3334, %v3327
    %v3888 = vpack.c.b16 %v3335, %v3328
    %v3889 = vpack.c.b16 %v3336, %v3329
    %v3890 = vpack.c.b16 %v3344, %v3337
    %v3891 = vpack.c.b16 %v3345, %v3338
    %v3892 = vpack.c.b16 %v3346, %v3339
    %v3893 = vpack.c.b16 %v3347, %v3340
    %v3894 = vpack.c.b16 %v3348, %v3341
    %v3895 = vpack.c.b16 %v3349, %v3342
    %v3896 = vpack.c.b16 %v3350, %v3343
    %v3897 = vpack.c.b16 %v3358, %v3351
    %v3898 = vpack.c.b16 %v3359, %v3352
    %v3899 = vpack.c.b16 %v3360, %v3353
    %v3900 = vpack.c.b16 %v3361, %v3354
    %v3901 = vpack.c.b16 %v3362, %v3355
    %v3902 = vpack.c.b16 %v3363, %v3356
    %v3903 = vpack.c.b16 %v3364, %v3357
    %v3904 = vpack.c.b16 %v3372, %v3365
    %v3905 = vpack.c.b16 %v3373, %v3366
    %v3906 = vpack.c.b16 %v3374, %v3367
    %v3907 = vpack.c.b16 %v3375, %v3368
    %v3908 = vpack.c.b16 %v3376, %v3369
    %v3909 = vpack.c.b16 %v3377, %v3370
    %v3910 = vpack.c.b16 %v3378, %v3371
    %v3911 = vpack.c.b16 %v3386, %v3379
    %v3912 = vpack.c.b16 %v3387, %v3380
    %v3913 = vpack.c.b16 %v3388, %v3381
    %v3914 = vpack.c.b16 %v3389, %v3382
    %v3915 = vpack.c.b16 %v3390, %v3383
    %v3916 = vpack.c.b16 %v3391, %v3384
    %v3917 = vpack.c.b16 %v3392, %v3385
    %v3918 = vpack.c.b16 %v3400, %v3393
    %v3919 = vpack.c.b16 %v3401, %v3394
    %v3920 = vpack.c.b16 %v3402, %v3395
    %v3921 = vpack.c.b16 %v3403, %v3396
    %v3922 = vpack.c.b16 %v3404, %v3397
    %v3923 = vpack.c.b16 %v3405, %v3398
    %v3924 = vpack.c.b16 %v3406, %v3399
    %v3925 = vpack.c.b16 %v3414, %v3407
    %v3926 = vpack.c.b16 %v3415, %v3408
    %v3927 = vpack.c.b16 %v3416, %v3409
    %v3928 = vpack.c.b16 %v3417, %v3410
    %v3929 = vpack.c.b16 %v3418, %v3411
    %v3930 = vpack.c.b16 %v3419, %v3412
    %v3931 = vpack.c.b16 %v3420, %v3413
    %v3932 = vpack.c.b16 %v3428, %v3421
    %v3933 = vpack.c.b16 %v3429, %v3422
    %v3934 = vpack.c.b16 %v3430, %v3423
    %v3935 = vpack.c.b16 %v3431, %v3424
    %v3936 = vpack.c.b16 %v3432, %v3425
    %v3937 = vpack.c.b16 %v3433, %v3426
    %v3938 = vpack.c.b16 %v3434, %v3427
    %v3939 = vpack.c.b16 %v3442, %v3435
    %v3940 = vpack.c.b16 %v3443, %v3436
    %v3941 = vpack.c.b16 %v3444, %v3437
    %v3942 = vpack.c.b16 %v3445, %v3438
    %v3943 = vpack.c.b16 %v3446, %v3439
    %v3944 = vpack.c.b16 %v3447, %v3440
    %v3945 = vpack.c.b16 %v3448, %v3441
    %v3946 = vpack.c.b16 %v3456, %v3449
    %v3947 = vpack.c.b16 %v3457, %v3450
    %v3948 = vpack.c.b16 %v3458, %v3451
    %v3949 = vpack.c.b16 %v3459, %v3452
    %v3950 = vpack.c.b16 %v3460, %v3453
    %v3951 = vpack.c.b16 %v3461, %v3454
    %v3952 = vpack.c.b16 %v3462, %v3455
    %v3953 = vpack.c.b16 %v3470, %v3463
    %v3954 = vpack.c.b16 %v3471, %v3464
    %v3955 = vpack.c.b16 %v3472, %v3465
    %v3956 = vpack.c.b16 %v3473, %v3466
    %v3957 = vpack.c.b16 %v3474, %v3467
    %v3958 = vpack.c.b16 %v3475, %v3468
    %v3959 = vpack.c.b16 %v3476, %v3469
    %v3960 = vpack.c.b16 %v3484, %v3477
    %v3961 = vpack.c.b16 %v3485, %v3478
    %v3962 = vpack.c.b16 %v3486, %v3479
    %v3963 = vpack.c.b16 %v3487, %v3480
    %v3964 = vpack.c.b16 %v3488, %v3481
    %v3965 = vpack.c.b16 %v3489, %v3482
    %v3966 = vpack.c.b16 %v3490, %v3483
    %v3967 = vpack.c.b16 %v3498, %v3491
    %v3968 = vpack.c.b16 %v3499, %v3492
    %v3969 = vpack.c.b16 %v3500, %v3493
    %v3970 = vpack.c.b16 %v3501, %v3494
    %v3971 = vpack.c.b16 %v3502, %v3495
    %v3972 = vpack.c.b16 %v3503, %v3496
    %v3973 = vpack.c.b16 %v3504, %v3497
    %v3974 = vpack.c.b16 %v3512, %v3505
    %v3975 = vpack.c.b16 %v3513, %v3506
    %v3976 = vpack.c.b16 %v3514, %v3507
    %v3977 = vpack.c.b16 %v3515, %v3508
    %v3978 = vpack.c.b16 %v3516, %v3509
    %v3979 = vpack.c.b16 %v3517, %v3510
    %v3980 = vpack.c.b16 %v3518, %v3511
    %v3981 = vpack.c.b16 %v3526, %v3519
    %v3982 = vpack.c.b16 %v3527, %v3520
    %v3983 = vpack.c.b16 %v3528, %v3521
    %v3984 = vpack.c.b16 %v3529, %v3522
    %v3985 = vpack.c.b16 %v3530, %v3523
    %v3986 = vpack.c.b16 %v3531, %v3524
    %v3987 = vpack.c.b16 %v3532, %v3525
    %v3988 = vpack.c.b16 %v3540, %v3533
    %v3989 = vpack.c.b16 %v3541, %v3534
    %v3990 = vpack.c.b16 %v3542, %v3535
    %v3991 = vpack.c.b16 %v3543, %v3536
    %v3992 = vpack.c.b16 %v3544, %v3537
    %v3993 = vpack.c.b16 %v3545, %v3538
    %v3994 = vpack.c.b16 %v3546, %v3539
    %v3995 = vpack.c.b16 %v3554, %v3547
    %v3996 = vpack.c.b16 %v3555, %v3548
    %v3997 = vpack.c.b16 %v3556, %v3549
    %v3998 = vpack.c.b16 %v3557, %v3550
    %v3999 = vpack.c.b16 %v3558, %v3551
    %v4000 = vpack.c.b16 %v3559, %v3552
    %v4001 = vpack.c.b16 %v3560, %v3553
    %v4002 = vpack.c.b16 %v3568, %v3561
    %v4003 = vpack.c.b16 %v3569, %v3562
    %v4004 = vpack.c.b16 %v3570, %v3563
    %v4005 = vpack.c.b16 %v3571, %v3564
    %v4006 = vpack.c.b16 %v3572, %v3565
    %v4007 = vpack.c.b16 %v3573, %v3566
    %v4008 = vpack.c.b16 %v3574, %v3567
    %v4009 = vpack.c.b16 %v3582, %v3575
    %v4010 = vpack.c.b16 %v3583, %v3576
    %v4011 = vpack.c.b16 %v3584, %v3577
    %v4012 = vpack.c.b16 %v3585, %v3578
    %v4013 = vpack.c.b16 %v3586, %v3579
    %v4014 = vpack.c.b16 %v3587, %v3580
    %v4015 = vpack.c.b16 %v3588, %v3581
    %v4016 = vpack.c.b16 %v3596, %v3589
    %v4017 = vpack.c.b16 %v3597, %v3590
    %v4018 = vpack.c.b16 %v3598, %v3591
    %v4019 = vpack.c.b16 %v3599, %v3592
    %v4020 = vpack.c.b16 %v3600, %v3593
    %v4021 = vpack.c.b16 %v3601, %v3594
    %v4022 = vpack.c.b16 %v3602, %v3595
    %v4023 = vpack.c.b16 %v3610, %v3603
    %v4024 = vpack.c.b16 %v3611, %v3604
    %v4025 = vpack.c.b16 %v3612, %v3605
    %v4026 = vpack.c.b16 %v3613, %v3606
    %v4027 = vpack.c.b16 %v3614, %v3607
    %v4028 = vpack.c.b16 %v3615, %v3608
    %v4029 = vpack.c.b16 %v3616, %v3609
    %v4030 = vpack.c.b16 %v3624, %v3617
    %v4031 = vpack.c.b16 %v3625, %v3618
    %v4032 = vpack.c.b16 %v3626, %v3619
    %v4033 = vpack.c.b16 %v3627, %v3620
    %v4034 = vpack.c.b16 %v3628, %v3621
    %v4035 = vpack.c.b16 %v3629, %v3622
    %v4036 = vpack.c.b16 %v3630, %v3623
    %v4037 = vpack.c.b16 %v3638, %v3631
    %v4038 = vpack.c.b16 %v3639, %v3632
    %v4039 = vpack.c.b16 %v3640, %v3633
    %v4040 = vpack.c.b16 %v3641, %v3634
    %v4041 = vpack.c.b16 %v3642, %v3635
    %v4042 = vpack.c.b16 %v3643, %v3636
    %v4043 = vpack.c.b16 %v3644, %v3637
    %v4044 = vpack.c.b16 %v3652, %v3645
    %v4045 = vpack.c.b16 %v3653, %v3646
    %v4046 = vpack.c.b16 %v3654, %v3647
    %v4047 = vpack.c.b16 %v3655, %v3648
    %v4048 = vpack.c.b16 %v3656, %v3649
    %v4049 = vpack.c.b16 %v3657, %v3650
    %v4050 = vpack.c.b16 %v3658, %v3651
    %v4051 = vpack.c.b16 %v3666, %v3659
    %v4052 = vpack.c.b16 %v3667, %v3660
    %v4053 = vpack.c.b16 %v3668, %v3661
    %v4054 = vpack.c.b16 %v3669, %v3662
    %v4055 = vpack.c.b16 %v3670, %v3663
    %v4056 = vpack.c.b16 %v3671, %v3664
    %v4057 = vpack.c.b16 %v3672, %v3665
    %v4058 = vpack.c.b16 %v3680, %v3673
    %v4059 = vpack.c.b16 %v3681, %v3674
    %v4060 = vpack.c.b16 %v3682, %v3675
    %v4061 = vpack.c.b16 %v3683, %v3676
    %v4062 = vpack.c.b16 %v3684, %v3677
    %v4063 = vpack.c.b16 %v3685, %v3678
    %v4064 = vpack.c.b16 %v3686, %v3679
    %v4065 = vpack.c.b16 %v3694, %v3687
    %v4066 = vpack.c.b16 %v3695, %v3688
    %v4067 = vpack.c.b16 %v3696, %v3689
    %v4068 = vpack.c.b16 %v3697, %v3690
    %v4069 = vpack.c.b16 %v3698, %v3691
    %v4070 = vpack.c.b16 %v3699, %v3692
    %v4071 = vpack.c.b16 %v3700, %v3693
    %v4072 = vpack.c.b16 %v3708, %v3701
    %v4073 = vpack.c.b16 %v3709, %v3702
    %v4074 = vpack.c.b16 %v3710, %v3703
    %v4075 = vpack.c.b16 %v3711, %v3704
    %v4076 = vpack.c.b16 %v3712, %v3705
    %v4077 = vpack.c.b16 %v3713, %v3706
    %v4078 = vpack.c.b16 %v3714, %v3707
    %v4079 = vpack.c.b16 %v3722, %v3715
    %v4080 = vpack.c.b16 %v3723, %v3716
    %v4081 = vpack.c.b16 %v3724, %v3717
    %v4082 = vpack.c.b16 %v3725, %v3718
    %v4083 = vpack.c.b16 %v3726, %v3719
    %v4084 = vpack.c.b16 %v3727, %v3720
    %v4085 = vpack.c.b16 %v3728, %v3721
    %v4086 = vpack.c.b16 %v3736, %v3729
    %v4087 = vpack.c.b16 %v3737, %v3730
    %v4088 = vpack.c.b16 %v3738, %v3731
    %v4089 = vpack.c.b16 %v3739, %v3732
    %v4090 = vpack.c.b16 %v3740, %v3733
    %v4091 = vpack.c.b16 %v3741, %v3734
    %v4092 = vpack.c.b16 %v3742, %v3735
    %v4093 = vpack.c.b16 %v3750, %v3743
    %v4094 = vpack.c.b16 %v3751, %v3744
    %v4095 = vpack.c.b16 %v3752, %v3745
    %v4096 = vpack.c.b16 %v3753, %v3746
    %v4097 = vpack.c.b16 %v3754, %v3747
    %v4098 = vpack.c.b16 %v3755, %v3748
    %v4099 = vpack.c.b16 %v3756, %v3749
    %v4444 = vsel %vm1631, %v2270, 0
    %4446 = vmatpush.bf16.msra.mxu0 %v3806
    %4447 = vmatpush.bf16.msra.mxu0 %v3799
    %4448 = vmatpush.bf16.msra.mxu0 %v3792
    %4449 = vmatpush.bf16.msra.mxu0 %v3785
    %4450 = vmatpush.bf16.msra.mxu0 %v3778
    %4451 = vmatpush.bf16.msra.mxu0 %v3771
    %4452 = vmatpush.bf16.msra.mxu0 %v3764
    %4453 = vmatpush.bf16.msra.mxu0 %v3757
    %4454 = vmatmul.bf16.gmra.mxu0 %v2264
    %v4455 = vpop.f32.mrf.mxu0
    %v4456 = vadd.f32 %v2665, %v4455
    %v4457 = vpop.f32.mrf.mxu0
    %4458 = vdwg.mxu0
    %4459 = vmatpush.bf16.msra.mxu0 %v3862
    %4460 = vmatpush.bf16.msra.mxu0 %v3855
    %4461 = vmatpush.bf16.msra.mxu0 %v3848
    %4462 = vmatpush.bf16.msra.mxu0 %v3841
    %4463 = vmatpush.bf16.msra.mxu0 %v3834
    %4464 = vmatpush.bf16.msra.mxu0 %v3827
    %4465 = vmatpush.bf16.msra.mxu0 %v3820
    %4466 = vmatpush.bf16.msra.mxu0 %v3813
    %4467 = vmatmul.bf16.gmra.mxu0 %v2265
    %v4468 = vpop.f32.mrf.mxu0
    %v4469 = vadd.f32 %v4456, %v4468
    %v4470 = vpop.f32.mrf.mxu0
    %4471 = vdwg.mxu0
    %4472 = vmatpush.bf16.msra.mxu0 %v3918
    %4473 = vmatpush.bf16.msra.mxu0 %v3911
    %4474 = vmatpush.bf16.msra.mxu0 %v3904
    %4475 = vmatpush.bf16.msra.mxu0 %v3897
    %4476 = vmatpush.bf16.msra.mxu0 %v3890
    %4477 = vmatpush.bf16.msra.mxu0 %v3883
    %4478 = vmatpush.bf16.msra.mxu0 %v3876
    %4479 = vmatpush.bf16.msra.mxu0 %v3869
    %4480 = vmatmul.bf16.gmra.mxu0 %v2266
    %v4481 = vpop.f32.mrf.mxu0
    %v4482 = vadd.f32 %v4469, %v4481
    %v4483 = vpop.f32.mrf.mxu0
    %4484 = vdwg.mxu0
    %4485 = vmatpush.bf16.msra.mxu0 %v3974
    %4486 = vmatpush.bf16.msra.mxu0 %v3967
    %4487 = vmatpush.bf16.msra.mxu0 %v3960
    %4488 = vmatpush.bf16.msra.mxu0 %v3953
    %4489 = vmatpush.bf16.msra.mxu0 %v3946
    %4490 = vmatpush.bf16.msra.mxu0 %v3939
    %4491 = vmatpush.bf16.msra.mxu0 %v3932
    %4492 = vmatpush.bf16.msra.mxu0 %v3925
    %4493 = vmatmul.bf16.gmra.mxu0 %v2267
    %v4494 = vpop.f32.mrf.mxu0
    %v4495 = vadd.f32 %v4482, %v4494
    %v4496 = vpop.f32.mrf.mxu0
    %4497 = vdwg.mxu0
    %4498 = vmatpush.bf16.msra.mxu0 %v4030
    %4499 = vmatpush.bf16.msra.mxu0 %v4023
    %4500 = vmatpush.bf16.msra.mxu0 %v4016
    %4501 = vmatpush.bf16.msra.mxu0 %v4009
    %4502 = vmatpush.bf16.msra.mxu0 %v4002
    %4503 = vmatpush.bf16.msra.mxu0 %v3995
    %4504 = vmatpush.bf16.msra.mxu0 %v3988
    %4505 = vmatpush.bf16.msra.mxu0 %v3981
    %4506 = vmatmul.bf16.gmra.mxu0 %v2268
    %v4507 = vpop.f32.mrf.mxu0
    %v4508 = vadd.f32 %v4495, %v4507
    %v4509 = vpop.f32.mrf.mxu0
    %4510 = vdwg.mxu0
    %4511 = vmatpush.bf16.msra.mxu0 %v4086
    %4512 = vmatpush.bf16.msra.mxu0 %v4079
    %4513 = vmatpush.bf16.msra.mxu0 %v4072
    %4514 = vmatpush.bf16.msra.mxu0 %v4065
    %4515 = vmatpush.bf16.msra.mxu0 %v4058
    %4516 = vmatpush.bf16.msra.mxu0 %v4051
    %4517 = vmatpush.bf16.msra.mxu0 %v4044
    %4518 = vmatpush.bf16.msra.mxu0 %v4037
    %4519 = vmatmul.bf16.gmra.mxu0 %v2269
    %v4520 = vpop.f32.mrf.mxu0
    %v4521 = vadd.f32 %v4508, %v4520
    %v4522 = vpop.f32.mrf.mxu0
    %4523 = vdwg.mxu0
    %4524 = vmatpush.bf16.msra.mxu0 0
    %4525 = vmatpush.bf16.msra.mxu0 0
    %4526 = vmatpush.bf16.msra.mxu0 0
    %4527 = vmatpush.bf16.msra.mxu0 0
    %4528 = vmatpush.bf16.msra.mxu0 0
    %4529 = vmatpush.bf16.msra.mxu0 0
    %4530 = vmatpush.bf16.msra.mxu0 0
    %4531 = vmatpush.bf16.msra.mxu0 %v4093
    %4532 = vmatmul.bf16.gmra.mxu0 %v4444
    %v4533 = vpop.f32.mrf.mxu0
    %v4534 = vadd.f32 %v4521, %v4533
    %v4535 = vpop.f32.mrf.mxu0
    %4536 = vdwg.mxu0
    %4537 = vmatpush.bf16.msra.mxu0 %v3807
    %4538 = vmatpush.bf16.msra.mxu0 %v3800
    %4539 = vmatpush.bf16.msra.mxu0 %v3793
    %4540 = vmatpush.bf16.msra.mxu0 %v3786
    %4541 = vmatpush.bf16.msra.mxu0 %v3779
    %4542 = vmatpush.bf16.msra.mxu0 %v3772
    %4543 = vmatpush.bf16.msra.mxu0 %v3765
    %4544 = vmatpush.bf16.msra.mxu0 %v3758
    %4545 = vmatmul.bf16.gmra.mxu0 %v2264
    %v4546 = vpop.f32.mrf.mxu0
    %v4547 = vadd.f32 %v2666, %v4546
    %v4548 = vpop.f32.mrf.mxu0
    %4549 = vdwg.mxu0
    %4550 = vmatpush.bf16.msra.mxu0 %v3863
    %4551 = vmatpush.bf16.msra.mxu0 %v3856
    %4552 = vmatpush.bf16.msra.mxu0 %v3849
    %4553 = vmatpush.bf16.msra.mxu0 %v3842
    %4554 = vmatpush.bf16.msra.mxu0 %v3835
    %4555 = vmatpush.bf16.msra.mxu0 %v3828
    %4556 = vmatpush.bf16.msra.mxu0 %v3821
    %4557 = vmatpush.bf16.msra.mxu0 %v3814
    %4558 = vmatmul.bf16.gmra.mxu0 %v2265
    %v4559 = vpop.f32.mrf.mxu0
    %v4560 = vadd.f32 %v4547, %v4559
    %v4561 = vpop.f32.mrf.mxu0
    %4562 = vdwg.mxu0
    %4563 = vmatpush.bf16.msra.mxu0 %v3919
    %4564 = vmatpush.bf16.msra.mxu0 %v3912
    %4565 = vmatpush.bf16.msra.mxu0 %v3905
    %4566 = vmatpush.bf16.msra.mxu0 %v3898
    %4567 = vmatpush.bf16.msra.mxu0 %v3891
    %4568 = vmatpush.bf16.msra.mxu0 %v3884
    %4569 = vmatpush.bf16.msra.mxu0 %v3877
    %4570 = vmatpush.bf16.msra.mxu0 %v3870
    %4571 = vmatmul.bf16.gmra.mxu0 %v2266
    %v4572 = vpop.f32.mrf.mxu0
    %v4573 = vadd.f32 %v4560, %v4572
    %v4574 = vpop.f32.mrf.mxu0
    %4575 = vdwg.mxu0
    %4576 = vmatpush.bf16.msra.mxu0 %v3975
    %4577 = vmatpush.bf16.msra.mxu0 %v3968
    %4578 = vmatpush.bf16.msra.mxu0 %v3961
    %4579 = vmatpush.bf16.msra.mxu0 %v3954
    %4580 = vmatpush.bf16.msra.mxu0 %v3947
    %4581 = vmatpush.bf16.msra.mxu0 %v3940
    %4582 = vmatpush.bf16.msra.mxu0 %v3933
    %4583 = vmatpush.bf16.msra.mxu0 %v3926
    %4584 = vmatmul.bf16.gmra.mxu0 %v2267
    %v4585 = vpop.f32.mrf.mxu0
    %v4586 = vadd.f32 %v4573, %v4585
    %v4587 = vpop.f32.mrf.mxu0
    %4588 = vdwg.mxu0
    %4589 = vmatpush.bf16.msra.mxu0 %v4031
    %4590 = vmatpush.bf16.msra.mxu0 %v4024
    %4591 = vmatpush.bf16.msra.mxu0 %v4017
    %4592 = vmatpush.bf16.msra.mxu0 %v4010
    %4593 = vmatpush.bf16.msra.mxu0 %v4003
    %4594 = vmatpush.bf16.msra.mxu0 %v3996
    %4595 = vmatpush.bf16.msra.mxu0 %v3989
    %4596 = vmatpush.bf16.msra.mxu0 %v3982
    %4597 = vmatmul.bf16.gmra.mxu0 %v2268
    %v4598 = vpop.f32.mrf.mxu0
    %v4599 = vadd.f32 %v4586, %v4598
    %v4600 = vpop.f32.mrf.mxu0
    %4601 = vdwg.mxu0
    %4602 = vmatpush.bf16.msra.mxu0 %v4087
    %4603 = vmatpush.bf16.msra.mxu0 %v4080
    %4604 = vmatpush.bf16.msra.mxu0 %v4073
    %4605 = vmatpush.bf16.msra.mxu0 %v4066
    %4606 = vmatpush.bf16.msra.mxu0 %v4059
    %4607 = vmatpush.bf16.msra.mxu0 %v4052
    %4608 = vmatpush.bf16.msra.mxu0 %v4045
    %4609 = vmatpush.bf16.msra.mxu0 %v4038
    %4610 = vmatmul.bf16.gmra.mxu0 %v2269
    %v4611 = vpop.f32.mrf.mxu0
    %v4612 = vadd.f32 %v4599, %v4611
    %v4613 = vpop.f32.mrf.mxu0
    %4614 = vdwg.mxu0
    %4615 = vmatpush.bf16.msra.mxu0 0
    %4616 = vmatpush.bf16.msra.mxu0 0
    %4617 = vmatpush.bf16.msra.mxu0 0
    %4618 = vmatpush.bf16.msra.mxu0 0
    %4619 = vmatpush.bf16.msra.mxu0 0
    %4620 = vmatpush.bf16.msra.mxu0 0
    %4621 = vmatpush.bf16.msra.mxu0 0
    %4622 = vmatpush.bf16.msra.mxu0 %v4094
    %4623 = vmatmul.bf16.gmra.mxu0 %v4444
    %v4624 = vpop.f32.mrf.mxu0
    %v4625 = vadd.f32 %v4612, %v4624
    %v4626 = vpop.f32.mrf.mxu0
    %4627 = vdwg.mxu0
    %4628 = vmatpush.bf16.msra.mxu0 %v3808
    %4629 = vmatpush.bf16.msra.mxu0 %v3801
    %4630 = vmatpush.bf16.msra.mxu0 %v3794
    %4631 = vmatpush.bf16.msra.mxu0 %v3787
    %4632 = vmatpush.bf16.msra.mxu0 %v3780
    %4633 = vmatpush.bf16.msra.mxu0 %v3773
    %4634 = vmatpush.bf16.msra.mxu0 %v3766
    %4635 = vmatpush.bf16.msra.mxu0 %v3759
    %4636 = vmatmul.bf16.gmra.mxu0 %v2264
    %v4637 = vpop.f32.mrf.mxu0
    %v4638 = vadd.f32 %v2667, %v4637
    %v4639 = vpop.f32.mrf.mxu0
    %4640 = vdwg.mxu0
    %4641 = vmatpush.bf16.msra.mxu0 %v3864
    %4642 = vmatpush.bf16.msra.mxu0 %v3857
    %4643 = vmatpush.bf16.msra.mxu0 %v3850
    %4644 = vmatpush.bf16.msra.mxu0 %v3843
    %4645 = vmatpush.bf16.msra.mxu0 %v3836
    %4646 = vmatpush.bf16.msra.mxu0 %v3829
    %4647 = vmatpush.bf16.msra.mxu0 %v3822
    %4648 = vmatpush.bf16.msra.mxu0 %v3815
    %4649 = vmatmul.bf16.gmra.mxu0 %v2265
    %v4650 = vpop.f32.mrf.mxu0
    %v4651 = vadd.f32 %v4638, %v4650
    %v4652 = vpop.f32.mrf.mxu0
    %4653 = vdwg.mxu0
    %4654 = vmatpush.bf16.msra.mxu0 %v3920
    %4655 = vmatpush.bf16.msra.mxu0 %v3913
    %4656 = vmatpush.bf16.msra.mxu0 %v3906
    %4657 = vmatpush.bf16.msra.mxu0 %v3899
    %4658 = vmatpush.bf16.msra.mxu0 %v3892
    %4659 = vmatpush.bf16.msra.mxu0 %v3885
    %4660 = vmatpush.bf16.msra.mxu0 %v3878
    %4661 = vmatpush.bf16.msra.mxu0 %v3871
    %4662 = vmatmul.bf16.gmra.mxu0 %v2266
    %v4663 = vpop.f32.mrf.mxu0
    %v4664 = vadd.f32 %v4651, %v4663
    %v4665 = vpop.f32.mrf.mxu0
    %4666 = vdwg.mxu0
    %4667 = vmatpush.bf16.msra.mxu0 %v3976
    %4668 = vmatpush.bf16.msra.mxu0 %v3969
    %4669 = vmatpush.bf16.msra.mxu0 %v3962
    %4670 = vmatpush.bf16.msra.mxu0 %v3955
    %4671 = vmatpush.bf16.msra.mxu0 %v3948
    %4672 = vmatpush.bf16.msra.mxu0 %v3941
    %4673 = vmatpush.bf16.msra.mxu0 %v3934
    %4674 = vmatpush.bf16.msra.mxu0 %v3927
    %4675 = vmatmul.bf16.gmra.mxu0 %v2267
    %v4676 = vpop.f32.mrf.mxu0
    %v4677 = vadd.f32 %v4664, %v4676
    %v4678 = vpop.f32.mrf.mxu0
    %4679 = vdwg.mxu0
    %4680 = vmatpush.bf16.msra.mxu0 %v4032
    %4681 = vmatpush.bf16.msra.mxu0 %v4025
    %4682 = vmatpush.bf16.msra.mxu0 %v4018
    %4683 = vmatpush.bf16.msra.mxu0 %v4011
    %4684 = vmatpush.bf16.msra.mxu0 %v4004
    %4685 = vmatpush.bf16.msra.mxu0 %v3997
    %4686 = vmatpush.bf16.msra.mxu0 %v3990
    %4687 = vmatpush.bf16.msra.mxu0 %v3983
    %4688 = vmatmul.bf16.gmra.mxu0 %v2268
    %v4689 = vpop.f32.mrf.mxu0
    %v4690 = vadd.f32 %v4677, %v4689
    %v4691 = vpop.f32.mrf.mxu0
    %4692 = vdwg.mxu0
    %4693 = vmatpush.bf16.msra.mxu0 %v4088
    %4694 = vmatpush.bf16.msra.mxu0 %v4081
    %4695 = vmatpush.bf16.msra.mxu0 %v4074
    %4696 = vmatpush.bf16.msra.mxu0 %v4067
    %4697 = vmatpush.bf16.msra.mxu0 %v4060
    %4698 = vmatpush.bf16.msra.mxu0 %v4053
    %4699 = vmatpush.bf16.msra.mxu0 %v4046
    %4700 = vmatpush.bf16.msra.mxu0 %v4039
    %4701 = vmatmul.bf16.gmra.mxu0 %v2269
    %v4702 = vpop.f32.mrf.mxu0
    %v4703 = vadd.f32 %v4690, %v4702
    %v4704 = vpop.f32.mrf.mxu0
    %4705 = vdwg.mxu0
    %4706 = vmatpush.bf16.msra.mxu0 0
    %4707 = vmatpush.bf16.msra.mxu0 0
    %4708 = vmatpush.bf16.msra.mxu0 0
    %4709 = vmatpush.bf16.msra.mxu0 0
    %4710 = vmatpush.bf16.msra.mxu0 0
    %4711 = vmatpush.bf16.msra.mxu0 0
    %4712 = vmatpush.bf16.msra.mxu0 0
    %4713 = vmatpush.bf16.msra.mxu0 %v4095
    %4714 = vmatmul.bf16.gmra.mxu0 %v4444
    %v4715 = vpop.f32.mrf.mxu0
    %v4716 = vadd.f32 %v4703, %v4715
    %v4717 = vpop.f32.mrf.mxu0
    %4718 = vdwg.mxu0
    %4719 = vmatpush.bf16.msra.mxu0 %v3809
    %4720 = vmatpush.bf16.msra.mxu0 %v3802
    %4721 = vmatpush.bf16.msra.mxu0 %v3795
    %4722 = vmatpush.bf16.msra.mxu0 %v3788
    %4723 = vmatpush.bf16.msra.mxu0 %v3781
    %4724 = vmatpush.bf16.msra.mxu0 %v3774
    %4725 = vmatpush.bf16.msra.mxu0 %v3767
    %4726 = vmatpush.bf16.msra.mxu0 %v3760
    %4727 = vmatmul.bf16.gmra.mxu0 %v2264
    %v4728 = vpop.f32.mrf.mxu0
    %v4729 = vadd.f32 %v2668, %v4728
    %v4730 = vpop.f32.mrf.mxu0
    %4731 = vdwg.mxu0
    %4732 = vmatpush.bf16.msra.mxu0 %v3865
    %4733 = vmatpush.bf16.msra.mxu0 %v3858
    %4734 = vmatpush.bf16.msra.mxu0 %v3851
    %4735 = vmatpush.bf16.msra.mxu0 %v3844
    %4736 = vmatpush.bf16.msra.mxu0 %v3837
    %4737 = vmatpush.bf16.msra.mxu0 %v3830
    %4738 = vmatpush.bf16.msra.mxu0 %v3823
    %4739 = vmatpush.bf16.msra.mxu0 %v3816
    %4740 = vmatmul.bf16.gmra.mxu0 %v2265
    %v4741 = vpop.f32.mrf.mxu0
    %v4742 = vadd.f32 %v4729, %v4741
    %v4743 = vpop.f32.mrf.mxu0
    %4744 = vdwg.mxu0
    %4745 = vmatpush.bf16.msra.mxu0 %v3921
    %4746 = vmatpush.bf16.msra.mxu0 %v3914
    %4747 = vmatpush.bf16.msra.mxu0 %v3907
    %4748 = vmatpush.bf16.msra.mxu0 %v3900
    %4749 = vmatpush.bf16.msra.mxu0 %v3893
    %4750 = vmatpush.bf16.msra.mxu0 %v3886
    %4751 = vmatpush.bf16.msra.mxu0 %v3879
    %4752 = vmatpush.bf16.msra.mxu0 %v3872
    %4753 = vmatmul.bf16.gmra.mxu0 %v2266
    %v4754 = vpop.f32.mrf.mxu0
    %v4755 = vadd.f32 %v4742, %v4754
    %v4756 = vpop.f32.mrf.mxu0
    %4757 = vdwg.mxu0
    %4758 = vmatpush.bf16.msra.mxu0 %v3977
    %4759 = vmatpush.bf16.msra.mxu0 %v3970
    %4760 = vmatpush.bf16.msra.mxu0 %v3963
    %4761 = vmatpush.bf16.msra.mxu0 %v3956
    %4762 = vmatpush.bf16.msra.mxu0 %v3949
    %4763 = vmatpush.bf16.msra.mxu0 %v3942
    %4764 = vmatpush.bf16.msra.mxu0 %v3935
    %4765 = vmatpush.bf16.msra.mxu0 %v3928
    %4766 = vmatmul.bf16.gmra.mxu0 %v2267
    %v4767 = vpop.f32.mrf.mxu0
    %v4768 = vadd.f32 %v4755, %v4767
    %v4769 = vpop.f32.mrf.mxu0
    %4770 = vdwg.mxu0
    %4771 = vmatpush.bf16.msra.mxu0 %v4033
    %4772 = vmatpush.bf16.msra.mxu0 %v4026
    %4773 = vmatpush.bf16.msra.mxu0 %v4019
    %4774 = vmatpush.bf16.msra.mxu0 %v4012
    %4775 = vmatpush.bf16.msra.mxu0 %v4005
    %4776 = vmatpush.bf16.msra.mxu0 %v3998
    %4777 = vmatpush.bf16.msra.mxu0 %v3991
    %4778 = vmatpush.bf16.msra.mxu0 %v3984
    %4779 = vmatmul.bf16.gmra.mxu0 %v2268
    %v4780 = vpop.f32.mrf.mxu0
    %v4781 = vadd.f32 %v4768, %v4780
    %v4782 = vpop.f32.mrf.mxu0
    %4783 = vdwg.mxu0
    %4784 = vmatpush.bf16.msra.mxu0 %v4089
    %4785 = vmatpush.bf16.msra.mxu0 %v4082
    %4786 = vmatpush.bf16.msra.mxu0 %v4075
    %4787 = vmatpush.bf16.msra.mxu0 %v4068
    %4788 = vmatpush.bf16.msra.mxu0 %v4061
    %4789 = vmatpush.bf16.msra.mxu0 %v4054
    %4790 = vmatpush.bf16.msra.mxu0 %v4047
    %4791 = vmatpush.bf16.msra.mxu0 %v4040
    %4792 = vmatmul.bf16.gmra.mxu0 %v2269
    %v4793 = vpop.f32.mrf.mxu0
    %v4794 = vadd.f32 %v4781, %v4793
    %v4795 = vpop.f32.mrf.mxu0
    %4796 = vdwg.mxu0
    %4797 = vmatpush.bf16.msra.mxu0 0
    %4798 = vmatpush.bf16.msra.mxu0 0
    %4799 = vmatpush.bf16.msra.mxu0 0
    %4800 = vmatpush.bf16.msra.mxu0 0
    %4801 = vmatpush.bf16.msra.mxu0 0
    %4802 = vmatpush.bf16.msra.mxu0 0
    %4803 = vmatpush.bf16.msra.mxu0 0
    %4804 = vmatpush.bf16.msra.mxu0 %v4096
    %4805 = vmatmul.bf16.gmra.mxu0 %v4444
    %v4806 = vpop.f32.mrf.mxu0
    %v4807 = vadd.f32 %v4794, %v4806
    %v4808 = vpop.f32.mrf.mxu0
    %4809 = vdwg.mxu0
    %4810 = vmatpush.bf16.msra.mxu0 %v3810
    %4811 = vmatpush.bf16.msra.mxu0 %v3803
    %4812 = vmatpush.bf16.msra.mxu0 %v3796
    %4813 = vmatpush.bf16.msra.mxu0 %v3789
    %4814 = vmatpush.bf16.msra.mxu0 %v3782
    %4815 = vmatpush.bf16.msra.mxu0 %v3775
    %4816 = vmatpush.bf16.msra.mxu0 %v3768
    %4817 = vmatpush.bf16.msra.mxu0 %v3761
    %4818 = vmatmul.bf16.gmra.mxu0 %v2264
    %v4819 = vpop.f32.mrf.mxu0
    %v4820 = vadd.f32 %v2669, %v4819
    %v4821 = vpop.f32.mrf.mxu0
    %4822 = vdwg.mxu0
    %4823 = vmatpush.bf16.msra.mxu0 %v3866
    %4824 = vmatpush.bf16.msra.mxu0 %v3859
    %4825 = vmatpush.bf16.msra.mxu0 %v3852
    %4826 = vmatpush.bf16.msra.mxu0 %v3845
    %4827 = vmatpush.bf16.msra.mxu0 %v3838
    %4828 = vmatpush.bf16.msra.mxu0 %v3831
    %4829 = vmatpush.bf16.msra.mxu0 %v3824
    %4830 = vmatpush.bf16.msra.mxu0 %v3817
    %4831 = vmatmul.bf16.gmra.mxu0 %v2265
    %v4832 = vpop.f32.mrf.mxu0
    %v4833 = vadd.f32 %v4820, %v4832
    %v4834 = vpop.f32.mrf.mxu0
    %4835 = vdwg.mxu0
    %4836 = vmatpush.bf16.msra.mxu0 %v3922
    %4837 = vmatpush.bf16.msra.mxu0 %v3915
    %4838 = vmatpush.bf16.msra.mxu0 %v3908
    %4839 = vmatpush.bf16.msra.mxu0 %v3901
    %4840 = vmatpush.bf16.msra.mxu0 %v3894
    %4841 = vmatpush.bf16.msra.mxu0 %v3887
    %4842 = vmatpush.bf16.msra.mxu0 %v3880
    %4843 = vmatpush.bf16.msra.mxu0 %v3873
    %4844 = vmatmul.bf16.gmra.mxu0 %v2266
    %v4845 = vpop.f32.mrf.mxu0
    %v4846 = vadd.f32 %v4833, %v4845
    %v4847 = vpop.f32.mrf.mxu0
    %4848 = vdwg.mxu0
    %4849 = vmatpush.bf16.msra.mxu0 %v3978
    %4850 = vmatpush.bf16.msra.mxu0 %v3971
    %4851 = vmatpush.bf16.msra.mxu0 %v3964
    %4852 = vmatpush.bf16.msra.mxu0 %v3957
    %4853 = vmatpush.bf16.msra.mxu0 %v3950
    %4854 = vmatpush.bf16.msra.mxu0 %v3943
    %4855 = vmatpush.bf16.msra.mxu0 %v3936
    %4856 = vmatpush.bf16.msra.mxu0 %v3929
    %4857 = vmatmul.bf16.gmra.mxu0 %v2267
    %v4858 = vpop.f32.mrf.mxu0
    %v4859 = vadd.f32 %v4846, %v4858
    %v4860 = vpop.f32.mrf.mxu0
    %4861 = vdwg.mxu0
    %4862 = vmatpush.bf16.msra.mxu0 %v4034
    %4863 = vmatpush.bf16.msra.mxu0 %v4027
    %4864 = vmatpush.bf16.msra.mxu0 %v4020
    %4865 = vmatpush.bf16.msra.mxu0 %v4013
    %4866 = vmatpush.bf16.msra.mxu0 %v4006
    %4867 = vmatpush.bf16.msra.mxu0 %v3999
    %4868 = vmatpush.bf16.msra.mxu0 %v3992
    %4869 = vmatpush.bf16.msra.mxu0 %v3985
    %4870 = vmatmul.bf16.gmra.mxu0 %v2268
    %v4871 = vpop.f32.mrf.mxu0
    %v4872 = vadd.f32 %v4859, %v4871
    %v4873 = vpop.f32.mrf.mxu0
    %4874 = vdwg.mxu0
    %4875 = vmatpush.bf16.msra.mxu0 %v4090
    %4876 = vmatpush.bf16.msra.mxu0 %v4083
    %4877 = vmatpush.bf16.msra.mxu0 %v4076
    %4878 = vmatpush.bf16.msra.mxu0 %v4069
    %4879 = vmatpush.bf16.msra.mxu0 %v4062
    %4880 = vmatpush.bf16.msra.mxu0 %v4055
    %4881 = vmatpush.bf16.msra.mxu0 %v4048
    %4882 = vmatpush.bf16.msra.mxu0 %v4041
    %4883 = vmatmul.bf16.gmra.mxu0 %v2269
    %v4884 = vpop.f32.mrf.mxu0
    %v4885 = vadd.f32 %v4872, %v4884
    %v4886 = vpop.f32.mrf.mxu0
    %4887 = vdwg.mxu0
    %4888 = vmatpush.bf16.msra.mxu0 0
    %4889 = vmatpush.bf16.msra.mxu0 0
    %4890 = vmatpush.bf16.msra.mxu0 0
    %4891 = vmatpush.bf16.msra.mxu0 0
    %4892 = vmatpush.bf16.msra.mxu0 0
    %4893 = vmatpush.bf16.msra.mxu0 0
    %4894 = vmatpush.bf16.msra.mxu0 0
    %4895 = vmatpush.bf16.msra.mxu0 %v4097
    %4896 = vmatmul.bf16.gmra.mxu0 %v4444
    %v4897 = vpop.f32.mrf.mxu0
    %v4898 = vadd.f32 %v4885, %v4897
    %v4899 = vpop.f32.mrf.mxu0
    %4900 = vdwg.mxu0
    %4901 = vmatpush.bf16.msra.mxu0 %v3811
    %4902 = vmatpush.bf16.msra.mxu0 %v3804
    %4903 = vmatpush.bf16.msra.mxu0 %v3797
    %4904 = vmatpush.bf16.msra.mxu0 %v3790
    %4905 = vmatpush.bf16.msra.mxu0 %v3783
    %4906 = vmatpush.bf16.msra.mxu0 %v3776
    %4907 = vmatpush.bf16.msra.mxu0 %v3769
    %4908 = vmatpush.bf16.msra.mxu0 %v3762
    %4909 = vmatmul.bf16.gmra.mxu0 %v2264
    %v4910 = vpop.f32.mrf.mxu0
    %v4911 = vadd.f32 %v2670, %v4910
    %v4912 = vpop.f32.mrf.mxu0
    %4913 = vdwg.mxu0
    %4914 = vmatpush.bf16.msra.mxu0 %v3867
    %4915 = vmatpush.bf16.msra.mxu0 %v3860
    %4916 = vmatpush.bf16.msra.mxu0 %v3853
    %4917 = vmatpush.bf16.msra.mxu0 %v3846
    %4918 = vmatpush.bf16.msra.mxu0 %v3839
    %4919 = vmatpush.bf16.msra.mxu0 %v3832
    %4920 = vmatpush.bf16.msra.mxu0 %v3825
    %4921 = vmatpush.bf16.msra.mxu0 %v3818
    %4922 = vmatmul.bf16.gmra.mxu0 %v2265
    %v4923 = vpop.f32.mrf.mxu0
    %v4924 = vadd.f32 %v4911, %v4923
    %v4925 = vpop.f32.mrf.mxu0
    %4926 = vdwg.mxu0
    %4927 = vmatpush.bf16.msra.mxu0 %v3923
    %4928 = vmatpush.bf16.msra.mxu0 %v3916
    %4929 = vmatpush.bf16.msra.mxu0 %v3909
    %4930 = vmatpush.bf16.msra.mxu0 %v3902
    %4931 = vmatpush.bf16.msra.mxu0 %v3895
    %4932 = vmatpush.bf16.msra.mxu0 %v3888
    %4933 = vmatpush.bf16.msra.mxu0 %v3881
    %4934 = vmatpush.bf16.msra.mxu0 %v3874
    %4935 = vmatmul.bf16.gmra.mxu0 %v2266
    %v4936 = vpop.f32.mrf.mxu0
    %v4937 = vadd.f32 %v4924, %v4936
    %v4938 = vpop.f32.mrf.mxu0
    %4939 = vdwg.mxu0
    %4940 = vmatpush.bf16.msra.mxu0 %v3979
    %4941 = vmatpush.bf16.msra.mxu0 %v3972
    %4942 = vmatpush.bf16.msra.mxu0 %v3965
    %4943 = vmatpush.bf16.msra.mxu0 %v3958
    %4944 = vmatpush.bf16.msra.mxu0 %v3951
    %4945 = vmatpush.bf16.msra.mxu0 %v3944
    %4946 = vmatpush.bf16.msra.mxu0 %v3937
    %4947 = vmatpush.bf16.msra.mxu0 %v3930
    %4948 = vmatmul.bf16.gmra.mxu0 %v2267
    %v4949 = vpop.f32.mrf.mxu0
    %v4950 = vadd.f32 %v4937, %v4949
    %v4951 = vpop.f32.mrf.mxu0
    %4952 = vdwg.mxu0
    %4953 = vmatpush.bf16.msra.mxu0 %v4035
    %4954 = vmatpush.bf16.msra.mxu0 %v4028
    %4955 = vmatpush.bf16.msra.mxu0 %v4021
    %4956 = vmatpush.bf16.msra.mxu0 %v4014
    %4957 = vmatpush.bf16.msra.mxu0 %v4007
    %4958 = vmatpush.bf16.msra.mxu0 %v4000
    %4959 = vmatpush.bf16.msra.mxu0 %v3993
    %4960 = vmatpush.bf16.msra.mxu0 %v3986
    %4961 = vmatmul.bf16.gmra.mxu0 %v2268
    %v4962 = vpop.f32.mrf.mxu0
    %v4963 = vadd.f32 %v4950, %v4962
    %v4964 = vpop.f32.mrf.mxu0
    %4965 = vdwg.mxu0
    %4966 = vmatpush.bf16.msra.mxu0 %v4091
    %4967 = vmatpush.bf16.msra.mxu0 %v4084
    %4968 = vmatpush.bf16.msra.mxu0 %v4077
    %4969 = vmatpush.bf16.msra.mxu0 %v4070
    %4970 = vmatpush.bf16.msra.mxu0 %v4063
    %4971 = vmatpush.bf16.msra.mxu0 %v4056
    %4972 = vmatpush.bf16.msra.mxu0 %v4049
    %4973 = vmatpush.bf16.msra.mxu0 %v4042
    %4974 = vmatmul.bf16.gmra.mxu0 %v2269
    %v4975 = vpop.f32.mrf.mxu0
    %v4976 = vadd.f32 %v4963, %v4975
    %v4977 = vpop.f32.mrf.mxu0
    %4978 = vdwg.mxu0
    %4979 = vmatpush.bf16.msra.mxu0 0
    %4980 = vmatpush.bf16.msra.mxu0 0
    %4981 = vmatpush.bf16.msra.mxu0 0
    %4982 = vmatpush.bf16.msra.mxu0 0
    %4983 = vmatpush.bf16.msra.mxu0 0
    %4984 = vmatpush.bf16.msra.mxu0 0
    %4985 = vmatpush.bf16.msra.mxu0 0
    %4986 = vmatpush.bf16.msra.mxu0 %v4098
    %4987 = vmatmul.bf16.gmra.mxu0 %v4444
    %v4988 = vpop.f32.mrf.mxu0
    %v4989 = vadd.f32 %v4976, %v4988
    %v4990 = vpop.f32.mrf.mxu0
    %4991 = vdwg.mxu0
    %4992 = vmatpush.bf16.msra.mxu0 %v3812
    %4993 = vmatpush.bf16.msra.mxu0 %v3805
    %4994 = vmatpush.bf16.msra.mxu0 %v3798
    %4995 = vmatpush.bf16.msra.mxu0 %v3791
    %4996 = vmatpush.bf16.msra.mxu0 %v3784
    %4997 = vmatpush.bf16.msra.mxu0 %v3777
    %4998 = vmatpush.bf16.msra.mxu0 %v3770
    %4999 = vmatpush.bf16.msra.mxu0 %v3763
    %5000 = vmatmul.bf16.gmra.mxu0 %v2264
    %v5001 = vpop.f32.mrf.mxu0
    %v5002 = vadd.f32 %v2671, %v5001
    %v5003 = vpop.f32.mrf.mxu0
    %5004 = vdwg.mxu0
    %5005 = vmatpush.bf16.msra.mxu0 %v3868
    %5006 = vmatpush.bf16.msra.mxu0 %v3861
    %5007 = vmatpush.bf16.msra.mxu0 %v3854
    %5008 = vmatpush.bf16.msra.mxu0 %v3847
    %5009 = vmatpush.bf16.msra.mxu0 %v3840
    %5010 = vmatpush.bf16.msra.mxu0 %v3833
    %5011 = vmatpush.bf16.msra.mxu0 %v3826
    %5012 = vmatpush.bf16.msra.mxu0 %v3819
    %5013 = vmatmul.bf16.gmra.mxu0 %v2265
    %v5014 = vpop.f32.mrf.mxu0
    %v5015 = vadd.f32 %v5002, %v5014
    %v5016 = vpop.f32.mrf.mxu0
    %5017 = vdwg.mxu0
    %5018 = vmatpush.bf16.msra.mxu0 %v3924
    %5019 = vmatpush.bf16.msra.mxu0 %v3917
    %5020 = vmatpush.bf16.msra.mxu0 %v3910
    %5021 = vmatpush.bf16.msra.mxu0 %v3903
    %5022 = vmatpush.bf16.msra.mxu0 %v3896
    %5023 = vmatpush.bf16.msra.mxu0 %v3889
    %5024 = vmatpush.bf16.msra.mxu0 %v3882
    %5025 = vmatpush.bf16.msra.mxu0 %v3875
    %5026 = vmatmul.bf16.gmra.mxu0 %v2266
    %v5027 = vpop.f32.mrf.mxu0
    %v5028 = vadd.f32 %v5015, %v5027
    %v5029 = vpop.f32.mrf.mxu0
    %5030 = vdwg.mxu0
    %5031 = vmatpush.bf16.msra.mxu0 %v3980
    %5032 = vmatpush.bf16.msra.mxu0 %v3973
    %5033 = vmatpush.bf16.msra.mxu0 %v3966
    %5034 = vmatpush.bf16.msra.mxu0 %v3959
    %5035 = vmatpush.bf16.msra.mxu0 %v3952
    %5036 = vmatpush.bf16.msra.mxu0 %v3945
    %5037 = vmatpush.bf16.msra.mxu0 %v3938
    %5038 = vmatpush.bf16.msra.mxu0 %v3931
    %5039 = vmatmul.bf16.gmra.mxu0 %v2267
    %v5040 = vpop.f32.mrf.mxu0
    %v5041 = vadd.f32 %v5028, %v5040
    %v5042 = vpop.f32.mrf.mxu0
    %5043 = vdwg.mxu0
    %5044 = vmatpush.bf16.msra.mxu0 %v4036
    %5045 = vmatpush.bf16.msra.mxu0 %v4029
    %5046 = vmatpush.bf16.msra.mxu0 %v4022
    %5047 = vmatpush.bf16.msra.mxu0 %v4015
    %5048 = vmatpush.bf16.msra.mxu0 %v4008
    %5049 = vmatpush.bf16.msra.mxu0 %v4001
    %5050 = vmatpush.bf16.msra.mxu0 %v3994
    %5051 = vmatpush.bf16.msra.mxu0 %v3987
    %5052 = vmatmul.bf16.gmra.mxu0 %v2268
    %v5053 = vpop.f32.mrf.mxu0
    %v5054 = vadd.f32 %v5041, %v5053
    %v5055 = vpop.f32.mrf.mxu0
    %5056 = vdwg.mxu0
    %5057 = vmatpush.bf16.msra.mxu0 %v4092
    %5058 = vmatpush.bf16.msra.mxu0 %v4085
    %5059 = vmatpush.bf16.msra.mxu0 %v4078
    %5060 = vmatpush.bf16.msra.mxu0 %v4071
    %5061 = vmatpush.bf16.msra.mxu0 %v4064
    %5062 = vmatpush.bf16.msra.mxu0 %v4057
    %5063 = vmatpush.bf16.msra.mxu0 %v4050
    %5064 = vmatpush.bf16.msra.mxu0 %v4043
    %5065 = vmatmul.bf16.gmra.mxu0 %v2269
    %v5066 = vpop.f32.mrf.mxu0
    %v5067 = vadd.f32 %v5054, %v5066
    %v5068 = vpop.f32.mrf.mxu0
    %5069 = vdwg.mxu0
    %5070 = vmatpush.bf16.msra.mxu0 0
    %5071 = vmatpush.bf16.msra.mxu0 0
    %5072 = vmatpush.bf16.msra.mxu0 0
    %5073 = vmatpush.bf16.msra.mxu0 0
    %5074 = vmatpush.bf16.msra.mxu0 0
    %5075 = vmatpush.bf16.msra.mxu0 0
    %5076 = vmatpush.bf16.msra.mxu0 0
    %5077 = vmatpush.bf16.msra.mxu0 %v4099
    %5078 = vmatmul.bf16.gmra.mxu0 %v4444
    %v5079 = vpop.f32.mrf.mxu0
    %v5080 = vadd.f32 %v5067, %v5079
    %v5081 = vpop.f32.mrf.mxu0
    %5082 = vdwg.mxu0
    %v5083 = vld [vmem:[#allocation14] sm:$0x7f]
    %v5084 = vld [vmem:[#allocation16] sm:$0x7f]
    %v5085 = vld [vmem:[%s11] sm:$0xf]
    %v5086 = vld [vmem:[%s11 + $0x4] sm:$0xf]
    %v5087 = vld [vmem:[%s11 + $0x8] sm:$0xf]
    %v5088 = vld [vmem:[%s11 + $0xc] sm:$0xf]
    %v5089 = vld [vmem:[%s11 + $0x10] sm:$0xf]
    %v5090 = vld [vmem:[%s11 + $0x14] sm:$0xf]
    %v5091 = vld [vmem:[%s11 + $0x18] sm:$0xf]
    %v5092 = vld [vmem:[%s11 + $0x1c] sm:$0xf]
    %v5093 = vld [vmem:[%s11 + $0x20] sm:$0xf]
    %v5094 = vld [vmem:[%s11 + $0x24] sm:$0xf]
    %v5095 = vld [vmem:[%s11 + $0x28] sm:$0xf]
    %v5096 = vld [vmem:[%s11 + $0x2c] sm:$0xf]
    %v5097 = vld [vmem:[%s11 + $0x30] sm:$0xf]
    %v5098 = vld [vmem:[%s11 + $0x34] sm:$0xf]
    %v5099 = vld [vmem:[%s11 + $0x38] sm:$0xf]
    %v5100 = vld [vmem:[%s11 + $0x3c] sm:$0xf]
    %v5101 = vld [vmem:[%s11 + $0x40] sm:$0xf]
    %v5102 = vld [vmem:[%s11 + $0x44] sm:$0xf]
    %v5103 = vld [vmem:[%s11 + $0x48] sm:$0xf]
    %v5104 = vld [vmem:[%s11 + $0x4c] sm:$0xf]
    %v5105 = vld [vmem:[%s11 + $0x50] sm:$0xf]
    %v5106 = vld [vmem:[%s11 + $0x54] sm:$0xf]
    %v5107 = vld [vmem:[%s11 + $0x58] sm:$0xf]
    %v5108 = vld [vmem:[%s11 + $0x5c] sm:$0xf]
    %v5109 = vld [vmem:[%s11 + $0x60] sm:$0xf]
    %v5110 = vld [vmem:[%s11 + $0x64] sm:$0xf]
    %v5111 = vld [vmem:[%s11 + $0x68] sm:$0xf]
    %v5112 = vld [vmem:[%s11 + $0x6c] sm:$0xf]
    %v5113 = vld [vmem:[%s11 + $0x70] sm:$0xf]
    %v5114 = vld [vmem:[%s11 + $0x74] sm:$0xf]
    %v5115 = vld [vmem:[%s11 + $0x78] sm:$0xf]
    %v5116 = vld [vmem:[%s11 + $0x7c] sm:$0xf]
    %v5117 = vld [vmem:[%s11 + $0x80] sm:$0xf]
    %v5118 = vld [vmem:[%s11 + $0x84] sm:$0xf]
    %v5119 = vld [vmem:[%s11 + $0x88] sm:$0xf]
    %v5120 = vld [vmem:[%s11 + $0x8c] sm:$0xf]
    %v5121 = vld [vmem:[%s11 + $0x90] sm:$0xf]
    %v5122 = vld [vmem:[%s11 + $0x94] sm:$0xf]
    %v5123 = vld [vmem:[%s11 + $0x98] sm:$0xf]
    %v5124 = vld [vmem:[%s11 + $0x9c] sm:$0xf]
    %v5125 = vld [vmem:[%s11 + $0xa0] sm:$0xf]
    %v5126 = vld [vmem:[%s11 + $0xa4] sm:$0xf]
    %v5127 = vld [vmem:[%s11 + $0xa8] sm:$0xf]
    %v5128 = vld [vmem:[%s11 + $0xac] sm:$0xf]
    %v5129 = vld [vmem:[%s11 + $0xb0] sm:$0xf]
    %v5130 = vld [vmem:[%s11 + $0xb4] sm:$0xf]
    %v5131 = vld [vmem:[%s11 + $0xb8] sm:$0xf]
    %v5132 = vld [vmem:[%s11 + $0xbc] sm:$0xf]
    %v5133 = vld [vmem:[%s11 + $0xc0] sm:$0xf]
    %v5134 = vld [vmem:[%s11 + $0xc4] sm:$0xf]
    %v5135 = vld [vmem:[%s11 + $0xc8] sm:$0xf]
    %v5136 = vld [vmem:[%s11 + $0xcc] sm:$0xf]
    %v5137 = vld [vmem:[%s11 + $0xd0] sm:$0xf]
    %v5138 = vld [vmem:[%s11 + $0xd4] sm:$0xf]
    %v5139 = vld [vmem:[%s11 + $0xd8] sm:$0xf]
    %v5140 = vld [vmem:[%s11 + $0xdc] sm:$0xf]
    %v5141 = vld [vmem:[%s11 + $0xe0] sm:$0xf]
    %v5142 = vld [vmem:[%s11 + $0xe4] sm:$0xf]
    %v5143 = vld [vmem:[%s11 + $0xe8] sm:$0xf]
    %v5144 = vld [vmem:[%s11 + $0xec] sm:$0xf]
    %v5145 = vld [vmem:[%s11 + $0xf0] sm:$0xf]
    %v5146 = vld [vmem:[%s11 + $0xf4] sm:$0xf]
    %v5147 = vld [vmem:[%s11 + $0xf8] sm:$0xf]
    %v5148 = vld [vmem:[%s11 + $0xfc] sm:$0xf]
    %v5149 = vld [vmem:[%s11 + $0x100] sm:$0xf]
    %v5150 = vld [vmem:[%s11 + $0x104] sm:$0xf]
    %v5151 = vld [vmem:[%s11 + $0x108] sm:$0xf]
    %v5152 = vld [vmem:[%s11 + $0x10c] sm:$0xf]
    %v5153 = vld [vmem:[%s11 + $0x110] sm:$0xf]
    %v5154 = vld [vmem:[%s11 + $0x114] sm:$0xf]
    %v5155 = vld [vmem:[%s11 + $0x118] sm:$0xf]
    %v5156 = vld [vmem:[%s11 + $0x11c] sm:$0xf]
    %v5157 = vld [vmem:[%s11 + $0x120] sm:$0xf]
    %v5158 = vld [vmem:[%s11 + $0x124] sm:$0xf]
    %v5159 = vld [vmem:[%s11 + $0x128] sm:$0xf]
    %v5160 = vld [vmem:[%s11 + $0x12c] sm:$0xf]
    %v5161 = vld [vmem:[%s11 + $0x130] sm:$0xf]
    %v5162 = vld [vmem:[%s11 + $0x134] sm:$0xf]
    %v5163 = vld [vmem:[%s11 + $0x138] sm:$0xf]
    %v5164 = vld [vmem:[%s11 + $0x13c] sm:$0xf]
    %v5165 = vld [vmem:[%s11 + $0x140] sm:$0xf]
    %v5166 = vld [vmem:[%s11 + $0x144] sm:$0xf]
    %v5167 = vld [vmem:[%s11 + $0x148] sm:$0xf]
    %v5168 = vld [vmem:[%s11 + $0x14c] sm:$0xf]
    %v5169 = vld [vmem:[%s11 + $0x150] sm:$0xf]
    %v5170 = vld [vmem:[%s11 + $0x154] sm:$0xf]
    %v5171 = vld [vmem:[%s11 + $0x158] sm:$0xf]
    %v5172 = vld [vmem:[%s11 + $0x15c] sm:$0xf]
    %v5173 = vld [vmem:[%s11 + $0x160] sm:$0xf]
    %v5174 = vld [vmem:[%s11 + $0x164] sm:$0xf]
    %v5175 = vld [vmem:[%s11 + $0x168] sm:$0xf]
    %v5176 = vld [vmem:[%s11 + $0x16c] sm:$0xf]
    %v5177 = vld [vmem:[%s11 + $0x170] sm:$0xf]
    %v5178 = vld [vmem:[%s11 + $0x174] sm:$0xf]
    %v5179 = vld [vmem:[%s11 + $0x178] sm:$0xf]
    %v5180 = vld [vmem:[%s11 + $0x17c] sm:$0xf]
    %v5181 = vld [vmem:[%s11 + $0x180] sm:$0xf]
    %v5182 = vld [vmem:[%s11 + $0x184] sm:$0xf]
    %v5183 = vld [vmem:[%s11 + $0x188] sm:$0xf]
    %v5184 = vld [vmem:[%s11 + $0x18c] sm:$0xf]
    %v5185 = vld [vmem:[#allocation17] sm:$0xff]
    %v5186 = vld [vmem:[#allocation17 + $0x8] sm:$0xff]
    %v5187 = vld [vmem:[#allocation17 + $0x10] sm:$0xff]
    %v5188 = vld [vmem:[#allocation17 + $0x18] sm:$0xf]
    %v5189 = vld [vmem:[#allocation17 + $0x1c] sm:$0xff]
    %v5190 = vld [vmem:[#allocation17 + $0x24] sm:$0xff]
    %v5191 = vld [vmem:[#allocation17 + $0x2c] sm:$0xff]
    %v5192 = vld [vmem:[#allocation17 + $0x34] sm:$0xf]
    %v5193 = vld [vmem:[#allocation17 + $0x38] sm:$0xff]
    %v5194 = vld [vmem:[#allocation17 + $0x40] sm:$0xff]
    %v5195 = vld [vmem:[#allocation17 + $0x48] sm:$0xff]
    %v5196 = vld [vmem:[#allocation17 + $0x50] sm:$0xf]
    %v5197 = vld [vmem:[#allocation17 + $0x54] sm:$0xff]
    %v5198 = vld [vmem:[#allocation17 + $0x5c] sm:$0xff]
    %v5199 = vld [vmem:[#allocation17 + $0x64] sm:$0xff]
    %v5200 = vld [vmem:[#allocation17 + $0x6c] sm:$0xf]
    %v5201 = vsel %vm966, %v4534, 0.0
    %v5202 = vrot.slane %v5201, 4
    %v5203 = vadd.f32 %v5201, %v5202
    %v5204 = vrot.slane %v5203, 2
    %v5205 = vadd.f32 %v5203, %v5204
    %v5206 = vrot.slane %v5205, 1
    %v5207 = vadd.f32 %v5205, %v5206
    %v5208 = vsel %vm966, %v4625, 0.0
    %v5209 = vrot.slane %v5208, 4
    %v5210 = vadd.f32 %v5208, %v5209
    %v5211 = vrot.slane %v5210, 2
    %v5212 = vadd.f32 %v5210, %v5211
    %v5213 = vrot.slane %v5212, 1
    %v5214 = vadd.f32 %v5212, %v5213
    %v5215 = vsel %vm966, %v4716, 0.0
    %v5216 = vrot.slane %v5215, 4
    %v5217 = vadd.f32 %v5215, %v5216
    %v5218 = vrot.slane %v5217, 2
    %v5219 = vadd.f32 %v5217, %v5218
    %v5220 = vrot.slane %v5219, 1
    %v5221 = vadd.f32 %v5219, %v5220
    %v5222 = vsel %vm966, %v4807, 0.0
    %v5223 = vrot.slane %v5222, 4
    %v5224 = vadd.f32 %v5222, %v5223
    %v5225 = vrot.slane %v5224, 2
    %v5226 = vadd.f32 %v5224, %v5225
    %v5227 = vrot.slane %v5226, 1
    %v5228 = vadd.f32 %v5226, %v5227
    %v5229 = vsel %vm966, %v4898, 0.0
    %v5230 = vrot.slane %v5229, 4
    %v5231 = vadd.f32 %v5229, %v5230
    %v5232 = vrot.slane %v5231, 2
    %v5233 = vadd.f32 %v5231, %v5232
    %v5234 = vrot.slane %v5233, 1
    %v5235 = vadd.f32 %v5233, %v5234
    %v5236 = vsel %vm966, %v4989, 0.0
    %v5237 = vrot.slane %v5236, 4
    %v5238 = vadd.f32 %v5236, %v5237
    %v5239 = vrot.slane %v5238, 2
    %v5240 = vadd.f32 %v5238, %v5239
    %v5241 = vrot.slane %v5240, 1
    %v5242 = vadd.f32 %v5240, %v5241
    %vm5243 = vcmask 254976
    %v5244 = vsel %vm5243, %v5080, 0.0
    %v5245 = vrot.slane %v5244, 4
    %v5246 = vadd.f32 %v5244, %v5245
    %v5247 = vrot.slane %v5246, 2
    %v5248 = vadd.f32 %v5246, %v5247
    %v5249 = vrot.slane %v5248, 1
    %v5250 = vadd.f32 %v5248, %v5249
    %v5251 = vpack.c.bf16 %v5207, %v5207
    %v5252 = vpack.c.bf16 %v5214, %v5214
    %v5253 = vpack.c.bf16 %v5221, %v5221
    %v5254 = vpack.c.bf16 %v5228, %v5228
    %v5255 = vpack.c.bf16 %v5235, %v5235
    %v5256 = vpack.c.bf16 %v5242, %v5242
    %v5257 = vpack.c.bf16 %v5250, %v5250
    %v5358 = vunpack.c.l.b16 %v5085
    %v5359 = vunpack.c.l.b16 %v5086
    %v5360 = vunpack.c.l.b16 %v5087
    %v5361 = vunpack.c.l.b16 %v5088
    %v5362 = vunpack.c.l.b16 %v5089
    %v5363 = vunpack.c.l.b16 %v5090
    %v5364 = vunpack.c.l.b16 %v5091
    %v5365 = vunpack.c.l.b16 %v5092
    %v5366 = vunpack.c.l.b16 %v5093
    %v5367 = vunpack.c.l.b16 %v5094
    %v5368 = vunpack.c.l.b16 %v5095
    %v5369 = vunpack.c.l.b16 %v5096
    %v5370 = vunpack.c.l.b16 %v5097
    %v5371 = vunpack.c.l.b16 %v5098
    %v5372 = vunpack.c.l.b16 %v5099
    %v5373 = vunpack.c.l.b16 %v5100
    %v5374 = vunpack.c.l.b16 %v5101
    %v5375 = vunpack.c.l.b16 %v5102
    %v5376 = vunpack.c.l.b16 %v5103
    %v5377 = vunpack.c.l.b16 %v5104
    %v5378 = vunpack.c.l.b16 %v5105
    %v5379 = vunpack.c.l.b16 %v5106
    %v5380 = vunpack.c.l.b16 %v5107
    %v5381 = vunpack.c.l.b16 %v5108
    %v5382 = vunpack.c.l.b16 %v5109
    %v5383 = vunpack.c.l.b16 %v5110
    %v5384 = vunpack.c.l.b16 %v5111
    %v5385 = vunpack.c.l.b16 %v5112
    %v5386 = vunpack.c.l.b16 %v5113
    %v5387 = vunpack.c.l.b16 %v5114
    %v5388 = vunpack.c.l.b16 %v5115
    %v5389 = vunpack.c.l.b16 %v5116
    %v5390 = vunpack.c.l.b16 %v5117
    %v5391 = vunpack.c.l.b16 %v5118
    %v5392 = vunpack.c.l.b16 %v5119
    %v5393 = vunpack.c.l.b16 %v5120
    %v5394 = vunpack.c.l.b16 %v5121
    %v5395 = vunpack.c.l.b16 %v5122
    %v5396 = vunpack.c.l.b16 %v5123
    %v5397 = vunpack.c.l.b16 %v5124
    %v5398 = vunpack.c.l.b16 %v5125
    %v5399 = vunpack.c.l.b16 %v5126
    %v5400 = vunpack.c.l.b16 %v5127
    %v5401 = vunpack.c.l.b16 %v5128
    %v5402 = vunpack.c.l.b16 %v5129
    %v5403 = vunpack.c.l.b16 %v5130
    %v5404 = vunpack.c.l.b16 %v5131
    %v5405 = vunpack.c.l.b16 %v5132
    %v5406 = vunpack.c.l.b16 %v5133
    %v5407 = vunpack.c.l.b16 %v5134
    %v5408 = vunpack.c.l.b16 %v5135
    %v5409 = vunpack.c.l.b16 %v5136
    %v5410 = vunpack.c.l.b16 %v5137
    %v5411 = vunpack.c.l.b16 %v5138
    %v5412 = vunpack.c.l.b16 %v5139
    %v5413 = vunpack.c.l.b16 %v5140
    %v5414 = vunpack.c.l.b16 %v5141
    %v5415 = vunpack.c.l.b16 %v5142
    %v5416 = vunpack.c.l.b16 %v5143
    %v5417 = vunpack.c.l.b16 %v5144
    %v5418 = vunpack.c.l.b16 %v5145
    %v5419 = vunpack.c.l.b16 %v5146
    %v5420 = vunpack.c.l.b16 %v5147
    %v5421 = vunpack.c.l.b16 %v5148
    %v5422 = vunpack.c.l.b16 %v5149
    %v5423 = vunpack.c.l.b16 %v5150
    %v5424 = vunpack.c.l.b16 %v5151
    %v5425 = vunpack.c.l.b16 %v5152
    %v5426 = vunpack.c.l.b16 %v5153
    %v5427 = vunpack.c.l.b16 %v5154
    %v5428 = vunpack.c.l.b16 %v5155
    %v5429 = vunpack.c.l.b16 %v5156
    %v5430 = vunpack.c.l.b16 %v5157
    %v5431 = vunpack.c.l.b16 %v5158
    %v5432 = vunpack.c.l.b16 %v5159
    %v5433 = vunpack.c.l.b16 %v5160
    %v5434 = vunpack.c.l.b16 %v5161
    %v5435 = vunpack.c.l.b16 %v5162
    %v5436 = vunpack.c.l.b16 %v5163
    %v5437 = vunpack.c.l.b16 %v5164
    %v5438 = vunpack.c.l.b16 %v5165
    %v5439 = vunpack.c.l.b16 %v5166
    %v5440 = vunpack.c.l.b16 %v5167
    %v5441 = vunpack.c.l.b16 %v5168
    %v5442 = vunpack.c.l.b16 %v5169
    %v5443 = vunpack.c.l.b16 %v5170
    %v5444 = vunpack.c.l.b16 %v5171
    %v5445 = vunpack.c.l.b16 %v5172
    %v5446 = vunpack.c.l.b16 %v5173
    %v5447 = vunpack.c.l.b16 %v5174
    %v5448 = vunpack.c.l.b16 %v5175
    %v5449 = vunpack.c.l.b16 %v5176
    %v5450 = vunpack.c.l.b16 %v5177
    %v5451 = vunpack.c.l.b16 %v5178
    %v5452 = vunpack.c.l.b16 %v5179
    %v5453 = vunpack.c.l.b16 %v5180
    %v5454 = vunpack.c.l.b16 %v5181
    %v5455 = vunpack.c.l.b16 %v5182
    %v5456 = vunpack.c.l.b16 %v5183
    %v5457 = vunpack.c.l.b16 %v5184
    %v5458 = vpack.c.b16 %v5359, %v5358
    %v5459 = vpack.c.b16 %v5361, %v5360
    %v5460 = vpack.c.b16 %v5363, %v5362
    %v5461 = vpack.c.b16 %v5365, %v5364
    %v5462 = vpack.c.b16 %v5367, %v5366
    %v5463 = vpack.c.b16 %v5369, %v5368
    %v5464 = vpack.c.b16 %v5371, %v5370
    %v5465 = vpack.c.b16 %v5373, %v5372
    %v5466 = vpack.c.b16 %v5375, %v5374
    %v5467 = vpack.c.b16 %v5377, %v5376
    %v5468 = vpack.c.b16 %v5379, %v5378
    %v5469 = vpack.c.b16 %v5381, %v5380
    %v5470 = vpack.c.b16 %v5383, %v5382
    %v5471 = vpack.c.b16 %v5385, %v5384
    %v5472 = vpack.c.b16 %v5387, %v5386
    %v5473 = vpack.c.b16 %v5389, %v5388
    %v5474 = vpack.c.b16 %v5391, %v5390
    %v5475 = vpack.c.b16 %v5393, %v5392
    %v5476 = vpack.c.b16 %v5395, %v5394
    %v5477 = vpack.c.b16 %v5397, %v5396
    %v5478 = vpack.c.b16 %v5399, %v5398
    %v5479 = vpack.c.b16 %v5401, %v5400
    %v5480 = vpack.c.b16 %v5403, %v5402
    %v5481 = vpack.c.b16 %v5405, %v5404
    %v5482 = vpack.c.b16 %v5407, %v5406
    %v5483 = vpack.c.b16 %v5409, %v5408
    %v5484 = vpack.c.b16 %v5411, %v5410
    %v5485 = vpack.c.b16 %v5413, %v5412
    %v5486 = vpack.c.b16 %v5415, %v5414
    %v5487 = vpack.c.b16 %v5417, %v5416
    %v5488 = vpack.c.b16 %v5419, %v5418
    %v5489 = vpack.c.b16 %v5421, %v5420
    %v5490 = vpack.c.b16 %v5423, %v5422
    %v5491 = vpack.c.b16 %v5425, %v5424
    %v5492 = vpack.c.b16 %v5427, %v5426
    %v5493 = vpack.c.b16 %v5429, %v5428
    %v5494 = vpack.c.b16 %v5431, %v5430
    %v5495 = vpack.c.b16 %v5433, %v5432
    %v5496 = vpack.c.b16 %v5435, %v5434
    %v5497 = vpack.c.b16 %v5437, %v5436
    %v5498 = vpack.c.b16 %v5439, %v5438
    %v5499 = vpack.c.b16 %v5441, %v5440
    %v5500 = vpack.c.b16 %v5443, %v5442
    %v5501 = vpack.c.b16 %v5445, %v5444
    %v5502 = vpack.c.b16 %v5447, %v5446
    %v5503 = vpack.c.b16 %v5449, %v5448
    %v5504 = vpack.c.b16 %v5451, %v5450
    %v5505 = vpack.c.b16 %v5453, %v5452
    %v5506 = vpack.c.b16 %v5455, %v5454
    %v5507 = vpack.c.b16 %v5457, %v5456
    %vm5558 = vcmask 261120
    %v5560 = vsel %vm5558, %v5257, 0
    %5562 = vmatpush.bf16.msra.mxu0 %v5465
    %5563 = vmatpush.bf16.msra.mxu0 %v5464
    %5564 = vmatpush.bf16.msra.mxu0 %v5463
    %5565 = vmatpush.bf16.msra.mxu0 %v5462
    %5566 = vmatpush.bf16.msra.mxu0 %v5461
    %5567 = vmatpush.bf16.msra.mxu0 %v5460
    %5568 = vmatpush.bf16.msra.mxu0 %v5459
    %5569 = vmatpush.bf16.msra.mxu0 %v5458
    %5570 = vmatmul.bf16.gmra.mxu0 %v5251
    %v5571 = vpop.f32.mrf.mxu0
    %v5572 = vadd.f32 0.0, %v5571
    %v5573 = vpop.f32.mrf.mxu0
    %5574 = vdwg.mxu0
    %5575 = vmatpush.bf16.msra.mxu0 %v5473
    %5576 = vmatpush.bf16.msra.mxu0 %v5472
    %5577 = vmatpush.bf16.msra.mxu0 %v5471
    %5578 = vmatpush.bf16.msra.mxu0 %v5470
    %5579 = vmatpush.bf16.msra.mxu0 %v5469
    %5580 = vmatpush.bf16.msra.mxu0 %v5468
    %5581 = vmatpush.bf16.msra.mxu0 %v5467
    %5582 = vmatpush.bf16.msra.mxu0 %v5466
    %5583 = vmatmul.bf16.gmra.mxu0 %v5252
    %v5584 = vpop.f32.mrf.mxu0
    %v5585 = vadd.f32 %v5572, %v5584
    %v5586 = vpop.f32.mrf.mxu0
    %5587 = vdwg.mxu0
    %5588 = vmatpush.bf16.msra.mxu0 %v5481
    %5589 = vmatpush.bf16.msra.mxu0 %v5480
    %5590 = vmatpush.bf16.msra.mxu0 %v5479
    %5591 = vmatpush.bf16.msra.mxu0 %v5478
    %5592 = vmatpush.bf16.msra.mxu0 %v5477
    %5593 = vmatpush.bf16.msra.mxu0 %v5476
    %5594 = vmatpush.bf16.msra.mxu0 %v5475
    %5595 = vmatpush.bf16.msra.mxu0 %v5474
    %5596 = vmatmul.bf16.gmra.mxu0 %v5253
    %v5597 = vpop.f32.mrf.mxu0
    %v5598 = vadd.f32 %v5585, %v5597
    %v5599 = vpop.f32.mrf.mxu0
    %5600 = vdwg.mxu0
    %5601 = vmatpush.bf16.msra.mxu0 %v5489
    %5602 = vmatpush.bf16.msra.mxu0 %v5488
    %5603 = vmatpush.bf16.msra.mxu0 %v5487
    %5604 = vmatpush.bf16.msra.mxu0 %v5486
    %5605 = vmatpush.bf16.msra.mxu0 %v5485
    %5606 = vmatpush.bf16.msra.mxu0 %v5484
    %5607 = vmatpush.bf16.msra.mxu0 %v5483
    %5608 = vmatpush.bf16.msra.mxu0 %v5482
    %5609 = vmatmul.bf16.gmra.mxu0 %v5254
    %v5610 = vpop.f32.mrf.mxu0
    %v5611 = vadd.f32 %v5598, %v5610
    %v5612 = vpop.f32.mrf.mxu0
    %5613 = vdwg.mxu0
    %5614 = vmatpush.bf16.msra.mxu0 %v5497
    %5615 = vmatpush.bf16.msra.mxu0 %v5496
    %5616 = vmatpush.bf16.msra.mxu0 %v5495
    %5617 = vmatpush.bf16.msra.mxu0 %v5494
    %5618 = vmatpush.bf16.msra.mxu0 %v5493
    %5619 = vmatpush.bf16.msra.mxu0 %v5492
    %5620 = vmatpush.bf16.msra.mxu0 %v5491
    %5621 = vmatpush.bf16.msra.mxu0 %v5490
    %5622 = vmatmul.bf16.gmra.mxu0 %v5255
    %v5623 = vpop.f32.mrf.mxu0
    %v5624 = vadd.f32 %v5611, %v5623
    %v5625 = vpop.f32.mrf.mxu0
    %5626 = vdwg.mxu0
    %5627 = vmatpush.bf16.msra.mxu0 %v5505
    %5628 = vmatpush.bf16.msra.mxu0 %v5504
    %5629 = vmatpush.bf16.msra.mxu0 %v5503
    %5630 = vmatpush.bf16.msra.mxu0 %v5502
    %5631 = vmatpush.bf16.msra.mxu0 %v5501
    %5632 = vmatpush.bf16.msra.mxu0 %v5500
    %5633 = vmatpush.bf16.msra.mxu0 %v5499
    %5634 = vmatpush.bf16.msra.mxu0 %v5498
    %5635 = vmatmul.bf16.gmra.mxu0 %v5256
    %v5636 = vpop.f32.mrf.mxu0
    %v5637 = vadd.f32 %v5624, %v5636
    %v5638 = vpop.f32.mrf.mxu0
    %5639 = vdwg.mxu0
    %5640 = vmatpush.bf16.msra.mxu0 0
    %5641 = vmatpush.bf16.msra.mxu0 0
    %5642 = vmatpush.bf16.msra.mxu0 0
    %5643 = vmatpush.bf16.msra.mxu0 0
    %5644 = vmatpush.bf16.msra.mxu0 0
    %5645 = vmatpush.bf16.msra.mxu0 0
    %5646 = vmatpush.bf16.msra.mxu0 %v5507
    %5647 = vmatpush.bf16.msra.mxu0 %v5506
    %5648 = vmatmul.bf16.gmra.mxu0 %v5560
    %v5649 = vpop.f32.mrf.mxu0
    %v5650 = vadd.f32 %v5637, %v5649
    %v5651 = vpop.f32.mrf.mxu0
    %5652 = vdwg.mxu0
    %v5653 = vmul.f32 %v5650, 0.02
    %v5654 = vpack.c.bf16 %v5653, %v5653
    %v5671 = vunpack.c.l.b16 %v5185
    %v5672 = vunpack.c.h.b16 %v5185
    %v5673 = vunpack.c.l.b16 %v5186
    %v5674 = vunpack.c.h.b16 %v5186
    %v5675 = vunpack.c.l.b16 %v5187
    %v5676 = vunpack.c.h.b16 %v5187
    %v5677 = vunpack.c.l.b16 %v5188
    %v5678 = vunpack.c.l.b16 %v5189
    %v5679 = vunpack.c.h.b16 %v5189
    %v5680 = vunpack.c.l.b16 %v5190
    %v5681 = vunpack.c.h.b16 %v5190
    %v5682 = vunpack.c.l.b16 %v5191
    %v5683 = vunpack.c.h.b16 %v5191
    %v5684 = vunpack.c.l.b16 %v5192
    %v5685 = vunpack.c.l.b16 %v5193
    %v5686 = vunpack.c.h.b16 %v5193
    %v5687 = vunpack.c.l.b16 %v5194
    %v5688 = vunpack.c.h.b16 %v5194
    %v5689 = vunpack.c.l.b16 %v5195
    %v5690 = vunpack.c.h.b16 %v5195
    %v5691 = vunpack.c.l.b16 %v5196
    %v5692 = vunpack.c.l.b16 %v5197
    %v5693 = vunpack.c.h.b16 %v5197
    %v5694 = vunpack.c.l.b16 %v5198
    %v5695 = vunpack.c.h.b16 %v5198
    %v5696 = vunpack.c.l.b16 %v5199
    %v5697 = vunpack.c.h.b16 %v5199
    %v5698 = vunpack.c.l.b16 %v5200
    %v5699 = vpack.c.b16 %v5678, %v5671
    %v5700 = vpack.c.b16 %v5679, %v5672
    %v5701 = vpack.c.b16 %v5680, %v5673
    %v5702 = vpack.c.b16 %v5681, %v5674
    %v5703 = vpack.c.b16 %v5682, %v5675
    %v5704 = vpack.c.b16 %v5683, %v5676
    %v5705 = vpack.c.b16 %v5684, %v5677
    %v5706 = vpack.c.b16 %v5692, %v5685
    %v5707 = vpack.c.b16 %v5693, %v5686
    %v5708 = vpack.c.b16 %v5694, %v5687
    %v5709 = vpack.c.b16 %v5695, %v5688
    %v5710 = vpack.c.b16 %v5696, %v5689
    %v5711 = vpack.c.b16 %v5697, %v5690
    %v5712 = vpack.c.b16 %v5698, %v5691
    %v5728 = vsel %vm5558, %v5654, 0
    %5730 = vmatpush.bf16.msra.mxu0 0
    %5731 = vmatpush.bf16.msra.mxu0 0
    %5732 = vmatpush.bf16.msra.mxu0 0
    %5733 = vmatpush.bf16.msra.mxu0 0
    %5734 = vmatpush.bf16.msra.mxu0 0
    %5735 = vmatpush.bf16.msra.mxu0 0
    %5736 = vmatpush.bf16.msra.mxu0 %v5706
    %5737 = vmatpush.bf16.msra.mxu0 %v5699
    %5738 = vmatmul.bf16.gmra.mxu0 %v5728
    %v5739 = vpop.f32.mrf.mxu0
    %v5740 = vadd.f32 0.0, %v5739
    %v5741 = vpop.f32.mrf.mxu0
    %5742 = vdwg.mxu0
    %5743 = vmatpush.bf16.msra.mxu0 0
    %5744 = vmatpush.bf16.msra.mxu0 0
    %5745 = vmatpush.bf16.msra.mxu0 0
    %5746 = vmatpush.bf16.msra.mxu0 0
    %5747 = vmatpush.bf16.msra.mxu0 0
    %5748 = vmatpush.bf16.msra.mxu0 0
    %5749 = vmatpush.bf16.msra.mxu0 %v5707
    %5750 = vmatpush.bf16.msra.mxu0 %v5700
    %5751 = vmatmul.bf16.gmra.mxu0 %v5728
    %v5752 = vpop.f32.mrf.mxu0
    %v5753 = vadd.f32 0.0, %v5752
    %v5754 = vpop.f32.mrf.mxu0
    %5755 = vdwg.mxu0
    %5756 = vmatpush.bf16.msra.mxu0 0
    %5757 = vmatpush.bf16.msra.mxu0 0
    %5758 = vmatpush.bf16.msra.mxu0 0
    %5759 = vmatpush.bf16.msra.mxu0 0
    %5760 = vmatpush.bf16.msra.mxu0 0
    %5761 = vmatpush.bf16.msra.mxu0 0
    %5762 = vmatpush.bf16.msra.mxu0 %v5708
    %5763 = vmatpush.bf16.msra.mxu0 %v5701
    %5764 = vmatmul.bf16.gmra.mxu0 %v5728
    %v5765 = vpop.f32.mrf.mxu0
    %v5766 = vadd.f32 0.0, %v5765
    %v5767 = vpop.f32.mrf.mxu0
    %5768 = vdwg.mxu0
    %5769 = vmatpush.bf16.msra.mxu0 0
    %5770 = vmatpush.bf16.msra.mxu0 0
    %5771 = vmatpush.bf16.msra.mxu0 0
    %5772 = vmatpush.bf16.msra.mxu0 0
    %5773 = vmatpush.bf16.msra.mxu0 0
    %5774 = vmatpush.bf16.msra.mxu0 0
    %5775 = vmatpush.bf16.msra.mxu0 %v5709
    %5776 = vmatpush.bf16.msra.mxu0 %v5702
    %5777 = vmatmul.bf16.gmra.mxu0 %v5728
    %v5778 = vpop.f32.mrf.mxu0
    %v5779 = vadd.f32 0.0, %v5778
    %v5780 = vpop.f32.mrf.mxu0
    %5781 = vdwg.mxu0
    %5782 = vmatpush.bf16.msra.mxu0 0
    %5783 = vmatpush.bf16.msra.mxu0 0
    %5784 = vmatpush.bf16.msra.mxu0 0
    %5785 = vmatpush.bf16.msra.mxu0 0
    %5786 = vmatpush.bf16.msra.mxu0 0
    %5787 = vmatpush.bf16.msra.mxu0 0
    %5788 = vmatpush.bf16.msra.mxu0 %v5710
    %5789 = vmatpush.bf16.msra.mxu0 %v5703
    %5790 = vmatmul.bf16.gmra.mxu0 %v5728
    %v5791 = vpop.f32.mrf.mxu0
    %v5792 = vadd.f32 0.0, %v5791
    %v5793 = vpop.f32.mrf.mxu0
    %5794 = vdwg.mxu0
    %5795 = vmatpush.bf16.msra.mxu0 0
    %5796 = vmatpush.bf16.msra.mxu0 0
    %5797 = vmatpush.bf16.msra.mxu0 0
    %5798 = vmatpush.bf16.msra.mxu0 0
    %5799 = vmatpush.bf16.msra.mxu0 0
    %5800 = vmatpush.bf16.msra.mxu0 0
    %5801 = vmatpush.bf16.msra.mxu0 %v5711
    %5802 = vmatpush.bf16.msra.mxu0 %v5704
    %5803 = vmatmul.bf16.gmra.mxu0 %v5728
    %v5804 = vpop.f32.mrf.mxu0
    %v5805 = vadd.f32 0.0, %v5804
    %v5806 = vpop.f32.mrf.mxu0
    %5807 = vdwg.mxu0
    %5808 = vmatpush.bf16.msra.mxu0 0
    %5809 = vmatpush.bf16.msra.mxu0 0
    %5810 = vmatpush.bf16.msra.mxu0 0
    %5811 = vmatpush.bf16.msra.mxu0 0
    %5812 = vmatpush.bf16.msra.mxu0 0
    %5813 = vmatpush.bf16.msra.mxu0 0
    %5814 = vmatpush.bf16.msra.mxu0 %v5712
    %5815 = vmatpush.bf16.msra.mxu0 %v5705
    %5816 = vmatmul.bf16.gmra.mxu0 %v5728
    %v5817 = vpop.f32.mrf.mxu0
    %v5818 = vadd.f32 0.0, %v5817
    %v5819 = vpop.f32.mrf.mxu0
    %5820 = vdwg.mxu0
    %v5821 = vperm.slane %v5740, 0
    %v5822 = vperm.slane %v5753, 0
    %v5823 = vperm.slane %v5766, 0
    %v5824 = vperm.slane %v5779, 0
    %v5825 = vperm.slane %v5792, 0
    %v5826 = vperm.slane %v5805, 0
    %v5827 = vperm.slane %v5818, 0
    %v5828 = vsub.f32 %v4534, %v5821
    %v5829 = vsub.f32 %v4625, %v5822
    %v5830 = vsub.f32 %v4716, %v5823
    %v5831 = vsub.f32 %v4807, %v5824
    %v5832 = vsub.f32 %v4898, %v5825
    %v5833 = vsub.f32 %v4989, %v5826
    %v5834 = vsub.f32 %v5080, %v5827
    %v5835 = vmul.f32 %v5828, %v5828
    %v5836 = vmul.f32 %v5829, %v5829
    %v5837 = vmul.f32 %v5830, %v5830
    %v5838 = vmul.f32 %v5831, %v5831
    %v5839 = vmul.f32 %v5832, %v5832
    %v5840 = vmul.f32 %v5833, %v5833
    %v5841 = vmul.f32 %v5834, %v5834
    %v5842 = vsel %vm966, %v5835, 0.0
    %v5843 = vrot.slane %v5842, 4
    %v5844 = vadd.f32 %v5842, %v5843
    %v5845 = vrot.slane %v5844, 2
    %v5846 = vadd.f32 %v5844, %v5845
    %v5847 = vrot.slane %v5846, 1
    %v5848 = vadd.f32 %v5846, %v5847
    %v5849 = vsel %vm966, %v5836, 0.0
    %v5850 = vrot.slane %v5849, 4
    %v5851 = vadd.f32 %v5849, %v5850
    %v5852 = vrot.slane %v5851, 2
    %v5853 = vadd.f32 %v5851, %v5852
    %v5854 = vrot.slane %v5853, 1
    %v5855 = vadd.f32 %v5853, %v5854
    %v5856 = vsel %vm966, %v5837, 0.0
    %v5857 = vrot.slane %v5856, 4
    %v5858 = vadd.f32 %v5856, %v5857
    %v5859 = vrot.slane %v5858, 2
    %v5860 = vadd.f32 %v5858, %v5859
    %v5861 = vrot.slane %v5860, 1
    %v5862 = vadd.f32 %v5860, %v5861
    %v5863 = vsel %vm966, %v5838, 0.0
    %v5864 = vrot.slane %v5863, 4
    %v5865 = vadd.f32 %v5863, %v5864
    %v5866 = vrot.slane %v5865, 2
    %v5867 = vadd.f32 %v5865, %v5866
    %v5868 = vrot.slane %v5867, 1
    %v5869 = vadd.f32 %v5867, %v5868
    %v5870 = vsel %vm966, %v5839, 0.0
    %v5871 = vrot.slane %v5870, 4
    %v5872 = vadd.f32 %v5870, %v5871
    %v5873 = vrot.slane %v5872, 2
    %v5874 = vadd.f32 %v5872, %v5873
    %v5875 = vrot.slane %v5874, 1
    %v5876 = vadd.f32 %v5874, %v5875
    %v5877 = vsel %vm966, %v5840, 0.0
    %v5878 = vrot.slane %v5877, 4
    %v5879 = vadd.f32 %v5877, %v5878
    %v5880 = vrot.slane %v5879, 2
    %v5881 = vadd.f32 %v5879, %v5880
    %v5882 = vrot.slane %v5881, 1
    %v5883 = vadd.f32 %v5881, %v5882
    %v5884 = vsel %vm5243, %v5841, 0.0
    %v5885 = vrot.slane %v5884, 4
    %v5886 = vadd.f32 %v5884, %v5885
    %v5887 = vrot.slane %v5886, 2
    %v5888 = vadd.f32 %v5886, %v5887
    %v5889 = vrot.slane %v5888, 1
    %v5890 = vadd.f32 %v5888, %v5889
    %v5891 = vpack.c.bf16 %v5848, %v5848
    %v5892 = vpack.c.bf16 %v5855, %v5855
    %v5893 = vpack.c.bf16 %v5862, %v5862
    %v5894 = vpack.c.bf16 %v5869, %v5869
    %v5895 = vpack.c.bf16 %v5876, %v5876
    %v5896 = vpack.c.bf16 %v5883, %v5883
    %v5897 = vpack.c.bf16 %v5890, %v5890
    %v5899 = vsel %vm5558, %v5897, 0
    %5901 = vmatpush.bf16.msra.mxu0 %v5465
    %5902 = vmatpush.bf16.msra.mxu0 %v5464
    %5903 = vmatpush.bf16.msra.mxu0 %v5463
    %5904 = vmatpush.bf16.msra.mxu0 %v5462
    %5905 = vmatpush.bf16.msra.mxu0 %v5461
    %5906 = vmatpush.bf16.msra.mxu0 %v5460
    %5907 = vmatpush.bf16.msra.mxu0 %v5459
    %5908 = vmatpush.bf16.msra.mxu0 %v5458
    %5909 = vmatmul.bf16.gmra.mxu0 %v5891
    %v5910 = vpop.f32.mrf.mxu0
    %v5911 = vadd.f32 0.0, %v5910
    %v5912 = vpop.f32.mrf.mxu0
    %5913 = vdwg.mxu0
    %5914 = vmatpush.bf16.msra.mxu0 %v5473
    %5915 = vmatpush.bf16.msra.mxu0 %v5472
    %5916 = vmatpush.bf16.msra.mxu0 %v5471
    %5917 = vmatpush.bf16.msra.mxu0 %v5470
    %5918 = vmatpush.bf16.msra.mxu0 %v5469
    %5919 = vmatpush.bf16.msra.mxu0 %v5468
    %5920 = vmatpush.bf16.msra.mxu0 %v5467
    %5921 = vmatpush.bf16.msra.mxu0 %v5466
    %5922 = vmatmul.bf16.gmra.mxu0 %v5892
    %v5923 = vpop.f32.mrf.mxu0
    %v5924 = vadd.f32 %v5911, %v5923
    %v5925 = vpop.f32.mrf.mxu0
    %5926 = vdwg.mxu0
    %5927 = vmatpush.bf16.msra.mxu0 %v5481
    %5928 = vmatpush.bf16.msra.mxu0 %v5480
    %5929 = vmatpush.bf16.msra.mxu0 %v5479
    %5930 = vmatpush.bf16.msra.mxu0 %v5478
    %5931 = vmatpush.bf16.msra.mxu0 %v5477
    %5932 = vmatpush.bf16.msra.mxu0 %v5476
    %5933 = vmatpush.bf16.msra.mxu0 %v5475
    %5934 = vmatpush.bf16.msra.mxu0 %v5474
    %5935 = vmatmul.bf16.gmra.mxu0 %v5893
    %v5936 = vpop.f32.mrf.mxu0
    %v5937 = vadd.f32 %v5924, %v5936
    %v5938 = vpop.f32.mrf.mxu0
    %5939 = vdwg.mxu0
    %5940 = vmatpush.bf16.msra.mxu0 %v5489
    %5941 = vmatpush.bf16.msra.mxu0 %v5488
    %5942 = vmatpush.bf16.msra.mxu0 %v5487
    %5943 = vmatpush.bf16.msra.mxu0 %v5486
    %5944 = vmatpush.bf16.msra.mxu0 %v5485
    %5945 = vmatpush.bf16.msra.mxu0 %v5484
    %5946 = vmatpush.bf16.msra.mxu0 %v5483
    %5947 = vmatpush.bf16.msra.mxu0 %v5482
    %5948 = vmatmul.bf16.gmra.mxu0 %v5894
    %v5949 = vpop.f32.mrf.mxu0
    %v5950 = vadd.f32 %v5937, %v5949
    %v5951 = vpop.f32.mrf.mxu0
    %5952 = vdwg.mxu0
    %5953 = vmatpush.bf16.msra.mxu0 %v5497
    %5954 = vmatpush.bf16.msra.mxu0 %v5496
    %5955 = vmatpush.bf16.msra.mxu0 %v5495
    %5956 = vmatpush.bf16.msra.mxu0 %v5494
    %5957 = vmatpush.bf16.msra.mxu0 %v5493
    %5958 = vmatpush.bf16.msra.mxu0 %v5492
    %5959 = vmatpush.bf16.msra.mxu0 %v5491
    %5960 = vmatpush.bf16.msra.mxu0 %v5490
    %5961 = vmatmul.bf16.gmra.mxu0 %v5895
    %v5962 = vpop.f32.mrf.mxu0
    %v5963 = vadd.f32 %v5950, %v5962
    %v5964 = vpop.f32.mrf.mxu0
    %5965 = vdwg.mxu0
    %5966 = vmatpush.bf16.msra.mxu0 %v5505
    %5967 = vmatpush.bf16.msra.mxu0 %v5504
    %5968 = vmatpush.bf16.msra.mxu0 %v5503
    %5969 = vmatpush.bf16.msra.mxu0 %v5502
    %5970 = vmatpush.bf16.msra.mxu0 %v5501
    %5971 = vmatpush.bf16.msra.mxu0 %v5500
    %5972 = vmatpush.bf16.msra.mxu0 %v5499
    %5973 = vmatpush.bf16.msra.mxu0 %v5498
    %5974 = vmatmul.bf16.gmra.mxu0 %v5896
    %v5975 = vpop.f32.mrf.mxu0
    %v5976 = vadd.f32 %v5963, %v5975
    %v5977 = vpop.f32.mrf.mxu0
    %5978 = vdwg.mxu0
    %5979 = vmatpush.bf16.msra.mxu0 0
    %5980 = vmatpush.bf16.msra.mxu0 0
    %5981 = vmatpush.bf16.msra.mxu0 0
    %5982 = vmatpush.bf16.msra.mxu0 0
    %5983 = vmatpush.bf16.msra.mxu0 0
    %5984 = vmatpush.bf16.msra.mxu0 0
    %5985 = vmatpush.bf16.msra.mxu0 %v5507
    %5986 = vmatpush.bf16.msra.mxu0 %v5506
    %5987 = vmatmul.bf16.gmra.mxu0 %v5899
    %v5988 = vpop.f32.mrf.mxu0
    %v5989 = vadd.f32 %v5976, %v5988
    %v5990 = vpop.f32.mrf.mxu0
    %5991 = vdwg.mxu0
    %v5992 = vmul.f32 %v5989, 0.02
    %v5993 = vpack.c.bf16 %v5992, %v5992
    %v5995 = vsel %vm5558, %v5993, 0
    %5997 = vmatpush.bf16.msra.mxu0 0
    %5998 = vmatpush.bf16.msra.mxu0 0
    %5999 = vmatpush.bf16.msra.mxu0 0
    %6000 = vmatpush.bf16.msra.mxu0 0
    %6001 = vmatpush.bf16.msra.mxu0 0
    %6002 = vmatpush.bf16.msra.mxu0 0
    %6003 = vmatpush.bf16.msra.mxu0 %v5706
    %6004 = vmatpush.bf16.msra.mxu0 %v5699
    %6005 = vmatmul.bf16.gmra.mxu0 %v5995
    %v6006 = vpop.f32.mrf.mxu0
    %v6007 = vadd.f32 1e-05, %v6006
    %v6008 = vpop.f32.mrf.mxu0
    %6009 = vdwg.mxu0
    %6010 = vmatpush.bf16.msra.mxu0 0
    %6011 = vmatpush.bf16.msra.mxu0 0
    %6012 = vmatpush.bf16.msra.mxu0 0
    %6013 = vmatpush.bf16.msra.mxu0 0
    %6014 = vmatpush.bf16.msra.mxu0 0
    %6015 = vmatpush.bf16.msra.mxu0 0
    %6016 = vmatpush.bf16.msra.mxu0 %v5707
    %6017 = vmatpush.bf16.msra.mxu0 %v5700
    %6018 = vmatmul.bf16.gmra.mxu0 %v5995
    %v6019 = vpop.f32.mrf.mxu0
    %v6020 = vadd.f32 1e-05, %v6019
    %v6021 = vpop.f32.mrf.mxu0
    %6022 = vdwg.mxu0
    %6023 = vmatpush.bf16.msra.mxu0 0
    %6024 = vmatpush.bf16.msra.mxu0 0
    %6025 = vmatpush.bf16.msra.mxu0 0
    %6026 = vmatpush.bf16.msra.mxu0 0
    %6027 = vmatpush.bf16.msra.mxu0 0
    %6028 = vmatpush.bf16.msra.mxu0 0
    %6029 = vmatpush.bf16.msra.mxu0 %v5708
    %6030 = vmatpush.bf16.msra.mxu0 %v5701
    %6031 = vmatmul.bf16.gmra.mxu0 %v5995
    %v6032 = vpop.f32.mrf.mxu0
    %v6033 = vadd.f32 1e-05, %v6032
    %v6034 = vpop.f32.mrf.mxu0
    %6035 = vdwg.mxu0
    %6036 = vmatpush.bf16.msra.mxu0 0
    %6037 = vmatpush.bf16.msra.mxu0 0
    %6038 = vmatpush.bf16.msra.mxu0 0
    %6039 = vmatpush.bf16.msra.mxu0 0
    %6040 = vmatpush.bf16.msra.mxu0 0
    %6041 = vmatpush.bf16.msra.mxu0 0
    %6042 = vmatpush.bf16.msra.mxu0 %v5709
    %6043 = vmatpush.bf16.msra.mxu0 %v5702
    %6044 = vmatmul.bf16.gmra.mxu0 %v5995
    %v6045 = vpop.f32.mrf.mxu0
    %v6046 = vadd.f32 1e-05, %v6045
    %v6047 = vpop.f32.mrf.mxu0
    %6048 = vdwg.mxu0
    %6049 = vmatpush.bf16.msra.mxu0 0
    %6050 = vmatpush.bf16.msra.mxu0 0
    %6051 = vmatpush.bf16.msra.mxu0 0
    %6052 = vmatpush.bf16.msra.mxu0 0
    %6053 = vmatpush.bf16.msra.mxu0 0
    %6054 = vmatpush.bf16.msra.mxu0 0
    %6055 = vmatpush.bf16.msra.mxu0 %v5710
    %6056 = vmatpush.bf16.msra.mxu0 %v5703
    %6057 = vmatmul.bf16.gmra.mxu0 %v5995
    %v6058 = vpop.f32.mrf.mxu0
    %v6059 = vadd.f32 1e-05, %v6058
    %v6060 = vpop.f32.mrf.mxu0
    %6061 = vdwg.mxu0
    %6062 = vmatpush.bf16.msra.mxu0 0
    %6063 = vmatpush.bf16.msra.mxu0 0
    %6064 = vmatpush.bf16.msra.mxu0 0
    %6065 = vmatpush.bf16.msra.mxu0 0
    %6066 = vmatpush.bf16.msra.mxu0 0
    %6067 = vmatpush.bf16.msra.mxu0 0
    %6068 = vmatpush.bf16.msra.mxu0 %v5711
    %6069 = vmatpush.bf16.msra.mxu0 %v5704
    %6070 = vmatmul.bf16.gmra.mxu0 %v5995
    %v6071 = vpop.f32.mrf.mxu0
    %v6072 = vadd.f32 1e-05, %v6071
    %v6073 = vpop.f32.mrf.mxu0
    %6074 = vdwg.mxu0
    %6075 = vmatpush.bf16.msra.mxu0 0
    %6076 = vmatpush.bf16.msra.mxu0 0
    %6077 = vmatpush.bf16.msra.mxu0 0
    %6078 = vmatpush.bf16.msra.mxu0 0
    %6079 = vmatpush.bf16.msra.mxu0 0
    %6080 = vmatpush.bf16.msra.mxu0 0
    %6081 = vmatpush.bf16.msra.mxu0 %v5712
    %6082 = vmatpush.bf16.msra.mxu0 %v5705
    %6083 = vmatmul.bf16.gmra.mxu0 %v5995
    %v6084 = vpop.f32.mrf.mxu0
    %v6085 = vadd.f32 1e-05, %v6084
    %v6086 = vpop.f32.mrf.mxu0
    %6087 = vdwg.mxu0
    %v6088 = vrsqrt.pop %v6007
    %v6089 = vmul.f32 %v6088, %v6007
    %v6090 = vmul.f32 %v6089, %v6088
    %v6091 = vmul.f32 0.5, %v6090
    %v6092 = vsub.f32 1.5, %v6091
    %v6093 = vmul.f32 %v6088, %v6092
    %vm6094 = vweird.f32 %v6007
    %vm6095 = vweird.f32 %v6088
    %vm6096 = vmor %vm6094, %vm6095
    %v6097 = vsel %vm6096, %v6088, %v6093
    %v6098 = vrsqrt.pop %v6020
    %v6099 = vmul.f32 %v6098, %v6020
    %v6100 = vmul.f32 %v6099, %v6098
    %v6101 = vmul.f32 0.5, %v6100
    %v6102 = vsub.f32 1.5, %v6101
    %v6103 = vmul.f32 %v6098, %v6102
    %vm6104 = vweird.f32 %v6020
    %vm6105 = vweird.f32 %v6098
    %vm6106 = vmor %vm6104, %vm6105
    %v6107 = vsel %vm6106, %v6098, %v6103
    %v6108 = vrsqrt.pop %v6033
    %v6109 = vmul.f32 %v6108, %v6033
    %v6110 = vmul.f32 %v6109, %v6108
    %v6111 = vmul.f32 0.5, %v6110
    %v6112 = vsub.f32 1.5, %v6111
    %v6113 = vmul.f32 %v6108, %v6112
    %vm6114 = vweird.f32 %v6033
    %vm6115 = vweird.f32 %v6108
    %vm6116 = vmor %vm6114, %vm6115
    %v6117 = vsel %vm6116, %v6108, %v6113
    %v6118 = vrsqrt.pop %v6046
    %v6119 = vmul.f32 %v6118, %v6046
    %v6120 = vmul.f32 %v6119, %v6118
    %v6121 = vmul.f32 0.5, %v6120
    %v6122 = vsub.f32 1.5, %v6121
    %v6123 = vmul.f32 %v6118, %v6122
    %vm6124 = vweird.f32 %v6046
    %vm6125 = vweird.f32 %v6118
    %vm6126 = vmor %vm6124, %vm6125
    %v6127 = vsel %vm6126, %v6118, %v6123
    %v6128 = vrsqrt.pop %v6059
    %v6129 = vmul.f32 %v6128, %v6059
    %v6130 = vmul.f32 %v6129, %v6128
    %v6131 = vmul.f32 0.5, %v6130
    %v6132 = vsub.f32 1.5, %v6131
    %v6133 = vmul.f32 %v6128, %v6132
    %vm6134 = vweird.f32 %v6059
    %vm6135 = vweird.f32 %v6128
    %vm6136 = vmor %vm6134, %vm6135
    %v6137 = vsel %vm6136, %v6128, %v6133
    %v6138 = vrsqrt.pop %v6072
    %v6139 = vmul.f32 %v6138, %v6072
    %v6140 = vmul.f32 %v6139, %v6138
    %v6141 = vmul.f32 0.5, %v6140
    %v6142 = vsub.f32 1.5, %v6141
    %v6143 = vmul.f32 %v6138, %v6142
    %vm6144 = vweird.f32 %v6072
    %vm6145 = vweird.f32 %v6138
    %vm6146 = vmor %vm6144, %vm6145
    %v6147 = vsel %vm6146, %v6138, %v6143
    %v6148 = vrsqrt.pop %v6085
    %v6149 = vmul.f32 %v6148, %v6085
    %v6150 = vmul.f32 %v6149, %v6148
    %v6151 = vmul.f32 0.5, %v6150
    %v6152 = vsub.f32 1.5, %v6151
    %v6153 = vmul.f32 %v6148, %v6152
    %vm6154 = vweird.f32 %v6085
    %vm6155 = vweird.f32 %v6148
    %vm6156 = vmor %vm6154, %vm6155
    %v6157 = vsel %vm6156, %v6148, %v6153
    %v6165 = vrot.slane %v6107, 7
    %v6166 = vrot.slane %v6117, 6
    %v6167 = vrot.slane %v6127, 5
    %v6168 = vrot.slane %v6137, 4
    %v6169 = vrot.slane %v6147, 3
    %v6170 = vrot.slane %v6157, 2
    %v6171 = vsel %vm965, %v6097, %v6165
    %v6172 = vsel %vm2209, %v6166, %v6167
    %v6173 = vsel %vm966, %v6171, %v6172
    %v6174 = vsel %vm2212, %v6168, %v6169
    %v6175 = vsel %vm2214, %v6174, %v6170
    %v6176 = vsel %vm2216, %v6173, %v6175
    %v6178 = vmul.f32 %v5083, %v6176
    %v6180 = vperm.slane %v6178, 0
    %v6181 = vperm.slane %v6178, 1
    %v6182 = vperm.slane %v6178, 2
    %v6183 = vperm.slane %v6178, 3
    %v6184 = vperm.slane %v6178, 4
    %v6185 = vperm.slane %v6178, 5
    %v6186 = vperm.slane %v6178, 6
    %v6194 = vmul.f32 %v5828, %v6180
    %v6195 = vmul.f32 %v5829, %v6181
    %v6196 = vmul.f32 %v5830, %v6182
    %v6197 = vmul.f32 %v5831, %v6183
    %v6198 = vmul.f32 %v5832, %v6184
    %v6199 = vmul.f32 %v5833, %v6185
    %v6200 = vmul.f32 %v5834, %v6186
    %v6202 = vperm.slane %v5084, 0
    %v6203 = vperm.slane %v5084, 1
    %v6204 = vperm.slane %v5084, 2
    %v6205 = vperm.slane %v5084, 3
    %v6206 = vperm.slane %v5084, 4
    %v6207 = vperm.slane %v5084, 5
    %v6208 = vperm.slane %v5084, 6
    %v6216 = vadd.f32 %v6194, %v6202
    %v6217 = vadd.f32 %v6195, %v6203
    %v6218 = vadd.f32 %v6196, %v6204
    %v6219 = vadd.f32 %v6197, %v6205
    %v6220 = vadd.f32 %v6198, %v6206
    %v6221 = vadd.f32 %v6199, %v6207
    %v6222 = vadd.f32 %v6200, %v6208
    %v6223 = vpack.c.bf16 %v6216, %v6216
    %v6224 = vpack.c.bf16 %v6217, %v6217
    %v6225 = vpack.c.bf16 %v6218, %v6218
    %v6226 = vpack.c.bf16 %v6219, %v6219
    %v6227 = vpack.c.bf16 %v6220, %v6220
    %v6228 = vpack.c.bf16 %v6221, %v6221
    %v6229 = vpack.c.bf16 %v6222, %v6222
    %v6230 = vld [vmem:[#allocation19] sm:$0xf]
    %v6231 = vld [vmem:[#allocation19 + $0x4] sm:$0xf]
    %v6232 = vld [vmem:[#allocation19 + $0x8] sm:$0xf]
    %v6233 = vld [vmem:[#allocation19 + $0xc] sm:$0xf]
    %v6234 = vld [vmem:[#allocation19 + $0x10] sm:$0xf]
    %v6235 = vld [vmem:[#allocation19 + $0x14] sm:$0xf]
    %v6236 = vld [vmem:[#allocation19 + $0x18] sm:$0xf]
    %v6237 = vld [vmem:[#allocation19 + $0x1c] sm:$0xf]
    %v6238 = vld [vmem:[#allocation19 + $0x20] sm:$0xf]
    %v6239 = vld [vmem:[#allocation19 + $0x24] sm:$0xf]
    %v6240 = vld [vmem:[#allocation19 + $0x28] sm:$0xf]
    %v6241 = vld [vmem:[#allocation19 + $0x2c] sm:$0xf]
    %v6242 = vld [vmem:[#allocation19 + $0x30] sm:$0xf]
    %v6243 = vld [vmem:[#allocation19 + $0x34] sm:$0xf]
    %v6244 = vld [vmem:[#allocation19 + $0x38] sm:$0xf]
    %v6245 = vld [vmem:[#allocation19 + $0x3c] sm:$0xf]
    %v6246 = vld [vmem:[#allocation19 + $0x40] sm:$0xf]
    %v6247 = vld [vmem:[#allocation19 + $0x44] sm:$0xf]
    %v6248 = vld [vmem:[#allocation19 + $0x48] sm:$0xf]
    %v6249 = vld [vmem:[#allocation19 + $0x4c] sm:$0xf]
    %v6250 = vld [vmem:[#allocation19 + $0x50] sm:$0xf]
    %v6251 = vld [vmem:[#allocation19 + $0x54] sm:$0xf]
    %v6252 = vld [vmem:[#allocation19 + $0x58] sm:$0xf]
    %v6253 = vld [vmem:[#allocation19 + $0x5c] sm:$0xf]
    %v6254 = vld [vmem:[#allocation19 + $0x60] sm:$0xf]
    %v6255 = vld [vmem:[#allocation19 + $0x64] sm:$0xf]
    %v6256 = vld [vmem:[#allocation19 + $0x68] sm:$0xf]
    %v6257 = vld [vmem:[#allocation19 + $0x6c] sm:$0xf]
    %v6258 = vld [vmem:[#allocation19 + $0x70] sm:$0xf]
    %v6259 = vld [vmem:[#allocation19 + $0x74] sm:$0xf]
    %v6260 = vld [vmem:[#allocation19 + $0x78] sm:$0xf]
    %v6261 = vld [vmem:[#allocation19 + $0x7c] sm:$0xf]
    %v6262 = vld [vmem:[#allocation19 + $0x80] sm:$0xf]
    %v6263 = vld [vmem:[#allocation19 + $0x84] sm:$0xf]
    %v6264 = vld [vmem:[#allocation19 + $0x88] sm:$0xf]
    %v6265 = vld [vmem:[#allocation19 + $0x8c] sm:$0xf]
    %v6266 = vld [vmem:[#allocation19 + $0x90] sm:$0xf]
    %v6267 = vld [vmem:[#allocation19 + $0x94] sm:$0xf]
    %v6268 = vld [vmem:[#allocation19 + $0x98] sm:$0xf]
    %v6269 = vld [vmem:[#allocation19 + $0x9c] sm:$0xf]
    %v6270 = vld [vmem:[#allocation19 + $0xa0] sm:$0xf]
    %v6271 = vld [vmem:[#allocation19 + $0xa4] sm:$0xf]
    %v6272 = vld [vmem:[#allocation19 + $0xa8] sm:$0xf]
    %v6273 = vld [vmem:[#allocation19 + $0xac] sm:$0xf]
    %v6274 = vld [vmem:[#allocation19 + $0xb0] sm:$0xf]
    %v6275 = vld [vmem:[#allocation19 + $0xb4] sm:$0xf]
    %v6276 = vld [vmem:[#allocation19 + $0xb8] sm:$0xf]
    %v6277 = vld [vmem:[#allocation19 + $0xbc] sm:$0xf]
    %v6278 = vld [vmem:[#allocation19 + $0xc0] sm:$0xf]
    %v6279 = vld [vmem:[#allocation19 + $0xc4] sm:$0xf]
    %v6280 = vld [vmem:[#allocation19 + $0xc8] sm:$0xf]
    %v6281 = vld [vmem:[#allocation19 + $0xcc] sm:$0xf]
    %v6282 = vld [vmem:[#allocation19 + $0xd0] sm:$0xf]
    %v6283 = vld [vmem:[#allocation19 + $0xd4] sm:$0xf]
    %v6284 = vld [vmem:[#allocation19 + $0xd8] sm:$0xf]
    %v6285 = vld [vmem:[#allocation19 + $0xdc] sm:$0xf]
    %v6286 = vld [vmem:[#allocation19 + $0xe0] sm:$0xf]
    %v6287 = vld [vmem:[#allocation19 + $0xe4] sm:$0xf]
    %v6288 = vld [vmem:[#allocation19 + $0xe8] sm:$0xf]
    %v6289 = vld [vmem:[#allocation19 + $0xec] sm:$0xf]
    %v6290 = vld [vmem:[#allocation19 + $0xf0] sm:$0xf]
    %v6291 = vld [vmem:[#allocation19 + $0xf4] sm:$0xf]
    %v6292 = vld [vmem:[#allocation19 + $0xf8] sm:$0xf]
    %v6293 = vld [vmem:[#allocation19 + $0xfc] sm:$0xf]
    %v6294 = vld [vmem:[#allocation19 + $0x100] sm:$0xf]
    %v6295 = vld [vmem:[#allocation19 + $0x104] sm:$0xf]
    %v6296 = vld [vmem:[#allocation19 + $0x108] sm:$0xf]
    %v6297 = vld [vmem:[#allocation19 + $0x10c] sm:$0xf]
    %v6298 = vld [vmem:[#allocation19 + $0x110] sm:$0xf]
    %v6299 = vld [vmem:[#allocation19 + $0x114] sm:$0xf]
    %v6300 = vld [vmem:[#allocation19 + $0x118] sm:$0xf]
    %v6301 = vld [vmem:[#allocation19 + $0x11c] sm:$0xf]
    %v6302 = vld [vmem:[#allocation19 + $0x120] sm:$0xf]
    %v6303 = vld [vmem:[#allocation19 + $0x124] sm:$0xf]
    %v6304 = vld [vmem:[#allocation19 + $0x128] sm:$0xf]
    %v6305 = vld [vmem:[#allocation19 + $0x12c] sm:$0xf]
    %v6306 = vld [vmem:[#allocation19 + $0x130] sm:$0xf]
    %v6307 = vld [vmem:[#allocation19 + $0x134] sm:$0xf]
    %v6308 = vld [vmem:[#allocation19 + $0x138] sm:$0xf]
    %v6309 = vld [vmem:[#allocation19 + $0x13c] sm:$0xf]
    %v6310 = vld [vmem:[#allocation19 + $0x140] sm:$0xf]
    %v6311 = vld [vmem:[#allocation19 + $0x144] sm:$0xf]
    %v6312 = vld [vmem:[#allocation19 + $0x148] sm:$0xf]
    %v6313 = vld [vmem:[#allocation19 + $0x14c] sm:$0xf]
    %v6314 = vld [vmem:[#allocation19 + $0x150] sm:$0xf]
    %v6315 = vld [vmem:[#allocation19 + $0x154] sm:$0xf]
    %v6316 = vld [vmem:[#allocation19 + $0x158] sm:$0xf]
    %v6317 = vld [vmem:[#allocation19 + $0x15c] sm:$0xf]
    %v6318 = vld [vmem:[#allocation19 + $0x160] sm:$0xf]
    %v6319 = vld [vmem:[#allocation19 + $0x164] sm:$0xf]
    %v6320 = vld [vmem:[#allocation19 + $0x168] sm:$0xf]
    %v6321 = vld [vmem:[#allocation19 + $0x16c] sm:$0xf]
    %v6322 = vld [vmem:[#allocation19 + $0x170] sm:$0xf]
    %v6323 = vld [vmem:[#allocation19 + $0x174] sm:$0xf]
    %v6324 = vld [vmem:[#allocation19 + $0x178] sm:$0xf]
    %v6325 = vld [vmem:[#allocation19 + $0x17c] sm:$0xf]
    %v6326 = vld [vmem:[#allocation19 + $0x180] sm:$0xf]
    %v6327 = vld [vmem:[#allocation19 + $0x184] sm:$0xf]
    %v6328 = vld [vmem:[#allocation19 + $0x188] sm:$0xf]
    %v6329 = vld [vmem:[#allocation19 + $0x18c] sm:$0xf]
    %v6330 = vld [vmem:[#allocation20] sm:$0x1]
    %v6332 = vperm.slane %v6330, 0
    %v6434 = vunpack.c.l.b16 %v6230
    %v6435 = vunpack.c.l.b16 %v6231
    %v6436 = vunpack.c.l.b16 %v6232
    %v6437 = vunpack.c.l.b16 %v6233
    %v6438 = vunpack.c.l.b16 %v6234
    %v6439 = vunpack.c.l.b16 %v6235
    %v6440 = vunpack.c.l.b16 %v6236
    %v6441 = vunpack.c.l.b16 %v6237
    %v6442 = vunpack.c.l.b16 %v6238
    %v6443 = vunpack.c.l.b16 %v6239
    %v6444 = vunpack.c.l.b16 %v6240
    %v6445 = vunpack.c.l.b16 %v6241
    %v6446 = vunpack.c.l.b16 %v6242
    %v6447 = vunpack.c.l.b16 %v6243
    %v6448 = vunpack.c.l.b16 %v6244
    %v6449 = vunpack.c.l.b16 %v6245
    %v6450 = vunpack.c.l.b16 %v6246
    %v6451 = vunpack.c.l.b16 %v6247
    %v6452 = vunpack.c.l.b16 %v6248
    %v6453 = vunpack.c.l.b16 %v6249
    %v6454 = vunpack.c.l.b16 %v6250
    %v6455 = vunpack.c.l.b16 %v6251
    %v6456 = vunpack.c.l.b16 %v6252
    %v6457 = vunpack.c.l.b16 %v6253
    %v6458 = vunpack.c.l.b16 %v6254
    %v6459 = vunpack.c.l.b16 %v6255
    %v6460 = vunpack.c.l.b16 %v6256
    %v6461 = vunpack.c.l.b16 %v6257
    %v6462 = vunpack.c.l.b16 %v6258
    %v6463 = vunpack.c.l.b16 %v6259
    %v6464 = vunpack.c.l.b16 %v6260
    %v6465 = vunpack.c.l.b16 %v6261
    %v6466 = vunpack.c.l.b16 %v6262
    %v6467 = vunpack.c.l.b16 %v6263
    %v6468 = vunpack.c.l.b16 %v6264
    %v6469 = vunpack.c.l.b16 %v6265
    %v6470 = vunpack.c.l.b16 %v6266
    %v6471 = vunpack.c.l.b16 %v6267
    %v6472 = vunpack.c.l.b16 %v6268
    %v6473 = vunpack.c.l.b16 %v6269
    %v6474 = vunpack.c.l.b16 %v6270
    %v6475 = vunpack.c.l.b16 %v6271
    %v6476 = vunpack.c.l.b16 %v6272
    %v6477 = vunpack.c.l.b16 %v6273
    %v6478 = vunpack.c.l.b16 %v6274
    %v6479 = vunpack.c.l.b16 %v6275
    %v6480 = vunpack.c.l.b16 %v6276
    %v6481 = vunpack.c.l.b16 %v6277
    %v6482 = vunpack.c.l.b16 %v6278
    %v6483 = vunpack.c.l.b16 %v6279
    %v6484 = vunpack.c.l.b16 %v6280
    %v6485 = vunpack.c.l.b16 %v6281
    %v6486 = vunpack.c.l.b16 %v6282
    %v6487 = vunpack.c.l.b16 %v6283
    %v6488 = vunpack.c.l.b16 %v6284
    %v6489 = vunpack.c.l.b16 %v6285
    %v6490 = vunpack.c.l.b16 %v6286
    %v6491 = vunpack.c.l.b16 %v6287
    %v6492 = vunpack.c.l.b16 %v6288
    %v6493 = vunpack.c.l.b16 %v6289
    %v6494 = vunpack.c.l.b16 %v6290
    %v6495 = vunpack.c.l.b16 %v6291
    %v6496 = vunpack.c.l.b16 %v6292
    %v6497 = vunpack.c.l.b16 %v6293
    %v6498 = vunpack.c.l.b16 %v6294
    %v6499 = vunpack.c.l.b16 %v6295
    %v6500 = vunpack.c.l.b16 %v6296
    %v6501 = vunpack.c.l.b16 %v6297
    %v6502 = vunpack.c.l.b16 %v6298
    %v6503 = vunpack.c.l.b16 %v6299
    %v6504 = vunpack.c.l.b16 %v6300
    %v6505 = vunpack.c.l.b16 %v6301
    %v6506 = vunpack.c.l.b16 %v6302
    %v6507 = vunpack.c.l.b16 %v6303
    %v6508 = vunpack.c.l.b16 %v6304
    %v6509 = vunpack.c.l.b16 %v6305
    %v6510 = vunpack.c.l.b16 %v6306
    %v6511 = vunpack.c.l.b16 %v6307
    %v6512 = vunpack.c.l.b16 %v6308
    %v6513 = vunpack.c.l.b16 %v6309
    %v6514 = vunpack.c.l.b16 %v6310
    %v6515 = vunpack.c.l.b16 %v6311
    %v6516 = vunpack.c.l.b16 %v6312
    %v6517 = vunpack.c.l.b16 %v6313
    %v6518 = vunpack.c.l.b16 %v6314
    %v6519 = vunpack.c.l.b16 %v6315
    %v6520 = vunpack.c.l.b16 %v6316
    %v6521 = vunpack.c.l.b16 %v6317
    %v6522 = vunpack.c.l.b16 %v6318
    %v6523 = vunpack.c.l.b16 %v6319
    %v6524 = vunpack.c.l.b16 %v6320
    %v6525 = vunpack.c.l.b16 %v6321
    %v6526 = vunpack.c.l.b16 %v6322
    %v6527 = vunpack.c.l.b16 %v6323
    %v6528 = vunpack.c.l.b16 %v6324
    %v6529 = vunpack.c.l.b16 %v6325
    %v6530 = vunpack.c.l.b16 %v6326
    %v6531 = vunpack.c.l.b16 %v6327
    %v6532 = vunpack.c.l.b16 %v6328
    %v6533 = vunpack.c.l.b16 %v6329
    %v6534 = vpack.c.b16 %v6435, %v6434
    %v6535 = vpack.c.b16 %v6437, %v6436
    %v6536 = vpack.c.b16 %v6439, %v6438
    %v6537 = vpack.c.b16 %v6441, %v6440
    %v6538 = vpack.c.b16 %v6443, %v6442
    %v6539 = vpack.c.b16 %v6445, %v6444
    %v6540 = vpack.c.b16 %v6447, %v6446
    %v6541 = vpack.c.b16 %v6449, %v6448
    %v6542 = vpack.c.b16 %v6451, %v6450
    %v6543 = vpack.c.b16 %v6453, %v6452
    %v6544 = vpack.c.b16 %v6455, %v6454
    %v6545 = vpack.c.b16 %v6457, %v6456
    %v6546 = vpack.c.b16 %v6459, %v6458
    %v6547 = vpack.c.b16 %v6461, %v6460
    %v6548 = vpack.c.b16 %v6463, %v6462
    %v6549 = vpack.c.b16 %v6465, %v6464
    %v6550 = vpack.c.b16 %v6467, %v6466
    %v6551 = vpack.c.b16 %v6469, %v6468
    %v6552 = vpack.c.b16 %v6471, %v6470
    %v6553 = vpack.c.b16 %v6473, %v6472
    %v6554 = vpack.c.b16 %v6475, %v6474
    %v6555 = vpack.c.b16 %v6477, %v6476
    %v6556 = vpack.c.b16 %v6479, %v6478
    %v6557 = vpack.c.b16 %v6481, %v6480
    %v6558 = vpack.c.b16 %v6483, %v6482
    %v6559 = vpack.c.b16 %v6485, %v6484
    %v6560 = vpack.c.b16 %v6487, %v6486
    %v6561 = vpack.c.b16 %v6489, %v6488
    %v6562 = vpack.c.b16 %v6491, %v6490
    %v6563 = vpack.c.b16 %v6493, %v6492
    %v6564 = vpack.c.b16 %v6495, %v6494
    %v6565 = vpack.c.b16 %v6497, %v6496
    %v6566 = vpack.c.b16 %v6499, %v6498
    %v6567 = vpack.c.b16 %v6501, %v6500
    %v6568 = vpack.c.b16 %v6503, %v6502
    %v6569 = vpack.c.b16 %v6505, %v6504
    %v6570 = vpack.c.b16 %v6507, %v6506
    %v6571 = vpack.c.b16 %v6509, %v6508
    %v6572 = vpack.c.b16 %v6511, %v6510
    %v6573 = vpack.c.b16 %v6513, %v6512
    %v6574 = vpack.c.b16 %v6515, %v6514
    %v6575 = vpack.c.b16 %v6517, %v6516
    %v6576 = vpack.c.b16 %v6519, %v6518
    %v6577 = vpack.c.b16 %v6521, %v6520
    %v6578 = vpack.c.b16 %v6523, %v6522
    %v6579 = vpack.c.b16 %v6525, %v6524
    %v6580 = vpack.c.b16 %v6527, %v6526
    %v6581 = vpack.c.b16 %v6529, %v6528
    %v6582 = vpack.c.b16 %v6531, %v6530
    %v6583 = vpack.c.b16 %v6533, %v6532
    %v6635 = vsel %vm5558, %v6229, 0
    %6637 = vmatpush.bf16.msra.mxu0 %v6541
    %6638 = vmatpush.bf16.msra.mxu0 %v6540
    %6639 = vmatpush.bf16.msra.mxu0 %v6539
    %6640 = vmatpush.bf16.msra.mxu0 %v6538
    %6641 = vmatpush.bf16.msra.mxu0 %v6537
    %6642 = vmatpush.bf16.msra.mxu0 %v6536
    %6643 = vmatpush.bf16.msra.mxu0 %v6535
    %6644 = vmatpush.bf16.msra.mxu0 %v6534
    %6645 = vmatmul.bf16.gmra.mxu0 %v6223
    %v6646 = vpop.f32.mrf.mxu0
    %v6647 = vadd.f32 %v6332, %v6646
    %v6648 = vpop.f32.mrf.mxu0
    %6649 = vdwg.mxu0
    %6650 = vmatpush.bf16.msra.mxu0 %v6549
    %6651 = vmatpush.bf16.msra.mxu0 %v6548
    %6652 = vmatpush.bf16.msra.mxu0 %v6547
    %6653 = vmatpush.bf16.msra.mxu0 %v6546
    %6654 = vmatpush.bf16.msra.mxu0 %v6545
    %6655 = vmatpush.bf16.msra.mxu0 %v6544
    %6656 = vmatpush.bf16.msra.mxu0 %v6543
    %6657 = vmatpush.bf16.msra.mxu0 %v6542
    %6658 = vmatmul.bf16.gmra.mxu0 %v6224
    %v6659 = vpop.f32.mrf.mxu0
    %v6660 = vadd.f32 %v6647, %v6659
    %v6661 = vpop.f32.mrf.mxu0
    %6662 = vdwg.mxu0
    %6663 = vmatpush.bf16.msra.mxu0 %v6557
    %6664 = vmatpush.bf16.msra.mxu0 %v6556
    %6665 = vmatpush.bf16.msra.mxu0 %v6555
    %6666 = vmatpush.bf16.msra.mxu0 %v6554
    %6667 = vmatpush.bf16.msra.mxu0 %v6553
    %6668 = vmatpush.bf16.msra.mxu0 %v6552
    %6669 = vmatpush.bf16.msra.mxu0 %v6551
    %6670 = vmatpush.bf16.msra.mxu0 %v6550
    %6671 = vmatmul.bf16.gmra.mxu0 %v6225
    %v6672 = vpop.f32.mrf.mxu0
    %v6673 = vadd.f32 %v6660, %v6672
    %v6674 = vpop.f32.mrf.mxu0
    %6675 = vdwg.mxu0
    %6676 = vmatpush.bf16.msra.mxu0 %v6565
    %6677 = vmatpush.bf16.msra.mxu0 %v6564
    %6678 = vmatpush.bf16.msra.mxu0 %v6563
    %6679 = vmatpush.bf16.msra.mxu0 %v6562
    %6680 = vmatpush.bf16.msra.mxu0 %v6561
    %6681 = vmatpush.bf16.msra.mxu0 %v6560
    %6682 = vmatpush.bf16.msra.mxu0 %v6559
    %6683 = vmatpush.bf16.msra.mxu0 %v6558
    %6684 = vmatmul.bf16.gmra.mxu0 %v6226
    %v6685 = vpop.f32.mrf.mxu0
    %v6686 = vadd.f32 %v6673, %v6685
    %v6687 = vpop.f32.mrf.mxu0
    %6688 = vdwg.mxu0
    %6689 = vmatpush.bf16.msra.mxu0 %v6573
    %6690 = vmatpush.bf16.msra.mxu0 %v6572
    %6691 = vmatpush.bf16.msra.mxu0 %v6571
    %6692 = vmatpush.bf16.msra.mxu0 %v6570
    %6693 = vmatpush.bf16.msra.mxu0 %v6569
    %6694 = vmatpush.bf16.msra.mxu0 %v6568
    %6695 = vmatpush.bf16.msra.mxu0 %v6567
    %6696 = vmatpush.bf16.msra.mxu0 %v6566
    %6697 = vmatmul.bf16.gmra.mxu0 %v6227
    %v6698 = vpop.f32.mrf.mxu0
    %v6699 = vadd.f32 %v6686, %v6698
    %v6700 = vpop.f32.mrf.mxu0
    %6701 = vdwg.mxu0
    %6702 = vmatpush.bf16.msra.mxu0 %v6581
    %6703 = vmatpush.bf16.msra.mxu0 %v6580
    %6704 = vmatpush.bf16.msra.mxu0 %v6579
    %6705 = vmatpush.bf16.msra.mxu0 %v6578
    %6706 = vmatpush.bf16.msra.mxu0 %v6577
    %6707 = vmatpush.bf16.msra.mxu0 %v6576
    %6708 = vmatpush.bf16.msra.mxu0 %v6575
    %6709 = vmatpush.bf16.msra.mxu0 %v6574
    %6710 = vmatmul.bf16.gmra.mxu0 %v6228
    %v6711 = vpop.f32.mrf.mxu0
    %v6712 = vadd.f32 %v6699, %v6711
    %v6713 = vpop.f32.mrf.mxu0
    %6714 = vdwg.mxu0
    %6715 = vmatpush.bf16.msra.mxu0 0
    %6716 = vmatpush.bf16.msra.mxu0 0
    %6717 = vmatpush.bf16.msra.mxu0 0
    %6718 = vmatpush.bf16.msra.mxu0 0
    %6719 = vmatpush.bf16.msra.mxu0 0
    %6720 = vmatpush.bf16.msra.mxu0 0
    %6721 = vmatpush.bf16.msra.mxu0 %v6583
    %6722 = vmatpush.bf16.msra.mxu0 %v6582
    %6723 = vmatmul.bf16.gmra.mxu0 %v6635
    %v6724 = vpop.f32.mrf.mxu0
    %v6725 = vadd.f32 %v6712, %v6724
    %v6726 = vpop.f32.mrf.mxu0
    %6727 = vdwg.mxu0
    %v6728 = vmul.f32 %v6725, 0.01
    %v6729 = vmax.f32 %v6725, %v6728
    %v6730 = vpack.c.bf16 %v6729, %v6729
    %v6731 = vld [vmem:[#allocation22] sm:$0xf]
    %v6732 = vld [vmem:[#allocation22 + $0x4] sm:$0xf]
    %v6733 = vld [vmem:[#allocation22 + $0x8] sm:$0xf]
    %v6734 = vld [vmem:[#allocation22 + $0xc] sm:$0xf]
    %v6735 = vld [vmem:[#allocation22 + $0x10] sm:$0xf]
    %v6736 = vld [vmem:[#allocation22 + $0x14] sm:$0xf]
    %v6737 = vld [vmem:[#allocation22 + $0x18] sm:$0xf]
    %v6738 = vld [vmem:[#allocation22 + $0x1c] sm:$0xf]
    %v6739 = vld [vmem:[#allocation22 + $0x20] sm:$0xf]
    %v6740 = vld [vmem:[#allocation22 + $0x24] sm:$0xf]
    %v6741 = vld [vmem:[#allocation22 + $0x28] sm:$0xf]
    %v6742 = vld [vmem:[#allocation22 + $0x2c] sm:$0xf]
    %v6743 = vld [vmem:[#allocation22 + $0x30] sm:$0xf]
    %v6744 = vld [vmem:[#allocation22 + $0x34] sm:$0xf]
    %v6745 = vld [vmem:[#allocation22 + $0x38] sm:$0xf]
    %v6746 = vld [vmem:[#allocation22 + $0x3c] sm:$0xf]
    %v6747 = vld [vmem:[#allocation23] sm:$0x1]
    %v6749 = vperm.slane %v6747, 0
    %v6767 = vunpack.c.l.b16 %v6731
    %v6768 = vunpack.c.l.b16 %v6732
    %v6769 = vunpack.c.l.b16 %v6733
    %v6770 = vunpack.c.l.b16 %v6734
    %v6771 = vunpack.c.l.b16 %v6735
    %v6772 = vunpack.c.l.b16 %v6736
    %v6773 = vunpack.c.l.b16 %v6737
    %v6774 = vunpack.c.l.b16 %v6738
    %v6775 = vunpack.c.l.b16 %v6739
    %v6776 = vunpack.c.l.b16 %v6740
    %v6777 = vunpack.c.l.b16 %v6741
    %v6778 = vunpack.c.l.b16 %v6742
    %v6779 = vunpack.c.l.b16 %v6743
    %v6780 = vunpack.c.l.b16 %v6744
    %v6781 = vunpack.c.l.b16 %v6745
    %v6782 = vunpack.c.l.b16 %v6746
    %v6783 = vpack.c.b16 %v6768, %v6767
    %v6784 = vpack.c.b16 %v6770, %v6769
    %v6785 = vpack.c.b16 %v6772, %v6771
    %v6786 = vpack.c.b16 %v6774, %v6773
    %v6787 = vpack.c.b16 %v6776, %v6775
    %v6788 = vpack.c.b16 %v6778, %v6777
    %v6789 = vpack.c.b16 %v6780, %v6779
    %v6790 = vpack.c.b16 %v6782, %v6781
    %6799 = vmatpush.bf16.msra.mxu0 %v6790
    %6800 = vmatpush.bf16.msra.mxu0 %v6789
    %6801 = vmatpush.bf16.msra.mxu0 %v6788
    %6802 = vmatpush.bf16.msra.mxu0 %v6787
    %6803 = vmatpush.bf16.msra.mxu0 %v6786
    %6804 = vmatpush.bf16.msra.mxu0 %v6785
    %6805 = vmatpush.bf16.msra.mxu0 %v6784
    %6806 = vmatpush.bf16.msra.mxu0 %v6783
    %6807 = vmatmul.bf16.gmra.mxu0 %v6730
    %v6808 = vpop.f32.mrf.mxu0
    %v6809 = vadd.f32 %v6749, %v6808
    %v6810 = vpop.f32.mrf.mxu0
    %6811 = vdwg.mxu0
    %v6812 = vsub.f32 0.0, %v6809
    %v6813 = vmul.f32 %v6812, 1.442695
    %v6814 = vpow.pop %v6813
    %v6815 = vadd.f32 %v6814, 1.0
    %v6816 = vrcp.pop %v6815
    %6817 = vst [vmem:[#allocation25] sm:$0x3] %v6816
    // Predicated region
    $region126: #{tpu_custom_call.1} parent=1 // pred_check
      _
    $region127: #{tpu_custom_call.1} parent=1 // pred_check_branch
      %6819 = sbr.rel (0) target = $region129
    $region128: #{tpu_custom_call.1} parent=1 // pred_region
      %6821 = vsyncadd [#allocation4], 0
      %s6823 = sshll.u32 [#allocation25], 4
      %s6824 = int_to_ptr.vmem [resolvable:$true] %s6823
      %s6825 = sshll.u32 %s17, 4
      %s6826 = int_to_ptr.hbm [resolvable:$true] %s6825
      %6828 = dma.vmem_to_hbm [thread:$0]  %s6824, 32, %s6826, [#allocation4]
    $region129: #{tpu_custom_call.1} parent=1 // pred_fallthru
      _
    // Predicated region
    $region130: #{tpu_custom_call.1} parent=1 // pred_check
      _
    $region131: #{tpu_custom_call.1} parent=1 // pred_check_branch
      %6830 = sbr.rel (0) target = $region133
    $region132: #{tpu_custom_call.1} parent=1 // pred_region
      %6832 = dma.done [#allocation4], 32
    $region133: #{tpu_custom_call.1} parent=1 // pred_fallthru
      _
    %6833 = vsyncpa [#allocation3], 1
    %6834 = vsyncpa [#allocation6], 1
    %6835 = vsyncpa [#allocation9], 1
    %6836 = vsyncpa [#allocation12], 1
    %6837 = vsyncpa [#allocation15], 1
    %6838 = vsyncpa [#allocation18], 1
    %6839 = vsyncpa [#allocation21], 1
    %6840 = vsyncpa [#allocation24], 1
    %6841 = vsyncpa [#allocation4], 1

</llo_original>
